<compile_context>
chip_gen: v6e
topology: v6e:2x2x1
jax: 0.10.0
libtpu: 0.0.40
codegen_flags: <defaults>
</compile_context>

<pallas_src>
import functools
import math

import jax
import jax.numpy as jnp
from jax import lax
from jax.experimental import pallas as pl
from jax.experimental.pallas import tpu as pltpu


# ---------------------------------------------------------------------------
# Fused whole-forward kernel (Bb batch elements per grid program)
# ---------------------------------------------------------------------------

def _trans_forward_kernel(
    cols_ref,            # (Bb*S, K*Cin)   bf16  im2col slab, Bb batch elems stacked
    cw_ref,              # (K*Cin, D)      bf16  conv weight
    pe_ref,              # (Bb*S, D)       f32   positional encoding + conv bias
    wqkv_ref,            # (L, D, 3*D)     bf16  fused Q|K|V (1/sqrt(Dh) folded into Q)
    bqkv_ref,            # (L, 1, 3*D)     f32   fused QKV bias (scale folded into Q)
    wo_ref,              # (L, D, D)       bf16  attention out-projection
    w1_ref,              # (L, D, FF)      bf16
    b1_ref,              # (L, 1, FF)      f32
    w2_ref,              # (L, FF, D)      bf16
    vec_ref,             # (L, 6, D)       f32   rows: [ob, g1, be1, b2, g2, be2]
    fcw_ref,             # (D, n_series)   bf16
    fcb_ref,             # (1, n_series)   f32
    o_ref,               # (1, Bb, n_series)
    *, S, Bb, nhead, n_layers, eps):

    D = wo_ref.shape[-1]
    Dh = D // nhead
    cdt = jnp.bfloat16
    trans_b = (((1,), (1,)), ((), ()))          # q @ k^T without an explicit transpose

    # ---- causal Conv1d (im2col -> one matmul) + (PE + conv bias) ------------
    h = jnp.dot(cols_ref[...], cw_ref[...],
                preferred_element_type=jnp.float32) + pe_ref[...]      # (Bb*S, D) f32

    def layernorm(y, g, b):
        mu = jnp.mean(y, axis=-1, keepdims=True)
        d = y - mu
        var = jnp.mean(d * d, axis=-1, keepdims=True)
        return d * lax.rsqrt(var + eps) * g + b

    for l in range(n_layers):
        vec = vec_ref[l]                                               # (6, D)
        ob, g1, be1 = vec[0:1], vec[1:2], vec[2:3]
        b2, g2, be2 = vec[3:4], vec[4:5], vec[5:6]

        # ------ fused QKV projection: ONE (Bb*S, D) @ (D, 3D) push per layer --
        qkv = jnp.dot(h.astype(cdt), wqkv_ref[l],
                      preferred_element_type=jnp.float32) + bqkv_ref[l]  # (Bb*S, 3D)

        # ------ per (batch element, head) attention on static slices ---------
        attn_rows = []
        for b in range(Bb):
            r0 = b * S
            heads = []
            for hh in range(nhead):
                c0 = hh * Dh
                q = qkv[r0:r0 + S, c0:c0 + Dh]                 # already scaled
                k = qkv[r0:r0 + S, D + c0:D + c0 + Dh]
                v = qkv[r0:r0 + S, 2 * D + c0:2 * D + c0 + Dh]
                s = lax.dot_general(q, k, trans_b,
                                    preferred_element_type=jnp.float32)  # (S, S)
                p = jnp.exp(s - jnp.max(s, axis=-1, keepdims=True))
                p = p * pl.reciprocal(jnp.sum(p, axis=-1, keepdims=True))
                heads.append(jnp.dot(p, v, preferred_element_type=jnp.float32))
            attn_rows.append(jnp.concatenate(heads, axis=-1))            # (S, D)
        attn = attn_rows[0] if Bb == 1 else jnp.concatenate(attn_rows, axis=0)

        # ------ single out-projection over all heads/rows + post-norm --------
        ao = jnp.dot(attn.astype(cdt), wo_ref[l],
                     preferred_element_type=jnp.float32) + ob            # (Bb*S, D)
        h = layernorm(h + ao, g1, be1)

        # ------ feed-forward (ReLU, ff=2048) ----------------------------------
        ff = jnp.dot(h.astype(cdt), w1_ref[l],
                     preferred_element_type=jnp.float32) + b1_ref[l]
        ff = jnp.maximum(ff, 0.0)
        ff = jnp.dot(ff.astype(cdt), w2_ref[l],
                     preferred_element_type=jnp.float32) + b2
        h = layernorm(h + ff, g2, be2)

    # ---- last time step of each batch element -> output projection ----------
    if Bb == 1:
        last = h[S - 1:S, :]
    else:
        last = jnp.concatenate(
            [h[b * S + S - 1:b * S + S, :] for b in range(Bb)], axis=0)  # (Bb, D)
    y = jnp.dot(last.astype(cdt), fcw_ref[...],
                preferred_element_type=jnp.float32) + fcb_ref[...]       # (Bb, n_series)
    o_ref[0] = y.astype(o_ref.dtype)


# ---------------------------------------------------------------------------
# One-time host-side repack into kernel-ready layout (fusion / folding / bf16)
# ---------------------------------------------------------------------------

def prepare_params(p):
    L, H, D, Dh = p["wq"].shape
    scale = 1.0 / math.sqrt(Dh)
    bf16 = jnp.bfloat16

    def fuse_w(w):      # (L, H, D, Dh) -> (L, D, H*Dh), column block h = head h
        return jnp.transpose(w, (0, 2, 1, 3)).reshape(L, D, H * Dh)

    def fuse_b(b):      # (L, H, 1, Dh) -> (L, 1, H*Dh)
        return jnp.transpose(b, (0, 2, 1, 3)).reshape(L, 1, H * Dh)

    wqkv = jnp.concatenate([fuse_w(p["wq"]) * scale,          # scale folded into Q
                            fuse_w(p["wk"]),
                            fuse_w(p["wv"])], axis=-1)        # (L, D, 3D)
    bqkv = jnp.concatenate([fuse_b(p["bq"]) * scale,
                            fuse_b(p["bk"]),
                            fuse_b(p["bv"])], axis=-1)        # (L, 1, 3D)
    wo = p["wo"].reshape(L, H * Dh, D)                        # (L, D, D)
    vec = jnp.concatenate([p["ob"], p["g1"], p["be1"],
                           p["b2"], p["g2"], p["be2"]], axis=1)  # (L, 6, D)
    return {
        "kernel_size": p["kernel_size"], "nhead": H, "n_layers": L,
        "conv_w": p["conv_w"].astype(bf16),
        "pe_cb": p["pe"] + p["conv_b"],                       # conv bias folded into PE
        "wqkv": wqkv.astype(bf16), "bqkv": bqkv,
        "wo": wo.astype(bf16),
        "w1": p["w1"].astype(bf16), "b1": p["b1"],
        "w2": p["w2"].astype(bf16),
        "vec": vec,
        "fc_w": p["fc_w"].astype(bf16), "fc_b": p["fc_b"],
    }


# ---------------------------------------------------------------------------
# Wrapper: one pallas_call for the full forward pass
# ---------------------------------------------------------------------------

def trans_forward(x, prep, *, batch_block=None):
    """x: (B, S, n_series) -> (B, n_series)."""
    B, S, Cin = x.shape
    K = prep["kernel_size"]
    H, L = prep["nhead"], prep["n_layers"]
    D = prep["wo"].shape[-1]
    FF = prep["w1"].shape[-1]
    n_series = prep["fc_w"].shape[-1]

    if batch_block is None:
        # Keep (up to) 2 grid programs so v7x's two TCs split the batch; any
        # remaining batch elements stack into the matmul M dim (v5e/v6e win).
        batch_block = max(1, B // 2) if B % 2 == 0 else 1
    Bb = batch_block
    assert B % Bb == 0
    G = B // Bb

    # Input-side glue (host, once): causal left pad + im2col + row stacking.
    xp = jnp.pad(x, ((0, 0), (K - 1, 0), (0, 0)))
    cols = jnp.concatenate([xp[:, k:k + S, :] for k in range(K)], axis=-1)
    cols = cols.reshape(B * S, K * Cin).astype(jnp.bfloat16)   # (B*S, K*Cin)

    pe = jnp.tile(prep["pe_cb"][:S], (Bb, 1))                  # (Bb*S, D)

    operands = (cols, prep["conv_w"], pe,
                prep["wqkv"], prep["bqkv"], prep["wo"],
                prep["w1"], prep["b1"], prep["w2"], prep["vec"],
                prep["fc_w"], prep["fc_b"])

    def const_spec(a):
        n = a.ndim
        return pl.BlockSpec(a.shape, lambda i, _n=n: (0,) * _n)

    in_specs = [pl.BlockSpec((Bb * S, K * Cin), lambda i: (i, 0))]
    in_specs += [const_spec(a) for a in operands[1:]]

    # Advisory cost estimate (lets XLA overlap the host-side glue).
    flops_tok = (2 * K * Cin * D
                 + L * (2 * D * 3 * D + 4 * S * D + 2 * D * D + 4 * D * FF))
    cost = pl.CostEstimate(
        flops=int(B * S * flops_tok + 2 * B * D * n_series),
        transcendentals=int(B * L * H * S * S),
        bytes_accessed=int(sum(a.size * a.dtype.itemsize for a in operands)
                           + B * n_series * x.dtype.itemsize))

    kernel = functools.partial(_trans_forward_kernel, S=S, Bb=Bb, nhead=H,
                               n_layers=L, eps=1e-5)

    out = pl.pallas_call(
        kernel,
        out_shape=jax.ShapeDtypeStruct((G, Bb, n_series), x.dtype),
        grid=(G,),
        in_specs=in_specs,
        out_specs=pl.BlockSpec((1, Bb, n_series), lambda i: (i, 0, 0)),
        compiler_params=pltpu.CompilerParams(
            dimension_semantics=("parallel",)),    # batch programs -> 2 TCs on v7x
        cost_estimate=cost,
    )(*operands)
    return out.reshape(B, n_series)


# ---------------------------------------------------------------------------
# Deterministic parameter construction (torch-equivalent layout)
# ---------------------------------------------------------------------------

def make_pe(max_len, d_model):
    pos = jnp.arange(max_len, dtype=jnp.float32)[:, None]
    div = jnp.exp(jnp.arange(0, d_model, 2, dtype=jnp.float32)
                  * (-math.log(10000.0) / d_model))
    pe = jnp.zeros((max_len, d_model), jnp.float32)
    pe = pe.at[:, 0::2].set(jnp.sin(pos * div))
    pe = pe.at[:, 1::2].set(jnp.cos(pos * div))
    return pe


def init_params(key, *, n_series, hidden, kernel_size, nhead, n_layers,
                series_len, dim_feedforward=2048):
    D, H, L, FF, K = hidden, nhead, n_layers, dim_feedforward, kernel_size
    Dh = D // H
    keys = iter(jax.random.split(key, 32))

    def rnd(shape, scale=0.05):
        return (scale * jax.random.normal(next(keys), shape)).astype(jnp.float32)

    return {
        "kernel_size": K,
        "nhead": H,
        "n_layers": L,
        # torch Conv1d weight (D, Cin, K) stored as (K*Cin, D) with row = k*Cin + cin
        "conv_w": rnd((K * n_series, D)),
        "conv_b": rnd((1, D)),
        "pe": make_pe(series_len, D),
        # torch in_proj_weight (3D, D) / bias (3D,), split per head & transposed:
        #   wq[l, h] = Wq[h*Dh:(h+1)*Dh, :].T  etc.
        "wq": rnd((L, H, D, Dh)), "bq": rnd((L, H, 1, Dh)),
        "wk": rnd((L, H, D, Dh)), "bk": rnd((L, H, 1, Dh)),
        "wv": rnd((L, H, D, Dh)), "bv": rnd((L, H, 1, Dh)),
        # torch out_proj.weight (D, D): wo[l, h] = W_o.T[h*Dh:(h+1)*Dh, :]
        "wo": rnd((L, H, Dh, D)), "ob": rnd((L, 1, D)),
        # FFN: torch linear1 (FF, D), linear2 (D, FF); stored transposed
        "w1": rnd((L, D, FF)), "b1": rnd((L, 1, FF)),
        "w2": rnd((L, FF, D)), "b2": rnd((L, 1, D)),
        "g1": jnp.ones((L, 1, D), jnp.float32), "be1": jnp.zeros((L, 1, D), jnp.float32),
        "g2": jnp.ones((L, 1, D), jnp.float32), "be2": jnp.zeros((L, 1, D), jnp.float32),
        # torch fc weight (n_series, hidden) stored transposed
        "fc_w": rnd((D, n_series)), "fc_b": rnd((1, n_series)),
    }


# ---------------------------------------------------------------------------

if __name__ == "__main__":
    # args: n_series=4, series_len=8, trans_hidden_size=32,
    #       trans_kernel_size=3, trans_n_head=4, trans_n_layers=2
    B, S, n_series = 2, 8, 4
    hidden, K, nhead, n_layers = 32, 3, 4, 2

    key = jax.random.PRNGKey(0)
    k_x, k_p = jax.random.split(key)
    x = jax.random.normal(k_x, (B, S, n_series), dtype=jnp.float32)
    params = init_params(k_p, n_series=n_series, hidden=hidden, kernel_size=K,
                         nhead=nhead, n_layers=n_layers, series_len=S)
    prep = prepare_params(params)

    out = trans_forward(x, prep)
    out = jax.block_until_ready(out)
    assert out.shape == (B, n_series), out.shape
    assert bool(jnp.all(jnp.isfinite(out)))
    # TODO(synk): nn.Dropout layers are identity in eval mode and are omitted.
    print("KERNEL_OK")
</pallas_src>

<mosaic_0001>
module attributes {stable_mosaic.version = 11 : i64} {
  func.func @_trans_forward_kernel(%arg0: i32, %arg1: memref<8x12xbf16, #tpu.memory_space<vmem>>, %arg2: memref<12x32xbf16, #tpu.memory_space<vmem>>, %arg3: memref<8x32xf32, #tpu.memory_space<vmem>>, %arg4: memref<2x32x96xbf16, #tpu.memory_space<vmem>>, %arg5: memref<2x1x96xf32, #tpu.memory_space<vmem>>, %arg6: memref<2x32x32xbf16, #tpu.memory_space<vmem>>, %arg7: memref<2x32x2048xbf16, #tpu.memory_space<vmem>>, %arg8: memref<2x1x2048xf32, #tpu.memory_space<vmem>>, %arg9: memref<2x2048x32xbf16, #tpu.memory_space<vmem>>, %arg10: memref<2x6x32xf32, #tpu.memory_space<vmem>>, %arg11: memref<32x4xbf16, #tpu.memory_space<vmem>>, %arg12: memref<1x4xf32, #tpu.memory_space<vmem>>, %arg13: memref<1x1x4xf32, #tpu.memory_space<vmem>>) attributes {dimension_semantics = [#tpu.dimension_semantics<parallel>], iteration_bounds = array<i64: 2>, scalar_prefetch = 0 : i64, scratch_operands = 0 : i64, tpu.core_type = #tpu.core_type<tc>, window_params = [{transform_indices = @transform_0, window_bounds = array<i64: 8, 12>}, {pipeline_mode = #tpu.pipeline_mode<synchronous>, transform_indices = @transform_1, window_bounds = array<i64: 12, 32>}, {pipeline_mode = #tpu.pipeline_mode<synchronous>, transform_indices = @transform_2, window_bounds = array<i64: 8, 32>}, {pipeline_mode = #tpu.pipeline_mode<synchronous>, transform_indices = @transform_3, window_bounds = array<i64: 2, 32, 96>}, {pipeline_mode = #tpu.pipeline_mode<synchronous>, transform_indices = @transform_4, window_bounds = array<i64: 2, 1, 96>}, {pipeline_mode = #tpu.pipeline_mode<synchronous>, transform_indices = @transform_5, window_bounds = array<i64: 2, 32, 32>}, {pipeline_mode = #tpu.pipeline_mode<synchronous>, transform_indices = @transform_6, window_bounds = array<i64: 2, 32, 2048>}, {pipeline_mode = #tpu.pipeline_mode<synchronous>, transform_indices = @transform_7, window_bounds = array<i64: 2, 1, 2048>}, {pipeline_mode = #tpu.pipeline_mode<synchronous>, transform_indices = @transform_8, window_bounds = array<i64: 2, 2048, 32>}, {pipeline_mode = #tpu.pipeline_mode<synchronous>, transform_indices = @transform_9, window_bounds = array<i64: 2, 6, 32>}, {pipeline_mode = #tpu.pipeline_mode<synchronous>, transform_indices = @transform_10, window_bounds = array<i64: 32, 4>}, {pipeline_mode = #tpu.pipeline_mode<synchronous>, transform_indices = @transform_11, window_bounds = array<i64: 1, 4>}, {transform_indices = @transform_12, window_bounds = array<i64: 1, 1, 4>}]} {
    %c0 = arith.constant 0 : index
    %c0_0 = arith.constant 0 : index
    %0 = vector.load %arg1[%c0, %c0_0] : memref<8x12xbf16, #tpu.memory_space<vmem>>, vector<8x12xbf16>
    %c0_1 = arith.constant 0 : index
    %c0_2 = arith.constant 0 : index
    %1 = vector.load %arg2[%c0_1, %c0_2] : memref<12x32xbf16, #tpu.memory_space<vmem>>, vector<12x32xbf16>
    %cst = arith.constant dense<0.000000e+00> : vector<8x32xf32>
    %2 = tpu.matmul %0, %1, %cst {dimension_numbers = #tpu.dot_dimension_numbers<[1], [0], [0], [1], [0, 0, 1, 1], [], []>} : vector<8x12xbf16>, vector<12x32xbf16>, vector<8x32xf32> -> vector<8x32xf32>
    %c0_3 = arith.constant 0 : index
    %c0_4 = arith.constant 0 : index
    %3 = vector.load %arg3[%c0_3, %c0_4] : memref<8x32xf32, #tpu.memory_space<vmem>>, vector<8x32xf32>
    %4 = arith.addf %2, %3 : vector<8x32xf32>
    %c0_5 = arith.constant 0 : index
    %c0_6 = arith.constant 0 : index
    %c0_7 = arith.constant 0 : index
    %5 = vector.load %arg10[%c0_5, %c0_6, %c0_7] : memref<2x6x32xf32, #tpu.memory_space<vmem>>, vector<1x6x32xf32>
    %6 = vector.shape_cast %5 : vector<1x6x32xf32> to vector<6x32xf32>
    %7 = vector.extract_strided_slice %6 {offsets = [0, 0], sizes = [1, 32], strides = [1, 1]} : vector<6x32xf32> to vector<1x32xf32>
    %8 = vector.extract_strided_slice %6 {offsets = [1, 0], sizes = [1, 32], strides = [1, 1]} : vector<6x32xf32> to vector<1x32xf32>
    %9 = vector.extract_strided_slice %6 {offsets = [2, 0], sizes = [1, 32], strides = [1, 1]} : vector<6x32xf32> to vector<1x32xf32>
    %10 = vector.extract_strided_slice %6 {offsets = [3, 0], sizes = [1, 32], strides = [1, 1]} : vector<6x32xf32> to vector<1x32xf32>
    %11 = vector.extract_strided_slice %6 {offsets = [4, 0], sizes = [1, 32], strides = [1, 1]} : vector<6x32xf32> to vector<1x32xf32>
    %12 = vector.extract_strided_slice %6 {offsets = [5, 0], sizes = [1, 32], strides = [1, 1]} : vector<6x32xf32> to vector<1x32xf32>
    %13 = arith.truncf %4 : vector<8x32xf32> to vector<8x32xbf16>
    %c0_8 = arith.constant 0 : index
    %c0_9 = arith.constant 0 : index
    %c0_10 = arith.constant 0 : index
    %14 = vector.load %arg4[%c0_8, %c0_9, %c0_10] : memref<2x32x96xbf16, #tpu.memory_space<vmem>>, vector<1x32x96xbf16>
    %15 = vector.shape_cast %14 : vector<1x32x96xbf16> to vector<32x96xbf16>
    %cst_11 = arith.constant dense<0.000000e+00> : vector<8x96xf32>
    %16 = tpu.matmul %13, %15, %cst_11 {dimension_numbers = #tpu.dot_dimension_numbers<[1], [0], [0], [1], [0, 0, 1, 1], [], []>} : vector<8x32xbf16>, vector<32x96xbf16>, vector<8x96xf32> -> vector<8x96xf32>
    %c0_12 = arith.constant 0 : index
    %c0_13 = arith.constant 0 : index
    %c0_14 = arith.constant 0 : index
    %17 = vector.load %arg5[%c0_12, %c0_13, %c0_14] : memref<2x1x96xf32, #tpu.memory_space<vmem>>, vector<1x1x96xf32>
    %18 = vector.shape_cast %17 : vector<1x1x96xf32> to vector<1x96xf32>
    %19 = vector.broadcast %18 : vector<1x96xf32> to vector<8x96xf32>
    %20 = arith.addf %16, %19 : vector<8x96xf32>
    %21 = vector.extract_strided_slice %20 {offsets = [0, 0], sizes = [8, 8], strides = [1, 1]} : vector<8x96xf32> to vector<8x8xf32>
    %22 = vector.extract_strided_slice %20 {offsets = [0, 32], sizes = [8, 8], strides = [1, 1]} : vector<8x96xf32> to vector<8x8xf32>
    %23 = vector.extract_strided_slice %20 {offsets = [0, 64], sizes = [8, 8], strides = [1, 1]} : vector<8x96xf32> to vector<8x8xf32>
    %cst_15 = arith.constant dense<0.000000e+00> : vector<8x8xf32>
    %24 = tpu.matmul %21, %22, %cst_15 {dimension_numbers = #tpu.dot_dimension_numbers<[1], [1], [0], [0], [0, 0, 1, 0], [], []>} : vector<8x8xf32>, vector<8x8xf32>, vector<8x8xf32> -> vector<8x8xf32>
    %cst_16 = arith.constant dense<0xFF800000> : vector<8xf32>
    %25 = vector.multi_reduction <maximumf>, %24, %cst_16 [1] : vector<8x8xf32> to vector<8xf32>
    %26 = vector.shape_cast %25 : vector<8xf32> to vector<8x1xf32>
    %27 = vector.broadcast %26 : vector<8x1xf32> to vector<8x8xf32>
    %28 = arith.subf %24, %27 : vector<8x8xf32>
    %29 = math.exp %28 : vector<8x8xf32>
    %cst_17 = arith.constant dense<0.000000e+00> : vector<8xf32>
    %30 = vector.multi_reduction <add>, %29, %cst_17 [1] : vector<8x8xf32> to vector<8xf32>
    %31 = vector.shape_cast %30 : vector<8xf32> to vector<8x1xf32>
    %32 = tpu.reciprocal %31 : vector<8x1xf32> -> vector<8x1xf32>
    %33 = vector.broadcast %32 : vector<8x1xf32> to vector<8x8xf32>
    %34 = arith.mulf %29, %33 : vector<8x8xf32>
    %cst_18 = arith.constant dense<0.000000e+00> : vector<8x8xf32>
    %35 = tpu.matmul %34, %23, %cst_18 {dimension_numbers = #tpu.dot_dimension_numbers<[1], [0], [0], [1], [0, 0, 1, 1], [], []>} : vector<8x8xf32>, vector<8x8xf32>, vector<8x8xf32> -> vector<8x8xf32>
    %36 = vector.extract_strided_slice %20 {offsets = [0, 8], sizes = [8, 8], strides = [1, 1]} : vector<8x96xf32> to vector<8x8xf32>
    %37 = vector.extract_strided_slice %20 {offsets = [0, 40], sizes = [8, 8], strides = [1, 1]} : vector<8x96xf32> to vector<8x8xf32>
    %38 = vector.extract_strided_slice %20 {offsets = [0, 72], sizes = [8, 8], strides = [1, 1]} : vector<8x96xf32> to vector<8x8xf32>
    %cst_19 = arith.constant dense<0.000000e+00> : vector<8x8xf32>
    %39 = tpu.matmul %36, %37, %cst_19 {dimension_numbers = #tpu.dot_dimension_numbers<[1], [1], [0], [0], [0, 0, 1, 0], [], []>} : vector<8x8xf32>, vector<8x8xf32>, vector<8x8xf32> -> vector<8x8xf32>
    %cst_20 = arith.constant dense<0xFF800000> : vector<8xf32>
    %40 = vector.multi_reduction <maximumf>, %39, %cst_20 [1] : vector<8x8xf32> to vector<8xf32>
    %41 = vector.shape_cast %40 : vector<8xf32> to vector<8x1xf32>
    %42 = vector.broadcast %41 : vector<8x1xf32> to vector<8x8xf32>
    %43 = arith.subf %39, %42 : vector<8x8xf32>
    %44 = math.exp %43 : vector<8x8xf32>
    %cst_21 = arith.constant dense<0.000000e+00> : vector<8xf32>
    %45 = vector.multi_reduction <add>, %44, %cst_21 [1] : vector<8x8xf32> to vector<8xf32>
    %46 = vector.shape_cast %45 : vector<8xf32> to vector<8x1xf32>
    %47 = tpu.reciprocal %46 : vector<8x1xf32> -> vector<8x1xf32>
    %48 = vector.broadcast %47 : vector<8x1xf32> to vector<8x8xf32>
    %49 = arith.mulf %44, %48 : vector<8x8xf32>
    %cst_22 = arith.constant dense<0.000000e+00> : vector<8x8xf32>
    %50 = tpu.matmul %49, %38, %cst_22 {dimension_numbers = #tpu.dot_dimension_numbers<[1], [0], [0], [1], [0, 0, 1, 1], [], []>} : vector<8x8xf32>, vector<8x8xf32>, vector<8x8xf32> -> vector<8x8xf32>
    %51 = vector.extract_strided_slice %20 {offsets = [0, 16], sizes = [8, 8], strides = [1, 1]} : vector<8x96xf32> to vector<8x8xf32>
    %52 = vector.extract_strided_slice %20 {offsets = [0, 48], sizes = [8, 8], strides = [1, 1]} : vector<8x96xf32> to vector<8x8xf32>
    %53 = vector.extract_strided_slice %20 {offsets = [0, 80], sizes = [8, 8], strides = [1, 1]} : vector<8x96xf32> to vector<8x8xf32>
    %cst_23 = arith.constant dense<0.000000e+00> : vector<8x8xf32>
    %54 = tpu.matmul %51, %52, %cst_23 {dimension_numbers = #tpu.dot_dimension_numbers<[1], [1], [0], [0], [0, 0, 1, 0], [], []>} : vector<8x8xf32>, vector<8x8xf32>, vector<8x8xf32> -> vector<8x8xf32>
    %cst_24 = arith.constant dense<0xFF800000> : vector<8xf32>
    %55 = vector.multi_reduction <maximumf>, %54, %cst_24 [1] : vector<8x8xf32> to vector<8xf32>
    %56 = vector.shape_cast %55 : vector<8xf32> to vector<8x1xf32>
    %57 = vector.broadcast %56 : vector<8x1xf32> to vector<8x8xf32>
    %58 = arith.subf %54, %57 : vector<8x8xf32>
    %59 = math.exp %58 : vector<8x8xf32>
    %cst_25 = arith.constant dense<0.000000e+00> : vector<8xf32>
    %60 = vector.multi_reduction <add>, %59, %cst_25 [1] : vector<8x8xf32> to vector<8xf32>
    %61 = vector.shape_cast %60 : vector<8xf32> to vector<8x1xf32>
    %62 = tpu.reciprocal %61 : vector<8x1xf32> -> vector<8x1xf32>
    %63 = vector.broadcast %62 : vector<8x1xf32> to vector<8x8xf32>
    %64 = arith.mulf %59, %63 : vector<8x8xf32>
    %cst_26 = arith.constant dense<0.000000e+00> : vector<8x8xf32>
    %65 = tpu.matmul %64, %53, %cst_26 {dimension_numbers = #tpu.dot_dimension_numbers<[1], [0], [0], [1], [0, 0, 1, 1], [], []>} : vector<8x8xf32>, vector<8x8xf32>, vector<8x8xf32> -> vector<8x8xf32>
    %66 = vector.extract_strided_slice %20 {offsets = [0, 24], sizes = [8, 8], strides = [1, 1]} : vector<8x96xf32> to vector<8x8xf32>
    %67 = vector.extract_strided_slice %20 {offsets = [0, 56], sizes = [8, 8], strides = [1, 1]} : vector<8x96xf32> to vector<8x8xf32>
    %68 = vector.extract_strided_slice %20 {offsets = [0, 88], sizes = [8, 8], strides = [1, 1]} : vector<8x96xf32> to vector<8x8xf32>
    %cst_27 = arith.constant dense<0.000000e+00> : vector<8x8xf32>
    %69 = tpu.matmul %66, %67, %cst_27 {dimension_numbers = #tpu.dot_dimension_numbers<[1], [1], [0], [0], [0, 0, 1, 0], [], []>} : vector<8x8xf32>, vector<8x8xf32>, vector<8x8xf32> -> vector<8x8xf32>
    %cst_28 = arith.constant dense<0xFF800000> : vector<8xf32>
    %70 = vector.multi_reduction <maximumf>, %69, %cst_28 [1] : vector<8x8xf32> to vector<8xf32>
    %71 = vector.shape_cast %70 : vector<8xf32> to vector<8x1xf32>
    %72 = vector.broadcast %71 : vector<8x1xf32> to vector<8x8xf32>
    %73 = arith.subf %69, %72 : vector<8x8xf32>
    %74 = math.exp %73 : vector<8x8xf32>
    %cst_29 = arith.constant dense<0.000000e+00> : vector<8xf32>
    %75 = vector.multi_reduction <add>, %74, %cst_29 [1] : vector<8x8xf32> to vector<8xf32>
    %76 = vector.shape_cast %75 : vector<8xf32> to vector<8x1xf32>
    %77 = tpu.reciprocal %76 : vector<8x1xf32> -> vector<8x1xf32>
    %78 = vector.broadcast %77 : vector<8x1xf32> to vector<8x8xf32>
    %79 = arith.mulf %74, %78 : vector<8x8xf32>
    %cst_30 = arith.constant dense<0.000000e+00> : vector<8x8xf32>
    %80 = tpu.matmul %79, %68, %cst_30 {dimension_numbers = #tpu.dot_dimension_numbers<[1], [0], [0], [1], [0, 0, 1, 1], [], []>} : vector<8x8xf32>, vector<8x8xf32>, vector<8x8xf32> -> vector<8x8xf32>
    %81 = tpu.concatenate %35, %50, %65, %80 in 1 : vector<8x8xf32>, vector<8x8xf32>, vector<8x8xf32>, vector<8x8xf32> -> vector<8x32xf32>
    %82 = arith.truncf %81 : vector<8x32xf32> to vector<8x32xbf16>
    %c0_31 = arith.constant 0 : index
    %c0_32 = arith.constant 0 : index
    %c0_33 = arith.constant 0 : index
    %83 = vector.load %arg6[%c0_31, %c0_32, %c0_33] : memref<2x32x32xbf16, #tpu.memory_space<vmem>>, vector<1x32x32xbf16>
    %84 = vector.shape_cast %83 : vector<1x32x32xbf16> to vector<32x32xbf16>
    %cst_34 = arith.constant dense<0.000000e+00> : vector<8x32xf32>
    %85 = tpu.matmul %82, %84, %cst_34 {dimension_numbers = #tpu.dot_dimension_numbers<[1], [0], [0], [1], [0, 0, 1, 1], [], []>} : vector<8x32xbf16>, vector<32x32xbf16>, vector<8x32xf32> -> vector<8x32xf32>
    %86 = vector.broadcast %7 : vector<1x32xf32> to vector<8x32xf32>
    %87 = arith.addf %85, %86 : vector<8x32xf32>
    %88 = arith.addf %4, %87 : vector<8x32xf32>
    %cst_35 = arith.constant dense<0.000000e+00> : vector<8xf32>
    %89 = vector.multi_reduction <add>, %88, %cst_35 [1] : vector<8x32xf32> to vector<8xf32>
    %90 = vector.shape_cast %89 : vector<8xf32> to vector<8x1xf32>
    %cst_36 = arith.constant 3.200000e+01 : f32
    %91 = vector.broadcast %cst_36 : f32 to vector<8x1xf32>
    %92 = arith.divf %90, %91 : vector<8x1xf32>
    %93 = vector.broadcast %92 : vector<8x1xf32> to vector<8x32xf32>
    %94 = arith.subf %88, %93 : vector<8x32xf32>
    %95 = arith.mulf %94, %94 : vector<8x32xf32>
    %cst_37 = arith.constant dense<0.000000e+00> : vector<8xf32>
    %96 = vector.multi_reduction <add>, %95, %cst_37 [1] : vector<8x32xf32> to vector<8xf32>
    %97 = vector.shape_cast %96 : vector<8xf32> to vector<8x1xf32>
    %cst_38 = arith.constant 3.200000e+01 : f32
    %98 = vector.broadcast %cst_38 : f32 to vector<8x1xf32>
    %99 = arith.divf %97, %98 : vector<8x1xf32>
    %cst_39 = arith.constant 9.99999974E-6 : f32
    %100 = vector.broadcast %cst_39 : f32 to vector<8x1xf32>
    %101 = arith.addf %99, %100 : vector<8x1xf32>
    %102 = math.rsqrt %101 : vector<8x1xf32>
    %103 = vector.broadcast %102 : vector<8x1xf32> to vector<8x32xf32>
    %104 = arith.mulf %94, %103 : vector<8x32xf32>
    %105 = vector.broadcast %8 : vector<1x32xf32> to vector<8x32xf32>
    %106 = arith.mulf %104, %105 : vector<8x32xf32>
    %107 = vector.broadcast %9 : vector<1x32xf32> to vector<8x32xf32>
    %108 = arith.addf %106, %107 : vector<8x32xf32>
    %109 = arith.truncf %108 : vector<8x32xf32> to vector<8x32xbf16>
    %c0_40 = arith.constant 0 : index
    %c0_41 = arith.constant 0 : index
    %c0_42 = arith.constant 0 : index
    %110 = vector.load %arg7[%c0_40, %c0_41, %c0_42] : memref<2x32x2048xbf16, #tpu.memory_space<vmem>>, vector<1x32x2048xbf16>
    %111 = vector.shape_cast %110 : vector<1x32x2048xbf16> to vector<32x2048xbf16>
    %cst_43 = arith.constant dense<0.000000e+00> : vector<8x2048xf32>
    %112 = tpu.matmul %109, %111, %cst_43 {dimension_numbers = #tpu.dot_dimension_numbers<[1], [0], [0], [1], [0, 0, 1, 1], [], []>} : vector<8x32xbf16>, vector<32x2048xbf16>, vector<8x2048xf32> -> vector<8x2048xf32>
    %c0_44 = arith.constant 0 : index
    %c0_45 = arith.constant 0 : index
    %c0_46 = arith.constant 0 : index
    %113 = vector.load %arg8[%c0_44, %c0_45, %c0_46] : memref<2x1x2048xf32, #tpu.memory_space<vmem>>, vector<1x1x2048xf32>
    %114 = vector.shape_cast %113 : vector<1x1x2048xf32> to vector<1x2048xf32>
    %115 = vector.broadcast %114 : vector<1x2048xf32> to vector<8x2048xf32>
    %116 = arith.addf %112, %115 : vector<8x2048xf32>
    %cst_47 = arith.constant 0.000000e+00 : f32
    %117 = vector.broadcast %cst_47 : f32 to vector<8x2048xf32>
    %118 = arith.maximumf %116, %117 : vector<8x2048xf32>
    %119 = arith.truncf %118 : vector<8x2048xf32> to vector<8x2048xbf16>
    %c0_48 = arith.constant 0 : index
    %c0_49 = arith.constant 0 : index
    %c0_50 = arith.constant 0 : index
    %120 = vector.load %arg9[%c0_48, %c0_49, %c0_50] : memref<2x2048x32xbf16, #tpu.memory_space<vmem>>, vector<1x2048x32xbf16>
    %121 = vector.shape_cast %120 : vector<1x2048x32xbf16> to vector<2048x32xbf16>
    %cst_51 = arith.constant dense<0.000000e+00> : vector<8x32xf32>
    %122 = tpu.matmul %119, %121, %cst_51 {dimension_numbers = #tpu.dot_dimension_numbers<[1], [0], [0], [1], [0, 0, 1, 1], [], []>} : vector<8x2048xbf16>, vector<2048x32xbf16>, vector<8x32xf32> -> vector<8x32xf32>
    %123 = vector.broadcast %10 : vector<1x32xf32> to vector<8x32xf32>
    %124 = arith.addf %122, %123 : vector<8x32xf32>
    %125 = arith.addf %108, %124 : vector<8x32xf32>
    %cst_52 = arith.constant dense<0.000000e+00> : vector<8xf32>
    %126 = vector.multi_reduction <add>, %125, %cst_52 [1] : vector<8x32xf32> to vector<8xf32>
    %127 = vector.shape_cast %126 : vector<8xf32> to vector<8x1xf32>
    %cst_53 = arith.constant 3.200000e+01 : f32
    %128 = vector.broadcast %cst_53 : f32 to vector<8x1xf32>
    %129 = arith.divf %127, %128 : vector<8x1xf32>
    %130 = vector.broadcast %129 : vector<8x1xf32> to vector<8x32xf32>
    %131 = arith.subf %125, %130 : vector<8x32xf32>
    %132 = arith.mulf %131, %131 : vector<8x32xf32>
    %cst_54 = arith.constant dense<0.000000e+00> : vector<8xf32>
    %133 = vector.multi_reduction <add>, %132, %cst_54 [1] : vector<8x32xf32> to vector<8xf32>
    %134 = vector.shape_cast %133 : vector<8xf32> to vector<8x1xf32>
    %cst_55 = arith.constant 3.200000e+01 : f32
    %135 = vector.broadcast %cst_55 : f32 to vector<8x1xf32>
    %136 = arith.divf %134, %135 : vector<8x1xf32>
    %cst_56 = arith.constant 9.99999974E-6 : f32
    %137 = vector.broadcast %cst_56 : f32 to vector<8x1xf32>
    %138 = arith.addf %136, %137 : vector<8x1xf32>
    %139 = math.rsqrt %138 : vector<8x1xf32>
    %140 = vector.broadcast %139 : vector<8x1xf32> to vector<8x32xf32>
    %141 = arith.mulf %131, %140 : vector<8x32xf32>
    %142 = vector.broadcast %11 : vector<1x32xf32> to vector<8x32xf32>
    %143 = arith.mulf %141, %142 : vector<8x32xf32>
    %144 = vector.broadcast %12 : vector<1x32xf32> to vector<8x32xf32>
    %145 = arith.addf %143, %144 : vector<8x32xf32>
    %c1 = arith.constant 1 : index
    %c0_57 = arith.constant 0 : index
    %c0_58 = arith.constant 0 : index
    %146 = vector.load %arg10[%c1, %c0_57, %c0_58] : memref<2x6x32xf32, #tpu.memory_space<vmem>>, vector<1x6x32xf32>
    %147 = vector.shape_cast %146 : vector<1x6x32xf32> to vector<6x32xf32>
    %148 = vector.extract_strided_slice %147 {offsets = [0, 0], sizes = [1, 32], strides = [1, 1]} : vector<6x32xf32> to vector<1x32xf32>
    %149 = vector.extract_strided_slice %147 {offsets = [1, 0], sizes = [1, 32], strides = [1, 1]} : vector<6x32xf32> to vector<1x32xf32>
    %150 = vector.extract_strided_slice %147 {offsets = [2, 0], sizes = [1, 32], strides = [1, 1]} : vector<6x32xf32> to vector<1x32xf32>
    %151 = vector.extract_strided_slice %147 {offsets = [3, 0], sizes = [1, 32], strides = [1, 1]} : vector<6x32xf32> to vector<1x32xf32>
    %152 = vector.extract_strided_slice %147 {offsets = [4, 0], sizes = [1, 32], strides = [1, 1]} : vector<6x32xf32> to vector<1x32xf32>
    %153 = vector.extract_strided_slice %147 {offsets = [5, 0], sizes = [1, 32], strides = [1, 1]} : vector<6x32xf32> to vector<1x32xf32>
    %154 = arith.truncf %145 : vector<8x32xf32> to vector<8x32xbf16>
    %c1_59 = arith.constant 1 : index
    %c0_60 = arith.constant 0 : index
    %c0_61 = arith.constant 0 : index
    %155 = vector.load %arg4[%c1_59, %c0_60, %c0_61] : memref<2x32x96xbf16, #tpu.memory_space<vmem>>, vector<1x32x96xbf16>
    %156 = vector.shape_cast %155 : vector<1x32x96xbf16> to vector<32x96xbf16>
    %cst_62 = arith.constant dense<0.000000e+00> : vector<8x96xf32>
    %157 = tpu.matmul %154, %156, %cst_62 {dimension_numbers = #tpu.dot_dimension_numbers<[1], [0], [0], [1], [0, 0, 1, 1], [], []>} : vector<8x32xbf16>, vector<32x96xbf16>, vector<8x96xf32> -> vector<8x96xf32>
    %c1_63 = arith.constant 1 : index
    %c0_64 = arith.constant 0 : index
    %c0_65 = arith.constant 0 : index
    %158 = vector.load %arg5[%c1_63, %c0_64, %c0_65] : memref<2x1x96xf32, #tpu.memory_space<vmem>>, vector<1x1x96xf32>
    %159 = vector.shape_cast %158 : vector<1x1x96xf32> to vector<1x96xf32>
    %160 = vector.broadcast %159 : vector<1x96xf32> to vector<8x96xf32>
    %161 = arith.addf %157, %160 : vector<8x96xf32>
    %162 = vector.extract_strided_slice %161 {offsets = [0, 0], sizes = [8, 8], strides = [1, 1]} : vector<8x96xf32> to vector<8x8xf32>
    %163 = vector.extract_strided_slice %161 {offsets = [0, 32], sizes = [8, 8], strides = [1, 1]} : vector<8x96xf32> to vector<8x8xf32>
    %164 = vector.extract_strided_slice %161 {offsets = [0, 64], sizes = [8, 8], strides = [1, 1]} : vector<8x96xf32> to vector<8x8xf32>
    %cst_66 = arith.constant dense<0.000000e+00> : vector<8x8xf32>
    %165 = tpu.matmul %162, %163, %cst_66 {dimension_numbers = #tpu.dot_dimension_numbers<[1], [1], [0], [0], [0, 0, 1, 0], [], []>} : vector<8x8xf32>, vector<8x8xf32>, vector<8x8xf32> -> vector<8x8xf32>
    %cst_67 = arith.constant dense<0xFF800000> : vector<8xf32>
    %166 = vector.multi_reduction <maximumf>, %165, %cst_67 [1] : vector<8x8xf32> to vector<8xf32>
    %167 = vector.shape_cast %166 : vector<8xf32> to vector<8x1xf32>
    %168 = vector.broadcast %167 : vector<8x1xf32> to vector<8x8xf32>
    %169 = arith.subf %165, %168 : vector<8x8xf32>
    %170 = math.exp %169 : vector<8x8xf32>
    %cst_68 = arith.constant dense<0.000000e+00> : vector<8xf32>
    %171 = vector.multi_reduction <add>, %170, %cst_68 [1] : vector<8x8xf32> to vector<8xf32>
    %172 = vector.shape_cast %171 : vector<8xf32> to vector<8x1xf32>
    %173 = tpu.reciprocal %172 : vector<8x1xf32> -> vector<8x1xf32>
    %174 = vector.broadcast %173 : vector<8x1xf32> to vector<8x8xf32>
    %175 = arith.mulf %170, %174 : vector<8x8xf32>
    %cst_69 = arith.constant dense<0.000000e+00> : vector<8x8xf32>
    %176 = tpu.matmul %175, %164, %cst_69 {dimension_numbers = #tpu.dot_dimension_numbers<[1], [0], [0], [1], [0, 0, 1, 1], [], []>} : vector<8x8xf32>, vector<8x8xf32>, vector<8x8xf32> -> vector<8x8xf32>
    %177 = vector.extract_strided_slice %161 {offsets = [0, 8], sizes = [8, 8], strides = [1, 1]} : vector<8x96xf32> to vector<8x8xf32>
    %178 = vector.extract_strided_slice %161 {offsets = [0, 40], sizes = [8, 8], strides = [1, 1]} : vector<8x96xf32> to vector<8x8xf32>
    %179 = vector.extract_strided_slice %161 {offsets = [0, 72], sizes = [8, 8], strides = [1, 1]} : vector<8x96xf32> to vector<8x8xf32>
    %cst_70 = arith.constant dense<0.000000e+00> : vector<8x8xf32>
    %180 = tpu.matmul %177, %178, %cst_70 {dimension_numbers = #tpu.dot_dimension_numbers<[1], [1], [0], [0], [0, 0, 1, 0], [], []>} : vector<8x8xf32>, vector<8x8xf32>, vector<8x8xf32> -> vector<8x8xf32>
    %cst_71 = arith.constant dense<0xFF800000> : vector<8xf32>
    %181 = vector.multi_reduction <maximumf>, %180, %cst_71 [1] : vector<8x8xf32> to vector<8xf32>
    %182 = vector.shape_cast %181 : vector<8xf32> to vector<8x1xf32>
    %183 = vector.broadcast %182 : vector<8x1xf32> to vector<8x8xf32>
    %184 = arith.subf %180, %183 : vector<8x8xf32>
    %185 = math.exp %184 : vector<8x8xf32>
    %cst_72 = arith.constant dense<0.000000e+00> : vector<8xf32>
    %186 = vector.multi_reduction <add>, %185, %cst_72 [1] : vector<8x8xf32> to vector<8xf32>
    %187 = vector.shape_cast %186 : vector<8xf32> to vector<8x1xf32>
    %188 = tpu.reciprocal %187 : vector<8x1xf32> -> vector<8x1xf32>
    %189 = vector.broadcast %188 : vector<8x1xf32> to vector<8x8xf32>
    %190 = arith.mulf %185, %189 : vector<8x8xf32>
    %cst_73 = arith.constant dense<0.000000e+00> : vector<8x8xf32>
    %191 = tpu.matmul %190, %179, %cst_73 {dimension_numbers = #tpu.dot_dimension_numbers<[1], [0], [0], [1], [0, 0, 1, 1], [], []>} : vector<8x8xf32>, vector<8x8xf32>, vector<8x8xf32> -> vector<8x8xf32>
    %192 = vector.extract_strided_slice %161 {offsets = [0, 16], sizes = [8, 8], strides = [1, 1]} : vector<8x96xf32> to vector<8x8xf32>
    %193 = vector.extract_strided_slice %161 {offsets = [0, 48], sizes = [8, 8], strides = [1, 1]} : vector<8x96xf32> to vector<8x8xf32>
    %194 = vector.extract_strided_slice %161 {offsets = [0, 80], sizes = [8, 8], strides = [1, 1]} : vector<8x96xf32> to vector<8x8xf32>
    %cst_74 = arith.constant dense<0.000000e+00> : vector<8x8xf32>
    %195 = tpu.matmul %192, %193, %cst_74 {dimension_numbers = #tpu.dot_dimension_numbers<[1], [1], [0], [0], [0, 0, 1, 0], [], []>} : vector<8x8xf32>, vector<8x8xf32>, vector<8x8xf32> -> vector<8x8xf32>
    %cst_75 = arith.constant dense<0xFF800000> : vector<8xf32>
    %196 = vector.multi_reduction <maximumf>, %195, %cst_75 [1] : vector<8x8xf32> to vector<8xf32>
    %197 = vector.shape_cast %196 : vector<8xf32> to vector<8x1xf32>
    %198 = vector.broadcast %197 : vector<8x1xf32> to vector<8x8xf32>
    %199 = arith.subf %195, %198 : vector<8x8xf32>
    %200 = math.exp %199 : vector<8x8xf32>
    %cst_76 = arith.constant dense<0.000000e+00> : vector<8xf32>
    %201 = vector.multi_reduction <add>, %200, %cst_76 [1] : vector<8x8xf32> to vector<8xf32>
    %202 = vector.shape_cast %201 : vector<8xf32> to vector<8x1xf32>
    %203 = tpu.reciprocal %202 : vector<8x1xf32> -> vector<8x1xf32>
    %204 = vector.broadcast %203 : vector<8x1xf32> to vector<8x8xf32>
    %205 = arith.mulf %200, %204 : vector<8x8xf32>
    %cst_77 = arith.constant dense<0.000000e+00> : vector<8x8xf32>
    %206 = tpu.matmul %205, %194, %cst_77 {dimension_numbers = #tpu.dot_dimension_numbers<[1], [0], [0], [1], [0, 0, 1, 1], [], []>} : vector<8x8xf32>, vector<8x8xf32>, vector<8x8xf32> -> vector<8x8xf32>
    %207 = vector.extract_strided_slice %161 {offsets = [0, 24], sizes = [8, 8], strides = [1, 1]} : vector<8x96xf32> to vector<8x8xf32>
    %208 = vector.extract_strided_slice %161 {offsets = [0, 56], sizes = [8, 8], strides = [1, 1]} : vector<8x96xf32> to vector<8x8xf32>
    %209 = vector.extract_strided_slice %161 {offsets = [0, 88], sizes = [8, 8], strides = [1, 1]} : vector<8x96xf32> to vector<8x8xf32>
    %cst_78 = arith.constant dense<0.000000e+00> : vector<8x8xf32>
    %210 = tpu.matmul %207, %208, %cst_78 {dimension_numbers = #tpu.dot_dimension_numbers<[1], [1], [0], [0], [0, 0, 1, 0], [], []>} : vector<8x8xf32>, vector<8x8xf32>, vector<8x8xf32> -> vector<8x8xf32>
    %cst_79 = arith.constant dense<0xFF800000> : vector<8xf32>
    %211 = vector.multi_reduction <maximumf>, %210, %cst_79 [1] : vector<8x8xf32> to vector<8xf32>
    %212 = vector.shape_cast %211 : vector<8xf32> to vector<8x1xf32>
    %213 = vector.broadcast %212 : vector<8x1xf32> to vector<8x8xf32>
    %214 = arith.subf %210, %213 : vector<8x8xf32>
    %215 = math.exp %214 : vector<8x8xf32>
    %cst_80 = arith.constant dense<0.000000e+00> : vector<8xf32>
    %216 = vector.multi_reduction <add>, %215, %cst_80 [1] : vector<8x8xf32> to vector<8xf32>
    %217 = vector.shape_cast %216 : vector<8xf32> to vector<8x1xf32>
    %218 = tpu.reciprocal %217 : vector<8x1xf32> -> vector<8x1xf32>
    %219 = vector.broadcast %218 : vector<8x1xf32> to vector<8x8xf32>
    %220 = arith.mulf %215, %219 : vector<8x8xf32>
    %cst_81 = arith.constant dense<0.000000e+00> : vector<8x8xf32>
    %221 = tpu.matmul %220, %209, %cst_81 {dimension_numbers = #tpu.dot_dimension_numbers<[1], [0], [0], [1], [0, 0, 1, 1], [], []>} : vector<8x8xf32>, vector<8x8xf32>, vector<8x8xf32> -> vector<8x8xf32>
    %222 = tpu.concatenate %176, %191, %206, %221 in 1 : vector<8x8xf32>, vector<8x8xf32>, vector<8x8xf32>, vector<8x8xf32> -> vector<8x32xf32>
    %223 = arith.truncf %222 : vector<8x32xf32> to vector<8x32xbf16>
    %c1_82 = arith.constant 1 : index
    %c0_83 = arith.constant 0 : index
    %c0_84 = arith.constant 0 : index
    %224 = vector.load %arg6[%c1_82, %c0_83, %c0_84] : memref<2x32x32xbf16, #tpu.memory_space<vmem>>, vector<1x32x32xbf16>
    %225 = vector.shape_cast %224 : vector<1x32x32xbf16> to vector<32x32xbf16>
    %cst_85 = arith.constant dense<0.000000e+00> : vector<8x32xf32>
    %226 = tpu.matmul %223, %225, %cst_85 {dimension_numbers = #tpu.dot_dimension_numbers<[1], [0], [0], [1], [0, 0, 1, 1], [], []>} : vector<8x32xbf16>, vector<32x32xbf16>, vector<8x32xf32> -> vector<8x32xf32>
    %227 = vector.broadcast %148 : vector<1x32xf32> to vector<8x32xf32>
    %228 = arith.addf %226, %227 : vector<8x32xf32>
    %229 = arith.addf %145, %228 : vector<8x32xf32>
    %cst_86 = arith.constant dense<0.000000e+00> : vector<8xf32>
    %230 = vector.multi_reduction <add>, %229, %cst_86 [1] : vector<8x32xf32> to vector<8xf32>
    %231 = vector.shape_cast %230 : vector<8xf32> to vector<8x1xf32>
    %cst_87 = arith.constant 3.200000e+01 : f32
    %232 = vector.broadcast %cst_87 : f32 to vector<8x1xf32>
    %233 = arith.divf %231, %232 : vector<8x1xf32>
    %234 = vector.broadcast %233 : vector<8x1xf32> to vector<8x32xf32>
    %235 = arith.subf %229, %234 : vector<8x32xf32>
    %236 = arith.mulf %235, %235 : vector<8x32xf32>
    %cst_88 = arith.constant dense<0.000000e+00> : vector<8xf32>
    %237 = vector.multi_reduction <add>, %236, %cst_88 [1] : vector<8x32xf32> to vector<8xf32>
    %238 = vector.shape_cast %237 : vector<8xf32> to vector<8x1xf32>
    %cst_89 = arith.constant 3.200000e+01 : f32
    %239 = vector.broadcast %cst_89 : f32 to vector<8x1xf32>
    %240 = arith.divf %238, %239 : vector<8x1xf32>
    %cst_90 = arith.constant 9.99999974E-6 : f32
    %241 = vector.broadcast %cst_90 : f32 to vector<8x1xf32>
    %242 = arith.addf %240, %241 : vector<8x1xf32>
    %243 = math.rsqrt %242 : vector<8x1xf32>
    %244 = vector.broadcast %243 : vector<8x1xf32> to vector<8x32xf32>
    %245 = arith.mulf %235, %244 : vector<8x32xf32>
    %246 = vector.broadcast %149 : vector<1x32xf32> to vector<8x32xf32>
    %247 = arith.mulf %245, %246 : vector<8x32xf32>
    %248 = vector.broadcast %150 : vector<1x32xf32> to vector<8x32xf32>
    %249 = arith.addf %247, %248 : vector<8x32xf32>
    %250 = arith.truncf %249 : vector<8x32xf32> to vector<8x32xbf16>
    %c1_91 = arith.constant 1 : index
    %c0_92 = arith.constant 0 : index
    %c0_93 = arith.constant 0 : index
    %251 = vector.load %arg7[%c1_91, %c0_92, %c0_93] : memref<2x32x2048xbf16, #tpu.memory_space<vmem>>, vector<1x32x2048xbf16>
    %252 = vector.shape_cast %251 : vector<1x32x2048xbf16> to vector<32x2048xbf16>
    %cst_94 = arith.constant dense<0.000000e+00> : vector<8x2048xf32>
    %253 = tpu.matmul %250, %252, %cst_94 {dimension_numbers = #tpu.dot_dimension_numbers<[1], [0], [0], [1], [0, 0, 1, 1], [], []>} : vector<8x32xbf16>, vector<32x2048xbf16>, vector<8x2048xf32> -> vector<8x2048xf32>
    %c1_95 = arith.constant 1 : index
    %c0_96 = arith.constant 0 : index
    %c0_97 = arith.constant 0 : index
    %254 = vector.load %arg8[%c1_95, %c0_96, %c0_97] : memref<2x1x2048xf32, #tpu.memory_space<vmem>>, vector<1x1x2048xf32>
    %255 = vector.shape_cast %254 : vector<1x1x2048xf32> to vector<1x2048xf32>
    %256 = vector.broadcast %255 : vector<1x2048xf32> to vector<8x2048xf32>
    %257 = arith.addf %253, %256 : vector<8x2048xf32>
    %cst_98 = arith.constant 0.000000e+00 : f32
    %258 = vector.broadcast %cst_98 : f32 to vector<8x2048xf32>
    %259 = arith.maximumf %257, %258 : vector<8x2048xf32>
    %260 = arith.truncf %259 : vector<8x2048xf32> to vector<8x2048xbf16>
    %c1_99 = arith.constant 1 : index
    %c0_100 = arith.constant 0 : index
    %c0_101 = arith.constant 0 : index
    %261 = vector.load %arg9[%c1_99, %c0_100, %c0_101] : memref<2x2048x32xbf16, #tpu.memory_space<vmem>>, vector<1x2048x32xbf16>
    %262 = vector.shape_cast %261 : vector<1x2048x32xbf16> to vector<2048x32xbf16>
    %cst_102 = arith.constant dense<0.000000e+00> : vector<8x32xf32>
    %263 = tpu.matmul %260, %262, %cst_102 {dimension_numbers = #tpu.dot_dimension_numbers<[1], [0], [0], [1], [0, 0, 1, 1], [], []>} : vector<8x2048xbf16>, vector<2048x32xbf16>, vector<8x32xf32> -> vector<8x32xf32>
    %264 = vector.broadcast %151 : vector<1x32xf32> to vector<8x32xf32>
    %265 = arith.addf %263, %264 : vector<8x32xf32>
    %266 = arith.addf %249, %265 : vector<8x32xf32>
    %cst_103 = arith.constant dense<0.000000e+00> : vector<8xf32>
    %267 = vector.multi_reduction <add>, %266, %cst_103 [1] : vector<8x32xf32> to vector<8xf32>
    %268 = vector.shape_cast %267 : vector<8xf32> to vector<8x1xf32>
    %cst_104 = arith.constant 3.200000e+01 : f32
    %269 = vector.broadcast %cst_104 : f32 to vector<8x1xf32>
    %270 = arith.divf %268, %269 : vector<8x1xf32>
    %271 = vector.broadcast %270 : vector<8x1xf32> to vector<8x32xf32>
    %272 = arith.subf %266, %271 : vector<8x32xf32>
    %273 = arith.mulf %272, %272 : vector<8x32xf32>
    %cst_105 = arith.constant dense<0.000000e+00> : vector<8xf32>
    %274 = vector.multi_reduction <add>, %273, %cst_105 [1] : vector<8x32xf32> to vector<8xf32>
    %275 = vector.shape_cast %274 : vector<8xf32> to vector<8x1xf32>
    %cst_106 = arith.constant 3.200000e+01 : f32
    %276 = vector.broadcast %cst_106 : f32 to vector<8x1xf32>
    %277 = arith.divf %275, %276 : vector<8x1xf32>
    %cst_107 = arith.constant 9.99999974E-6 : f32
    %278 = vector.broadcast %cst_107 : f32 to vector<8x1xf32>
    %279 = arith.addf %277, %278 : vector<8x1xf32>
    %280 = math.rsqrt %279 : vector<8x1xf32>
    %281 = vector.broadcast %280 : vector<8x1xf32> to vector<8x32xf32>
    %282 = arith.mulf %272, %281 : vector<8x32xf32>
    %283 = vector.broadcast %152 : vector<1x32xf32> to vector<8x32xf32>
    %284 = arith.mulf %282, %283 : vector<8x32xf32>
    %285 = vector.broadcast %153 : vector<1x32xf32> to vector<8x32xf32>
    %286 = arith.addf %284, %285 : vector<8x32xf32>
    %287 = vector.extract_strided_slice %286 {offsets = [7, 0], sizes = [1, 32], strides = [1, 1]} : vector<8x32xf32> to vector<1x32xf32>
    %288 = arith.truncf %287 : vector<1x32xf32> to vector<1x32xbf16>
    %c0_108 = arith.constant 0 : index
    %c0_109 = arith.constant 0 : index
    %289 = vector.load %arg11[%c0_108, %c0_109] : memref<32x4xbf16, #tpu.memory_space<vmem>>, vector<32x4xbf16>
    %cst_110 = arith.constant dense<0.000000e+00> : vector<1x4xf32>
    %290 = tpu.matmul %288, %289, %cst_110 {dimension_numbers = #tpu.dot_dimension_numbers<[1], [0], [0], [1], [0, 0, 1, 1], [], []>} : vector<1x32xbf16>, vector<32x4xbf16>, vector<1x4xf32> -> vector<1x4xf32>
    %c0_111 = arith.constant 0 : index
    %c0_112 = arith.constant 0 : index
    %291 = vector.load %arg12[%c0_111, %c0_112] : memref<1x4xf32, #tpu.memory_space<vmem>>, vector<1x4xf32>
    %292 = arith.addf %290, %291 : vector<1x4xf32>
    %c0_113 = arith.constant 0 : index
    %c0_114 = arith.constant 0 : index
    %c0_115 = arith.constant 0 : index
    %293 = vector.load %arg13[%c0_113, %c0_114, %c0_115] : memref<1x1x4xf32, #tpu.memory_space<vmem>>, vector<1x1x4xf32>
    %294 = vector.shape_cast %293 : vector<1x1x4xf32> to vector<1x4xf32>
    %295 = vector.shape_cast %292 : vector<1x4xf32> to vector<1x1x4xf32>
    tpu.vector_store %arg13[%c0_113, %c0_114, %c0_115], %295 {strides = array<i32>} : memref<1x1x4xf32, #tpu.memory_space<vmem>>, vector<1x1x4xf32>,
    return
  }
  func.func @transform_0(%arg0: i32) -> (i32, i32) {
    %c0_i32 = arith.constant 0 : i32
    %c0_i32_0 = arith.constant 0 : i32
    return %arg0, %c0_i32 : i32, i32
  }
  func.func @transform_1(%arg0: i32) -> (i32, i32) {
    %c0_i32 = arith.constant 0 : i32
    %c0_i32_0 = arith.constant 0 : i32
    %c0_i32_1 = arith.constant 0 : i32
    return %c0_i32, %c0_i32_0 : i32, i32
  }
  func.func @transform_2(%arg0: i32) -> (i32, i32) {
    %c0_i32 = arith.constant 0 : i32
    %c0_i32_0 = arith.constant 0 : i32
    %c0_i32_1 = arith.constant 0 : i32
    return %c0_i32, %c0_i32_0 : i32, i32
  }
  func.func @transform_3(%arg0: i32) -> (i32, i32, i32) {
    %c0_i32 = arith.constant 0 : i32
    %c0_i32_0 = arith.constant 0 : i32
    %c0_i32_1 = arith.constant 0 : i32
    %c0_i32_2 = arith.constant 0 : i32
    return %c0_i32, %c0_i32_0, %c0_i32_1 : i32, i32, i32
  }
  func.func @transform_4(%arg0: i32) -> (i32, i32, i32) {
    %c0_i32 = arith.constant 0 : i32
    %c0_i32_0 = arith.constant 0 : i32
    %c0_i32_1 = arith.constant 0 : i32
    %c0_i32_2 = arith.constant 0 : i32
    return %c0_i32, %c0_i32_0, %c0_i32_1 : i32, i32, i32
  }
  func.func @transform_5(%arg0: i32) -> (i32, i32, i32) {
    %c0_i32 = arith.constant 0 : i32
    %c0_i32_0 = arith.constant 0 : i32
    %c0_i32_1 = arith.constant 0 : i32
    %c0_i32_2 = arith.constant 0 : i32
    return %c0_i32, %c0_i32_0, %c0_i32_1 : i32, i32, i32
  }
  func.func @transform_6(%arg0: i32) -> (i32, i32, i32) {
    %c0_i32 = arith.constant 0 : i32
    %c0_i32_0 = arith.constant 0 : i32
    %c0_i32_1 = arith.constant 0 : i32
    %c0_i32_2 = arith.constant 0 : i32
    return %c0_i32, %c0_i32_0, %c0_i32_1 : i32, i32, i32
  }
  func.func @transform_7(%arg0: i32) -> (i32, i32, i32) {
    %c0_i32 = arith.constant 0 : i32
    %c0_i32_0 = arith.constant 0 : i32
    %c0_i32_1 = arith.constant 0 : i32
    %c0_i32_2 = arith.constant 0 : i32
    return %c0_i32, %c0_i32_0, %c0_i32_1 : i32, i32, i32
  }
  func.func @transform_8(%arg0: i32) -> (i32, i32, i32) {
    %c0_i32 = arith.constant 0 : i32
    %c0_i32_0 = arith.constant 0 : i32
    %c0_i32_1 = arith.constant 0 : i32
    %c0_i32_2 = arith.constant 0 : i32
    return %c0_i32, %c0_i32_0, %c0_i32_1 : i32, i32, i32
  }
  func.func @transform_9(%arg0: i32) -> (i32, i32, i32) {
    %c0_i32 = arith.constant 0 : i32
    %c0_i32_0 = arith.constant 0 : i32
    %c0_i32_1 = arith.constant 0 : i32
    %c0_i32_2 = arith.constant 0 : i32
    return %c0_i32, %c0_i32_0, %c0_i32_1 : i32, i32, i32
  }
  func.func @transform_10(%arg0: i32) -> (i32, i32) {
    %c0_i32 = arith.constant 0 : i32
    %c0_i32_0 = arith.constant 0 : i32
    %c0_i32_1 = arith.constant 0 : i32
    return %c0_i32, %c0_i32_0 : i32, i32
  }
  func.func @transform_11(%arg0: i32) -> (i32, i32) {
    %c0_i32 = arith.constant 0 : i32
    %c0_i32_0 = arith.constant 0 : i32
    %c0_i32_1 = arith.constant 0 : i32
    return %c0_i32, %c0_i32_0 : i32, i32
  }
  func.func @transform_12(%arg0: i32) -> (i32, i32, i32) {
    %c0_i32 = arith.constant 0 : i32
    %c0_i32_0 = arith.constant 0 : i32
    %c0_i32_1 = arith.constant 0 : i32
    return %arg0, %c0_i32, %c0_i32_0 : i32, i32, i32
  }
}

</mosaic_0001>

<llo_original>
// kernel: tpu_custom_call.1
$region0: #{tpu_custom_call.1}
  #allocation0 [shape = 'u32[]', space=smem, size = 0x4, offset = 0x4, fixed_abs, tag = 'smem constant byte address 0x4 - core index']
  #allocation1 [shape = 'u32[144,128]{1,0:T(1,128)}', space=vmem, size = 0x12000, scoped, tag = 'internal scratch']
  %s0 = inlined_call_operand.vmem [shape: bf16[16,12], index: 0, kind: input, shape index: {}]
  %s1 = inlined_call_operand.vmem [shape: bf16[12,32], index: 1, kind: input, shape index: {}]
  %s2 = inlined_call_operand.vmem [shape: f32[8,32], index: 2, kind: input, shape index: {}]
  %s3 = inlined_call_operand.vmem [shape: bf16[2,32,96], index: 3, kind: input, shape index: {}]
  %s4 = inlined_call_operand.vmem [shape: f32[2,1,96], index: 4, kind: input, shape index: {}]
  %s5 = inlined_call_operand.vmem [shape: bf16[2,32,32], index: 5, kind: input, shape index: {}]
  %s6 = inlined_call_operand.vmem [shape: bf16[2,32,2048], index: 6, kind: input, shape index: {}]
  %s7 = inlined_call_operand.vmem [shape: f32[2,1,2048], index: 7, kind: input, shape index: {}]
  %s8 = inlined_call_operand.vmem [shape: bf16[2,2048,32], index: 8, kind: input, shape index: {}]
  %s9 = inlined_call_operand.vmem [shape: f32[2,6,32], index: 9, kind: input, shape index: {}]
  %s10 = inlined_call_operand.vmem [shape: bf16[32,4], index: 10, kind: input, shape index: {}]
  %s11 = inlined_call_operand.vmem [shape: f32[1,4], index: 11, kind: input, shape index: {}]
  %s12 = inlined_call_operand.hbm [shape: f32[2,1,4], index: 12, kind: output, shape index: {}]
  %s13 = sld [smem:[#allocation0]]
  $region81: #{tpu_custom_call.1} parent=0
    _
  %s15 = ssub.s32 1, %s13
  %s16 = scalar_select 0, %s15, %s13
  $region1: #{tpu_custom_call.1} parent=0
    #allocation2 [shape = 'u8[1024]{0}', space=vmem, size = 0x400, scoped, tag = 'output window, operand 0']
    #allocation3 [shape = 's32[2]{0}', space=sflag, size = 0x8, scoped, tag = 'scoped memory for tpu_custom_call.1']
    %17 = vsyncpa [#allocation3], 0
    %s18 = scalar_lea.sflag [#allocation3], 1
    %19 = vsyncpa %s18, 0
    loop: start=0, step=1, limit=4
    $region2: #{tpu_custom_call.1} parent=1 // loop_pre_header
      _
    $region3: #{tpu_custom_call.1} parent=1 // loop_header
      %s21 = sphi 0, %s25
      %p22 = scmp.ge.s32.totalorder %s21, 4
      %s31 = sphi 0, %s33
      %s34 = sphi 0, %s31
      %s35 = sphi 0, %s34
      %s51 = sphi 0, %s35
      %s55 = sphi 0, %s55
      %s57 = sphi 0, %s55
      %s58 = sphi 0, %s57
      %s72 = sphi 0, %s58
      %s76 = sphi 0, %s76
      %s78 = sphi 0, %s76
      %s79 = sphi 0, %s78
      %s93 = sphi 0, %s79
      %s97 = sphi 0, %s97
      %s99 = sphi 0, %s97
      %s100 = sphi 0, %s99
      %s114 = sphi 0, %s100
      %s118 = sphi 0, %s118
      %s120 = sphi 0, %s118
      %s121 = sphi 0, %s120
      %s135 = sphi 0, %s121
      %s139 = sphi 0, %s139
      %s141 = sphi 0, %s139
      %s142 = sphi 0, %s141
      %s156 = sphi 0, %s142
      %s160 = sphi 0, %s160
      %s162 = sphi 0, %s160
      %s163 = sphi 0, %s162
      %s177 = sphi 0, %s163
      %s181 = sphi 0, %s181
      %s183 = sphi 0, %s181
      %s184 = sphi 0, %s183
      %s198 = sphi 0, %s184
      %s202 = sphi 0, %s202
      %s204 = sphi 0, %s202
      %s205 = sphi 0, %s204
      %s219 = sphi 0, %s205
      %s223 = sphi 0, %s223
      %s225 = sphi 0, %s223
      %s226 = sphi 0, %s225
      %s240 = sphi 0, %s226
      %s244 = sphi 0, %s244
      %s246 = sphi 0, %s244
      %s247 = sphi 0, %s246
      %s261 = sphi 0, %s247
      %s265 = sphi 0, %s265
      %s267 = sphi 0, %s265
      %s268 = sphi 0, %s267
      %s282 = sphi 0, %s268
      %s288 = sphi 0, %s290
      %s291 = sphi 0, %s288
      %s292 = sphi 0, %s291
      %s308 = sphi 0, %s292
    $region4: #{tpu_custom_call.1} parent=1 // loop_header_branch
      %24 = sbr.rel (%p22) target = $region8
    $region5: #{tpu_custom_call.1} parent=1 // loop_body
      %s26 = ssub.s32 %s21, 1
      %s27 = ssub.s32 %s21, 2
      %s28 = sadd.s32 %s21, 1
      %s29 = ssub.s32 %s21, %s28
      %p30 = scmp.eq.s32.totalorder %s29, 0
      %s32 = sadd.s32 %s31, 1
      %s33 = scalar_select %p30, %s31, %s32
      %p36 = pneg %p30
      %p37 = scmp.eq.s32.totalorder %s21, 1
      %p38 = por %p36, %p37
      %p39 = scmp.ne.s32.totalorder %s31, %s34
      %p40 = scmp.eq.s32.totalorder %s21, 0
      %p41 = por %p39, %p40
      %p42 = scmp.ne.s32.totalorder %s31, %s34
      %p43 = scmp.eq.s32.totalorder %s26, 1
      %p44 = por %p42, %p43
      %p45 = scmp.ne.s32.totalorder %s34, %s35
      %p46 = scmp.eq.s32.totalorder %s26, 0
      %p47 = por %p45, %p46
      %p48 = scmp.ne.s32.totalorder %s34, %s35
      %p49 = scmp.eq.s32.totalorder %s27, 1
      %p50 = por %p48, %p49
      %p52 = scmp.ne.s32.totalorder %s35, %s51
      %p53 = scmp.eq.s32.totalorder %s27, 0
      %p54 = por %p52, %p53
      %s56 = sadd.s32 %s55, 1
      %p59 = scmp.eq.s32.totalorder %s21, 1
      %p60 = scmp.ne.s32.totalorder %s55, %s57
      %p61 = scmp.eq.s32.totalorder %s21, 0
      %p62 = por %p60, %p61
      %p63 = scmp.ne.s32.totalorder %s55, %s57
      %p64 = scmp.eq.s32.totalorder %s26, 1
      %p65 = por %p63, %p64
      %p66 = scmp.ne.s32.totalorder %s57, %s58
      %p67 = scmp.eq.s32.totalorder %s26, 0
      %p68 = por %p66, %p67
      %p69 = scmp.ne.s32.totalorder %s57, %s58
      %p70 = scmp.eq.s32.totalorder %s27, 1
      %p71 = por %p69, %p70
      %p73 = scmp.ne.s32.totalorder %s58, %s72
      %p74 = scmp.eq.s32.totalorder %s27, 0
      %p75 = por %p73, %p74
      %s77 = sadd.s32 %s76, 1
      %p80 = scmp.eq.s32.totalorder %s21, 1
      %p81 = scmp.ne.s32.totalorder %s76, %s78
      %p82 = scmp.eq.s32.totalorder %s21, 0
      %p83 = por %p81, %p82
      %p84 = scmp.ne.s32.totalorder %s76, %s78
      %p85 = scmp.eq.s32.totalorder %s26, 1
      %p86 = por %p84, %p85
      %p87 = scmp.ne.s32.totalorder %s78, %s79
      %p88 = scmp.eq.s32.totalorder %s26, 0
      %p89 = por %p87, %p88
      %p90 = scmp.ne.s32.totalorder %s78, %s79
      %p91 = scmp.eq.s32.totalorder %s27, 1
      %p92 = por %p90, %p91
      %p94 = scmp.ne.s32.totalorder %s79, %s93
      %p95 = scmp.eq.s32.totalorder %s27, 0
      %p96 = por %p94, %p95
      %s98 = sadd.s32 %s97, 1
      %p101 = scmp.eq.s32.totalorder %s21, 1
      %p102 = scmp.ne.s32.totalorder %s97, %s99
      %p103 = scmp.eq.s32.totalorder %s21, 0
      %p104 = por %p102, %p103
      %p105 = scmp.ne.s32.totalorder %s97, %s99
      %p106 = scmp.eq.s32.totalorder %s26, 1
      %p107 = por %p105, %p106
      %p108 = scmp.ne.s32.totalorder %s99, %s100
      %p109 = scmp.eq.s32.totalorder %s26, 0
      %p110 = por %p108, %p109
      %p111 = scmp.ne.s32.totalorder %s99, %s100
      %p112 = scmp.eq.s32.totalorder %s27, 1
      %p113 = por %p111, %p112
      %p115 = scmp.ne.s32.totalorder %s100, %s114
      %p116 = scmp.eq.s32.totalorder %s27, 0
      %p117 = por %p115, %p116
      %s119 = sadd.s32 %s118, 1
      %p122 = scmp.eq.s32.totalorder %s21, 1
      %p123 = scmp.ne.s32.totalorder %s118, %s120
      %p124 = scmp.eq.s32.totalorder %s21, 0
      %p125 = por %p123, %p124
      %p126 = scmp.ne.s32.totalorder %s118, %s120
      %p127 = scmp.eq.s32.totalorder %s26, 1
      %p128 = por %p126, %p127
      %p129 = scmp.ne.s32.totalorder %s120, %s121
      %p130 = scmp.eq.s32.totalorder %s26, 0
      %p131 = por %p129, %p130
      %p132 = scmp.ne.s32.totalorder %s120, %s121
      %p133 = scmp.eq.s32.totalorder %s27, 1
      %p134 = por %p132, %p133
      %p136 = scmp.ne.s32.totalorder %s121, %s135
      %p137 = scmp.eq.s32.totalorder %s27, 0
      %p138 = por %p136, %p137
      %s140 = sadd.s32 %s139, 1
      %p143 = scmp.eq.s32.totalorder %s21, 1
      %p144 = scmp.ne.s32.totalorder %s139, %s141
      %p145 = scmp.eq.s32.totalorder %s21, 0
      %p146 = por %p144, %p145
      %p147 = scmp.ne.s32.totalorder %s139, %s141
      %p148 = scmp.eq.s32.totalorder %s26, 1
      %p149 = por %p147, %p148
      %p150 = scmp.ne.s32.totalorder %s141, %s142
      %p151 = scmp.eq.s32.totalorder %s26, 0
      %p152 = por %p150, %p151
      %p153 = scmp.ne.s32.totalorder %s141, %s142
      %p154 = scmp.eq.s32.totalorder %s27, 1
      %p155 = por %p153, %p154
      %p157 = scmp.ne.s32.totalorder %s142, %s156
      %p158 = scmp.eq.s32.totalorder %s27, 0
      %p159 = por %p157, %p158
      %s161 = sadd.s32 %s160, 1
      %p164 = scmp.eq.s32.totalorder %s21, 1
      %p165 = scmp.ne.s32.totalorder %s160, %s162
      %p166 = scmp.eq.s32.totalorder %s21, 0
      %p167 = por %p165, %p166
      %p168 = scmp.ne.s32.totalorder %s160, %s162
      %p169 = scmp.eq.s32.totalorder %s26, 1
      %p170 = por %p168, %p169
      %p171 = scmp.ne.s32.totalorder %s162, %s163
      %p172 = scmp.eq.s32.totalorder %s26, 0
      %p173 = por %p171, %p172
      %p174 = scmp.ne.s32.totalorder %s162, %s163
      %p175 = scmp.eq.s32.totalorder %s27, 1
      %p176 = por %p174, %p175
      %p178 = scmp.ne.s32.totalorder %s163, %s177
      %p179 = scmp.eq.s32.totalorder %s27, 0
      %p180 = por %p178, %p179
      %s182 = sadd.s32 %s181, 1
      %p185 = scmp.eq.s32.totalorder %s21, 1
      %p186 = scmp.ne.s32.totalorder %s181, %s183
      %p187 = scmp.eq.s32.totalorder %s21, 0
      %p188 = por %p186, %p187
      %p189 = scmp.ne.s32.totalorder %s181, %s183
      %p190 = scmp.eq.s32.totalorder %s26, 1
      %p191 = por %p189, %p190
      %p192 = scmp.ne.s32.totalorder %s183, %s184
      %p193 = scmp.eq.s32.totalorder %s26, 0
      %p194 = por %p192, %p193
      %p195 = scmp.ne.s32.totalorder %s183, %s184
      %p196 = scmp.eq.s32.totalorder %s27, 1
      %p197 = por %p195, %p196
      %p199 = scmp.ne.s32.totalorder %s184, %s198
      %p200 = scmp.eq.s32.totalorder %s27, 0
      %p201 = por %p199, %p200
      %s203 = sadd.s32 %s202, 1
      %p206 = scmp.eq.s32.totalorder %s21, 1
      %p207 = scmp.ne.s32.totalorder %s202, %s204
      %p208 = scmp.eq.s32.totalorder %s21, 0
      %p209 = por %p207, %p208
      %p210 = scmp.ne.s32.totalorder %s202, %s204
      %p211 = scmp.eq.s32.totalorder %s26, 1
      %p212 = por %p210, %p211
      %p213 = scmp.ne.s32.totalorder %s204, %s205
      %p214 = scmp.eq.s32.totalorder %s26, 0
      %p215 = por %p213, %p214
      %p216 = scmp.ne.s32.totalorder %s204, %s205
      %p217 = scmp.eq.s32.totalorder %s27, 1
      %p218 = por %p216, %p217
      %p220 = scmp.ne.s32.totalorder %s205, %s219
      %p221 = scmp.eq.s32.totalorder %s27, 0
      %p222 = por %p220, %p221
      %s224 = sadd.s32 %s223, 1
      %p227 = scmp.eq.s32.totalorder %s21, 1
      %p228 = scmp.ne.s32.totalorder %s223, %s225
      %p229 = scmp.eq.s32.totalorder %s21, 0
      %p230 = por %p228, %p229
      %p231 = scmp.ne.s32.totalorder %s223, %s225
      %p232 = scmp.eq.s32.totalorder %s26, 1
      %p233 = por %p231, %p232
      %p234 = scmp.ne.s32.totalorder %s225, %s226
      %p235 = scmp.eq.s32.totalorder %s26, 0
      %p236 = por %p234, %p235
      %p237 = scmp.ne.s32.totalorder %s225, %s226
      %p238 = scmp.eq.s32.totalorder %s27, 1
      %p239 = por %p237, %p238
      %p241 = scmp.ne.s32.totalorder %s226, %s240
      %p242 = scmp.eq.s32.totalorder %s27, 0
      %p243 = por %p241, %p242
      %s245 = sadd.s32 %s244, 1
      %p248 = scmp.eq.s32.totalorder %s21, 1
      %p249 = scmp.ne.s32.totalorder %s244, %s246
      %p250 = scmp.eq.s32.totalorder %s21, 0
      %p251 = por %p249, %p250
      %p252 = scmp.ne.s32.totalorder %s244, %s246
      %p253 = scmp.eq.s32.totalorder %s26, 1
      %p254 = por %p252, %p253
      %p255 = scmp.ne.s32.totalorder %s246, %s247
      %p256 = scmp.eq.s32.totalorder %s26, 0
      %p257 = por %p255, %p256
      %p258 = scmp.ne.s32.totalorder %s246, %s247
      %p259 = scmp.eq.s32.totalorder %s27, 1
      %p260 = por %p258, %p259
      %p262 = scmp.ne.s32.totalorder %s247, %s261
      %p263 = scmp.eq.s32.totalorder %s27, 0
      %p264 = por %p262, %p263
      %s266 = sadd.s32 %s265, 1
      %p269 = scmp.eq.s32.totalorder %s21, 1
      %p270 = scmp.ne.s32.totalorder %s265, %s267
      %p271 = scmp.eq.s32.totalorder %s21, 0
      %p272 = por %p270, %p271
      %p273 = scmp.ne.s32.totalorder %s265, %s267
      %p274 = scmp.eq.s32.totalorder %s26, 1
      %p275 = por %p273, %p274
      %p276 = scmp.ne.s32.totalorder %s267, %s268
      %p277 = scmp.eq.s32.totalorder %s26, 0
      %p278 = por %p276, %p277
      %p279 = scmp.ne.s32.totalorder %s267, %s268
      %p280 = scmp.eq.s32.totalorder %s27, 1
      %p281 = por %p279, %p280
      %p283 = scmp.ne.s32.totalorder %s268, %s282
      %p284 = scmp.eq.s32.totalorder %s27, 0
      %p285 = por %p283, %p284
      %s286 = ssub.s32 %s21, %s28
      %p287 = scmp.eq.s32.totalorder %s286, 0
      %s289 = sadd.s32 %s288, 1
      %s290 = scalar_select %p287, %s288, %s289
      %p293 = pneg %p287
      %p294 = scmp.eq.s32.totalorder %s21, 1
      %p295 = por %p293, %p294
      %p296 = scmp.ne.s32.totalorder %s288, %s291
      %p297 = scmp.eq.s32.totalorder %s21, 0
      %p298 = por %p296, %p297
      %p299 = scmp.ne.s32.totalorder %s288, %s291
      %p300 = scmp.eq.s32.totalorder %s26, 1
      %p301 = por %p299, %p300
      %p302 = scmp.ne.s32.totalorder %s291, %s292
      %p303 = scmp.eq.s32.totalorder %s26, 0
      %p304 = por %p302, %p303
      %p305 = scmp.ne.s32.totalorder %s291, %s292
      %p306 = scmp.eq.s32.totalorder %s27, 1
      %p307 = por %p305, %p306
      %p309 = scmp.ne.s32.totalorder %s292, %s308
      %p310 = scmp.eq.s32.totalorder %s27, 0
      %p311 = por %p309, %p310
      %p312 = scmp.le.s32.totalorder 1, %s21
      %p313 = scmp.lt.s32.totalorder %s21, 3
      %p314 = pnand %p312, %p313
      %p315 = pneg %p314
      // Predicated region
      $region9: #{tpu_custom_call.1} parent=5 // pred_check
        _
      $region10: #{tpu_custom_call.1} parent=5 // pred_check_branch
        %317 = sbr.rel (%p314) target = $region12
      $region11: #{tpu_custom_call.1} parent=5 // pred_region
        %s318 = ssub.s32 %s21, 1
        // Predicated region
        $region13: #{tpu_custom_call.1} parent=11 // pred_check
          %p319 = pneg %p68
        $region14: #{tpu_custom_call.1} parent=11 // pred_check_branch
          %321 = sbr.rel (%p319) target = $region16
        $region15: #{tpu_custom_call.1} parent=11 // pred_region
          _
        $region16: #{tpu_custom_call.1} parent=11 // pred_fallthru
          _
        // Predicated region
        $region17: #{tpu_custom_call.1} parent=11 // pred_check
          %p322 = pneg %p89
        $region18: #{tpu_custom_call.1} parent=11 // pred_check_branch
          %324 = sbr.rel (%p322) target = $region20
        $region19: #{tpu_custom_call.1} parent=11 // pred_region
          _
        $region20: #{tpu_custom_call.1} parent=11 // pred_fallthru
          _
        // Predicated region
        $region21: #{tpu_custom_call.1} parent=11 // pred_check
          %p325 = pneg %p110
        $region22: #{tpu_custom_call.1} parent=11 // pred_check_branch
          %327 = sbr.rel (%p325) target = $region24
        $region23: #{tpu_custom_call.1} parent=11 // pred_region
          _
        $region24: #{tpu_custom_call.1} parent=11 // pred_fallthru
          _
        // Predicated region
        $region25: #{tpu_custom_call.1} parent=11 // pred_check
          %p328 = pneg %p131
        $region26: #{tpu_custom_call.1} parent=11 // pred_check_branch
          %330 = sbr.rel (%p328) target = $region28
        $region27: #{tpu_custom_call.1} parent=11 // pred_region
          _
        $region28: #{tpu_custom_call.1} parent=11 // pred_fallthru
          _
        // Predicated region
        $region29: #{tpu_custom_call.1} parent=11 // pred_check
          %p331 = pneg %p152
        $region30: #{tpu_custom_call.1} parent=11 // pred_check_branch
          %333 = sbr.rel (%p331) target = $region32
        $region31: #{tpu_custom_call.1} parent=11 // pred_region
          _
        $region32: #{tpu_custom_call.1} parent=11 // pred_fallthru
          _
        // Predicated region
        $region33: #{tpu_custom_call.1} parent=11 // pred_check
          %p334 = pneg %p173
        $region34: #{tpu_custom_call.1} parent=11 // pred_check_branch
          %336 = sbr.rel (%p334) target = $region36
        $region35: #{tpu_custom_call.1} parent=11 // pred_region
          _
        $region36: #{tpu_custom_call.1} parent=11 // pred_fallthru
          _
        // Predicated region
        $region37: #{tpu_custom_call.1} parent=11 // pred_check
          %p337 = pneg %p194
        $region38: #{tpu_custom_call.1} parent=11 // pred_check_branch
          %339 = sbr.rel (%p337) target = $region40
        $region39: #{tpu_custom_call.1} parent=11 // pred_region
          _
        $region40: #{tpu_custom_call.1} parent=11 // pred_fallthru
          _
        // Predicated region
        $region41: #{tpu_custom_call.1} parent=11 // pred_check
          %p340 = pneg %p215
        $region42: #{tpu_custom_call.1} parent=11 // pred_check_branch
          %342 = sbr.rel (%p340) target = $region44
        $region43: #{tpu_custom_call.1} parent=11 // pred_region
          _
        $region44: #{tpu_custom_call.1} parent=11 // pred_fallthru
          _
        // Predicated region
        $region45: #{tpu_custom_call.1} parent=11 // pred_check
          %p343 = pneg %p236
        $region46: #{tpu_custom_call.1} parent=11 // pred_check_branch
          %345 = sbr.rel (%p343) target = $region48
        $region47: #{tpu_custom_call.1} parent=11 // pred_region
          _
        $region48: #{tpu_custom_call.1} parent=11 // pred_fallthru
          _
        // Predicated region
        $region49: #{tpu_custom_call.1} parent=11 // pred_check
          %p346 = pneg %p257
        $region50: #{tpu_custom_call.1} parent=11 // pred_check_branch
          %348 = sbr.rel (%p346) target = $region52
        $region51: #{tpu_custom_call.1} parent=11 // pred_region
          _
        $region52: #{tpu_custom_call.1} parent=11 // pred_fallthru
          _
        // Predicated region
        $region53: #{tpu_custom_call.1} parent=11 // pred_check
          %p349 = pneg %p278
        $region54: #{tpu_custom_call.1} parent=11 // pred_check_branch
          %351 = sbr.rel (%p349) target = $region56
        $region55: #{tpu_custom_call.1} parent=11 // pred_region
          _
        $region56: #{tpu_custom_call.1} parent=11 // pred_fallthru
          _
      $region12: #{tpu_custom_call.1} parent=5 // pred_fallthru
        _
      %p352 = scmp.lt.s32.totalorder %s21, 2
      // Predicated region
      $region57: #{tpu_custom_call.1} parent=5 // pred_check
        %p353 = pneg %p352
      $region58: #{tpu_custom_call.1} parent=5 // pred_check_branch
        %355 = sbr.rel (%p353) target = $region60
      $region59: #{tpu_custom_call.1} parent=5 // pred_region
        // Predicated region
        $region61: #{tpu_custom_call.1} parent=59 // pred_check
          %p356 = pneg %p41
        $region62: #{tpu_custom_call.1} parent=59 // pred_check_branch
          %358 = sbr.rel (%p356) target = $region64
        $region63: #{tpu_custom_call.1} parent=59 // pred_region
          %p359 = scmp.lt.s32.totalorder %s21, 1
          %s360 = scalar_select %p359, %s21, 1
          %s361 = smul.addr %s360, 4
          %s362 = scalar_lea.vmem %s0, %s361
        $region64: #{tpu_custom_call.1} parent=59 // pred_fallthru
          _
      $region60: #{tpu_custom_call.1} parent=5 // pred_fallthru
        _
      %p363 = scmp.le.s32.totalorder 1, %s21
      %p364 = scmp.lt.s32.totalorder %s21, 3
      %p365 = pnand %p363, %p364
      %p366 = pneg %p365
      // Predicated region
      $region65: #{tpu_custom_call.1} parent=5 // pred_check
        _
      $region66: #{tpu_custom_call.1} parent=5 // pred_check_branch
        %368 = sbr.rel (%p365) target = $region68
      $region67: #{tpu_custom_call.1} parent=5 // pred_region
        %s369 = ssub.s32 %s21, 1
        %p370 = scmp.lt.s32.totalorder %s26, 1
        %s371 = scalar_select %p370, %s26, 1
        %s372 = smul.addr %s371, 4
        %s373 = scalar_lea.vmem %s0, %s372
        %p374 = pneg %p47
        %p375 = pneg %p44
        %p376 = pneg %p68
        %p377 = pneg %p65
        %p378 = pneg %p89
        %p379 = pneg %p86
        %p380 = pneg %p110
        %p381 = pneg %p107
        %p382 = pneg %p131
        %p383 = pneg %p128
        %p384 = pneg %p152
        %p385 = pneg %p149
        %p386 = pneg %p173
        %p387 = pneg %p170
        %p388 = pneg %p194
        %p389 = pneg %p191
        %p390 = pneg %p215
        %p391 = pneg %p212
        %p392 = pneg %p236
        %p393 = pneg %p233
        %p394 = pneg %p257
        %p395 = pneg %p254
        %p396 = pneg %p278
        %p397 = pneg %p275
        %p398 = pneg %p304
        %p399 = pneg %p301
        %s400 = sand.u32 %s291, 1
        %s401 = scalar_lea.sflag [#allocation3], %s400
        %s402 = sand.u32 %s291, 1
        %s403 = scalar_lea.vmem [#allocation2], %s402
        %p404 = scmp.lt.s32.totalorder %s26, 1
        %s405 = scalar_select %p404, %s26, 1
        %s406 = smul.addr %s405, 4
        %s407 = scalar_lea.vmem %s0, %s406
        %v409 = vld [vmem:[%s407] sm:$0xf]
        %v410 = vld [vmem:[%s1] sm:$0xf]
        %v411 = vld [vmem:[%s1 + $0x4] sm:$0x3]
        %v412 = vld [vmem:[%s2] sm:$0xff]
        %v415 = vunpack.c.l.b16 %v410
        %v416 = vunpack.c.l.b16 %v411
        %v417 = vpack.c.b16 %v416, %v415
        %vm418 = vcmask 97280
        %v420 = vsel %vm418, %v409, 0
        %vm422 = vcmask 1045504
        %v424 = vsel %vm422, %v417, 0
        %426 = vmatprep.subr.bf16.mxu0 0
        %427 = vmatpush1.bf16.msra.mxu0 0
        %428 = vmatprep.subr.bf16.mxu0 0
        %429 = vmatpush1.bf16.msra.mxu0 0
        %430 = vmatprep.subr.bf16.mxu0 0
        %431 = vmatpush1.bf16.msra.mxu0 0
        %432 = vmatprep.subr.bf16.mxu0 0
        %433 = vmatpush1.bf16.msra.mxu0 0
        %434 = vmatprep.subr.bf16.mxu0 0
        %435 = vmatpush1.bf16.msra.mxu0 0
        %436 = vmatprep.subr.bf16.mxu0 0
        %437 = vmatpush1.bf16.msra.mxu0 0
        %438 = vmatprep.subr.bf16.mxu0 0
        %439 = vmatpush1.bf16.msra.mxu0 0
        %440 = vmatprep.subr.bf16.mxu0 0
        %441 = vmatpush1.bf16.msra.mxu0 %v424
        %442 = vmatprep.subr.bf16.mxu0 0
        %443 = vmatpush2.bf16.msra.mxu0 0
        %444 = vmatprep.subr.bf16.mxu0 0
        %445 = vmatpush2.bf16.msra.mxu0 0
        %446 = vmatprep.subr.bf16.mxu0 0
        %447 = vmatpush2.bf16.msra.mxu0 0
        %448 = vmatprep.subr.bf16.mxu0 0
        %449 = vmatpush2.bf16.msra.mxu0 0
        %450 = vmatprep.subr.bf16.mxu0 0
        %451 = vmatpush2.bf16.msra.mxu0 0
        %452 = vmatprep.subr.bf16.mxu0 0
        %453 = vmatpush2.bf16.msra.mxu0 0
        %454 = vmatprep.subr.bf16.mxu0 0
        %455 = vmatpush2.bf16.msra.mxu0 0
        %456 = vmatprep.subr.bf16.mxu0 0
        %457 = vmatpush2.bf16.msra.mxu0 0
        %458 = vmatprep.mubr.bf16.mxu0 0
        %459 = vmatmul.mubr.bf16.gmra.mxu0 %v420
        %v460 = vpop.f32.mrf.mxu0
        %v461 = vadd.f32 %v412, %v460
        %v462 = vpop.f32.mrf.mxu0
        %v463 = vpop.f32.mrf.mxu0
        %v464 = vpop.f32.mrf.mxu0
        %465 = vdwg.mxu0
        %v466 = vld [vmem:[%s9] sm:$0x3f]
        %v467 = vpack.c.bf16 %v461, %v461
        %v468 = vld [vmem:[%s3] sm:$0xf]
        %v469 = vld [vmem:[%s3 + $0x4] sm:$0xf]
        %v470 = vld [vmem:[%s3 + $0x8] sm:$0xf]
        %v471 = vld [vmem:[%s3 + $0xc] sm:$0xf]
        %v472 = vld [vmem:[%s4] sm:$0x1]
        %v474 = vlaneseq
        %v475 = vshrl.u32 %v474, 7
        %v476 = vsub.s32 0, %v475
        %v477 = vrot.slane %v472, %v476
        %v483 = vunpack.c.l.b16 %v468
        %v484 = vunpack.c.l.b16 %v469
        %v485 = vunpack.c.l.b16 %v470
        %v486 = vunpack.c.l.b16 %v471
        %v487 = vpack.c.b16 %v484, %v483
        %v488 = vpack.c.b16 %v486, %v485
        %vm491 = vcmask 261120
        %v493 = vsel %vm491, %v467, 0
        %495 = vmatprep.subr.bf16.mxu0 0
        %496 = vmatpush1.bf16.msra.mxu0 0
        %497 = vmatprep.subr.bf16.mxu0 0
        %498 = vmatpush1.bf16.msra.mxu0 0
        %499 = vmatprep.subr.bf16.mxu0 0
        %500 = vmatpush1.bf16.msra.mxu0 0
        %501 = vmatprep.subr.bf16.mxu0 0
        %502 = vmatpush1.bf16.msra.mxu0 0
        %503 = vmatprep.subr.bf16.mxu0 0
        %504 = vmatpush1.bf16.msra.mxu0 0
        %505 = vmatprep.subr.bf16.mxu0 0
        %506 = vmatpush1.bf16.msra.mxu0 0
        %507 = vmatprep.subr.bf16.mxu0 0
        %508 = vmatpush1.bf16.msra.mxu0 %v488
        %509 = vmatprep.subr.bf16.mxu0 0
        %510 = vmatpush1.bf16.msra.mxu0 %v487
        %511 = vmatprep.subr.bf16.mxu0 0
        %512 = vmatpush2.bf16.msra.mxu0 0
        %513 = vmatprep.subr.bf16.mxu0 0
        %514 = vmatpush2.bf16.msra.mxu0 0
        %515 = vmatprep.subr.bf16.mxu0 0
        %516 = vmatpush2.bf16.msra.mxu0 0
        %517 = vmatprep.subr.bf16.mxu0 0
        %518 = vmatpush2.bf16.msra.mxu0 0
        %519 = vmatprep.subr.bf16.mxu0 0
        %520 = vmatpush2.bf16.msra.mxu0 0
        %521 = vmatprep.subr.bf16.mxu0 0
        %522 = vmatpush2.bf16.msra.mxu0 0
        %523 = vmatprep.subr.bf16.mxu0 0
        %524 = vmatpush2.bf16.msra.mxu0 0
        %525 = vmatprep.subr.bf16.mxu0 0
        %526 = vmatpush2.bf16.msra.mxu0 0
        %527 = vmatprep.mubr.bf16.mxu0 0
        %528 = vmatmul.mubr.bf16.gmra.mxu0 %v493
        %v529 = vpop.f32.mrf.mxu0
        %v530 = vadd.f32 %v477, %v529
        %v531 = vpop.f32.mrf.mxu0
        %v532 = vpop.f32.mrf.mxu0
        %v533 = vpop.f32.mrf.mxu0
        %534 = vdwg.mxu0
        %536 = vrot.lane.b32.xlu0 %v530, 96
        %v537 = vpop.permute.xlu0 %536
        %vm538 = vcmask 64512
        %v539 = vsel %vm538, %v530, 0
        %v541 = vsel %vm538, %v537, 0
        %543 = vmatprep.subr.mxu0 0.0
        %544 = vmatpush1.xpose.msra.mxu0 0.0
        %545 = vmatprep.subr.mxu0 0.0
        %546 = vmatpush1.xpose.msra.mxu0 0.0
        %547 = vmatprep.subr.mxu0 0.0
        %548 = vmatpush1.xpose.msra.mxu0 0.0
        %549 = vmatprep.subr.mxu0 0.0
        %550 = vmatpush1.xpose.msra.mxu0 0.0
        %551 = vmatprep.subr.mxu0 0.0
        %552 = vmatpush1.xpose.msra.mxu0 0.0
        %553 = vmatprep.subr.mxu0 0.0
        %554 = vmatpush1.xpose.msra.mxu0 0.0
        %555 = vmatprep.subr.mxu0 0.0
        %556 = vmatpush1.xpose.msra.mxu0 0.0
        %557 = vmatprep.subr.mxu0 0.0
        %558 = vmatpush1.xpose.msra.mxu0 0.0
        %559 = vmatprep.subr.mxu0 0.0
        %560 = vmatpush1.xpose.msra.mxu0 0.0
        %561 = vmatprep.subr.mxu0 0.0
        %562 = vmatpush1.xpose.msra.mxu0 0.0
        %563 = vmatprep.subr.mxu0 0.0
        %564 = vmatpush1.xpose.msra.mxu0 0.0
        %565 = vmatprep.subr.mxu0 0.0
        %566 = vmatpush1.xpose.msra.mxu0 0.0
        %567 = vmatprep.subr.mxu0 0.0
        %568 = vmatpush1.xpose.msra.mxu0 0.0
        %569 = vmatprep.subr.mxu0 0.0
        %570 = vmatpush1.xpose.msra.mxu0 0.0
        %571 = vmatprep.subr.mxu0 0.0
        %572 = vmatpush1.xpose.msra.mxu0 0.0
        %573 = vmatprep.subr.mxu0 0.0
        %574 = vmatpush1.xpose.msra.mxu0 %v541
        %575 = vmatprep.subr.mxu0 0.0
        %576 = vmatpush2.xpose.msra.mxu0 0.0
        %577 = vmatprep.subr.mxu0 0.0
        %578 = vmatpush2.xpose.msra.mxu0 0.0
        %579 = vmatprep.subr.mxu0 0.0
        %580 = vmatpush2.xpose.msra.mxu0 0.0
        %581 = vmatprep.subr.mxu0 0.0
        %582 = vmatpush2.xpose.msra.mxu0 0.0
        %583 = vmatprep.subr.mxu0 0.0
        %584 = vmatpush2.xpose.msra.mxu0 0.0
        %585 = vmatprep.subr.mxu0 0.0
        %586 = vmatpush2.xpose.msra.mxu0 0.0
        %587 = vmatprep.subr.mxu0 0.0
        %588 = vmatpush2.xpose.msra.mxu0 0.0
        %589 = vmatprep.subr.mxu0 0.0
        %590 = vmatpush2.xpose.msra.mxu0 0.0
        %591 = vmatprep.subr.mxu0 0.0
        %592 = vmatpush2.xpose.msra.mxu0 0.0
        %593 = vmatprep.subr.mxu0 0.0
        %594 = vmatpush2.xpose.msra.mxu0 0.0
        %595 = vmatprep.subr.mxu0 0.0
        %596 = vmatpush2.xpose.msra.mxu0 0.0
        %597 = vmatprep.subr.mxu0 0.0
        %598 = vmatpush2.xpose.msra.mxu0 0.0
        %599 = vmatprep.subr.mxu0 0.0
        %600 = vmatpush2.xpose.msra.mxu0 0.0
        %601 = vmatprep.subr.mxu0 0.0
        %602 = vmatpush2.xpose.msra.mxu0 0.0
        %603 = vmatprep.subr.mxu0 0.0
        %604 = vmatpush2.xpose.msra.mxu0 0.0
        %605 = vmatprep.subr.mxu0 0.0
        %606 = vmatpush2.xpose.msra.mxu0 0.0
        %607 = vmatprep.mubr.f32.mxu0 0.0
        %608 = vmatmul.mubr.f32.gmra.mxu0 %v539
        %v609 = vpop.f32.mrf.mxu0
        %v610 = vadd.f32 0.0, %v609
        %v611 = vpop.f32.mrf.mxu0
        %612 = vdwg.mxu0
        %v613 = vsel %vm538, %v610, -inf
        %614 = vmax.xlane.f32.xlu0 %v613
        %v615 = vpop.xlane.xlu0 %614
        %v616 = vsub.f32 %v610, %v615
        %v617 = vmul.f32 %v616, 1.442695
        %v618 = vpow.pop %v617
        %v619 = vsel %vm538, %v618, 0.0
        %620 = vadd.xlane.f32.xlu0 %v619
        %v621 = vpop.xlane.xlu0 %620
        %v622 = vrcp.pop %v621
        %v623 = vmul.f32 %v618, %v622
        %624 = vrot.lane.b32.xlu0 %v530, 64
        %v625 = vpop.permute.xlu0 %624
        %v628 = vsel %vm538, %v623, 0
        %630 = vmatprep.subr.mxu0 0.0
        %631 = vmatpush1.msra.mxu0 0.0
        %632 = vmatprep.subr.mxu0 0.0
        %633 = vmatpush1.msra.mxu0 0.0
        %634 = vmatprep.subr.mxu0 0.0
        %635 = vmatpush1.msra.mxu0 0.0
        %636 = vmatprep.subr.mxu0 0.0
        %637 = vmatpush1.msra.mxu0 0.0
        %638 = vmatprep.subr.mxu0 0.0
        %639 = vmatpush1.msra.mxu0 0.0
        %640 = vmatprep.subr.mxu0 0.0
        %641 = vmatpush1.msra.mxu0 0.0
        %642 = vmatprep.subr.mxu0 0.0
        %643 = vmatpush1.msra.mxu0 0.0
        %644 = vmatprep.subr.mxu0 0.0
        %645 = vmatpush1.msra.mxu0 0.0
        %646 = vmatprep.subr.mxu0 0.0
        %647 = vmatpush1.msra.mxu0 0.0
        %648 = vmatprep.subr.mxu0 0.0
        %649 = vmatpush1.msra.mxu0 0.0
        %650 = vmatprep.subr.mxu0 0.0
        %651 = vmatpush1.msra.mxu0 0.0
        %652 = vmatprep.subr.mxu0 0.0
        %653 = vmatpush1.msra.mxu0 0.0
        %654 = vmatprep.subr.mxu0 0.0
        %655 = vmatpush1.msra.mxu0 0.0
        %656 = vmatprep.subr.mxu0 0.0
        %657 = vmatpush1.msra.mxu0 0.0
        %658 = vmatprep.subr.mxu0 0.0
        %659 = vmatpush1.msra.mxu0 0.0
        %660 = vmatprep.subr.mxu0 0.0
        %661 = vmatpush1.msra.mxu0 %v625
        %662 = vmatprep.subr.mxu0 0.0
        %663 = vmatpush2.msra.mxu0 0.0
        %664 = vmatprep.subr.mxu0 0.0
        %665 = vmatpush2.msra.mxu0 0.0
        %666 = vmatprep.subr.mxu0 0.0
        %667 = vmatpush2.msra.mxu0 0.0
        %668 = vmatprep.subr.mxu0 0.0
        %669 = vmatpush2.msra.mxu0 0.0
        %670 = vmatprep.subr.mxu0 0.0
        %671 = vmatpush2.msra.mxu0 0.0
        %672 = vmatprep.subr.mxu0 0.0
        %673 = vmatpush2.msra.mxu0 0.0
        %674 = vmatprep.subr.mxu0 0.0
        %675 = vmatpush2.msra.mxu0 0.0
        %676 = vmatprep.subr.mxu0 0.0
        %677 = vmatpush2.msra.mxu0 0.0
        %678 = vmatprep.subr.mxu0 0.0
        %679 = vmatpush2.msra.mxu0 0.0
        %680 = vmatprep.subr.mxu0 0.0
        %681 = vmatpush2.msra.mxu0 0.0
        %682 = vmatprep.subr.mxu0 0.0
        %683 = vmatpush2.msra.mxu0 0.0
        %684 = vmatprep.subr.mxu0 0.0
        %685 = vmatpush2.msra.mxu0 0.0
        %686 = vmatprep.subr.mxu0 0.0
        %687 = vmatpush2.msra.mxu0 0.0
        %688 = vmatprep.subr.mxu0 0.0
        %689 = vmatpush2.msra.mxu0 0.0
        %690 = vmatprep.subr.mxu0 0.0
        %691 = vmatpush2.msra.mxu0 0.0
        %692 = vmatprep.subr.mxu0 0.0
        %693 = vmatpush2.msra.mxu0 0.0
        %694 = vmatprep.mubr.f32.mxu0 0.0
        %695 = vmatmul.mubr.f32.gmra.mxu0 %v628
        %v696 = vpop.f32.mrf.mxu0
        %v697 = vadd.f32 0.0, %v696
        %v698 = vpop.f32.mrf.mxu0
        %699 = vdwg.mxu0
        %700 = vrot.lane.b32.xlu0 %v530, 120
        %v701 = vpop.permute.xlu0 %700
        %702 = vrot.lane.b32.xlu0 %v530, 88
        %v703 = vpop.permute.xlu0 %702
        %v704 = vsel %vm538, %v701, 0
        %v706 = vsel %vm538, %v703, 0
        %708 = vmatprep.subr.mxu0 0.0
        %709 = vmatpush1.xpose.msra.mxu0 0.0
        %710 = vmatprep.subr.mxu0 0.0
        %711 = vmatpush1.xpose.msra.mxu0 0.0
        %712 = vmatprep.subr.mxu0 0.0
        %713 = vmatpush1.xpose.msra.mxu0 0.0
        %714 = vmatprep.subr.mxu0 0.0
        %715 = vmatpush1.xpose.msra.mxu0 0.0
        %716 = vmatprep.subr.mxu0 0.0
        %717 = vmatpush1.xpose.msra.mxu0 0.0
        %718 = vmatprep.subr.mxu0 0.0
        %719 = vmatpush1.xpose.msra.mxu0 0.0
        %720 = vmatprep.subr.mxu0 0.0
        %721 = vmatpush1.xpose.msra.mxu0 0.0
        %722 = vmatprep.subr.mxu0 0.0
        %723 = vmatpush1.xpose.msra.mxu0 0.0
        %724 = vmatprep.subr.mxu0 0.0
        %725 = vmatpush1.xpose.msra.mxu0 0.0
        %726 = vmatprep.subr.mxu0 0.0
        %727 = vmatpush1.xpose.msra.mxu0 0.0
        %728 = vmatprep.subr.mxu0 0.0
        %729 = vmatpush1.xpose.msra.mxu0 0.0
        %730 = vmatprep.subr.mxu0 0.0
        %731 = vmatpush1.xpose.msra.mxu0 0.0
        %732 = vmatprep.subr.mxu0 0.0
        %733 = vmatpush1.xpose.msra.mxu0 0.0
        %734 = vmatprep.subr.mxu0 0.0
        %735 = vmatpush1.xpose.msra.mxu0 0.0
        %736 = vmatprep.subr.mxu0 0.0
        %737 = vmatpush1.xpose.msra.mxu0 0.0
        %738 = vmatprep.subr.mxu0 0.0
        %739 = vmatpush1.xpose.msra.mxu0 %v706
        %740 = vmatprep.subr.mxu0 0.0
        %741 = vmatpush2.xpose.msra.mxu0 0.0
        %742 = vmatprep.subr.mxu0 0.0
        %743 = vmatpush2.xpose.msra.mxu0 0.0
        %744 = vmatprep.subr.mxu0 0.0
        %745 = vmatpush2.xpose.msra.mxu0 0.0
        %746 = vmatprep.subr.mxu0 0.0
        %747 = vmatpush2.xpose.msra.mxu0 0.0
        %748 = vmatprep.subr.mxu0 0.0
        %749 = vmatpush2.xpose.msra.mxu0 0.0
        %750 = vmatprep.subr.mxu0 0.0
        %751 = vmatpush2.xpose.msra.mxu0 0.0
        %752 = vmatprep.subr.mxu0 0.0
        %753 = vmatpush2.xpose.msra.mxu0 0.0
        %754 = vmatprep.subr.mxu0 0.0
        %755 = vmatpush2.xpose.msra.mxu0 0.0
        %756 = vmatprep.subr.mxu0 0.0
        %757 = vmatpush2.xpose.msra.mxu0 0.0
        %758 = vmatprep.subr.mxu0 0.0
        %759 = vmatpush2.xpose.msra.mxu0 0.0
        %760 = vmatprep.subr.mxu0 0.0
        %761 = vmatpush2.xpose.msra.mxu0 0.0
        %762 = vmatprep.subr.mxu0 0.0
        %763 = vmatpush2.xpose.msra.mxu0 0.0
        %764 = vmatprep.subr.mxu0 0.0
        %765 = vmatpush2.xpose.msra.mxu0 0.0
        %766 = vmatprep.subr.mxu0 0.0
        %767 = vmatpush2.xpose.msra.mxu0 0.0
        %768 = vmatprep.subr.mxu0 0.0
        %769 = vmatpush2.xpose.msra.mxu0 0.0
        %770 = vmatprep.subr.mxu0 0.0
        %771 = vmatpush2.xpose.msra.mxu0 0.0
        %772 = vmatprep.mubr.f32.mxu0 0.0
        %773 = vmatmul.mubr.f32.gmra.mxu0 %v704
        %v774 = vpop.f32.mrf.mxu0
        %v775 = vadd.f32 0.0, %v774
        %v776 = vpop.f32.mrf.mxu0
        %777 = vdwg.mxu0
        %v778 = vsel %vm538, %v775, -inf
        %779 = vmax.xlane.f32.xlu0 %v778
        %v780 = vpop.xlane.xlu0 %779
        %v781 = vsub.f32 %v775, %v780
        %v782 = vmul.f32 %v781, 1.442695
        %v783 = vpow.pop %v782
        %v784 = vsel %vm538, %v783, 0.0
        %785 = vadd.xlane.f32.xlu0 %v784
        %v786 = vpop.xlane.xlu0 %785
        %v787 = vrcp.pop %v786
        %v788 = vmul.f32 %v783, %v787
        %789 = vrot.lane.b32.xlu0 %v530, 56
        %v790 = vpop.permute.xlu0 %789
        %v793 = vsel %vm538, %v788, 0
        %795 = vmatprep.subr.mxu0 0.0
        %796 = vmatpush1.msra.mxu0 0.0
        %797 = vmatprep.subr.mxu0 0.0
        %798 = vmatpush1.msra.mxu0 0.0
        %799 = vmatprep.subr.mxu0 0.0
        %800 = vmatpush1.msra.mxu0 0.0
        %801 = vmatprep.subr.mxu0 0.0
        %802 = vmatpush1.msra.mxu0 0.0
        %803 = vmatprep.subr.mxu0 0.0
        %804 = vmatpush1.msra.mxu0 0.0
        %805 = vmatprep.subr.mxu0 0.0
        %806 = vmatpush1.msra.mxu0 0.0
        %807 = vmatprep.subr.mxu0 0.0
        %808 = vmatpush1.msra.mxu0 0.0
        %809 = vmatprep.subr.mxu0 0.0
        %810 = vmatpush1.msra.mxu0 0.0
        %811 = vmatprep.subr.mxu0 0.0
        %812 = vmatpush1.msra.mxu0 0.0
        %813 = vmatprep.subr.mxu0 0.0
        %814 = vmatpush1.msra.mxu0 0.0
        %815 = vmatprep.subr.mxu0 0.0
        %816 = vmatpush1.msra.mxu0 0.0
        %817 = vmatprep.subr.mxu0 0.0
        %818 = vmatpush1.msra.mxu0 0.0
        %819 = vmatprep.subr.mxu0 0.0
        %820 = vmatpush1.msra.mxu0 0.0
        %821 = vmatprep.subr.mxu0 0.0
        %822 = vmatpush1.msra.mxu0 0.0
        %823 = vmatprep.subr.mxu0 0.0
        %824 = vmatpush1.msra.mxu0 0.0
        %825 = vmatprep.subr.mxu0 0.0
        %826 = vmatpush1.msra.mxu0 %v790
        %827 = vmatprep.subr.mxu0 0.0
        %828 = vmatpush2.msra.mxu0 0.0
        %829 = vmatprep.subr.mxu0 0.0
        %830 = vmatpush2.msra.mxu0 0.0
        %831 = vmatprep.subr.mxu0 0.0
        %832 = vmatpush2.msra.mxu0 0.0
        %833 = vmatprep.subr.mxu0 0.0
        %834 = vmatpush2.msra.mxu0 0.0
        %835 = vmatprep.subr.mxu0 0.0
        %836 = vmatpush2.msra.mxu0 0.0
        %837 = vmatprep.subr.mxu0 0.0
        %838 = vmatpush2.msra.mxu0 0.0
        %839 = vmatprep.subr.mxu0 0.0
        %840 = vmatpush2.msra.mxu0 0.0
        %841 = vmatprep.subr.mxu0 0.0
        %842 = vmatpush2.msra.mxu0 0.0
        %843 = vmatprep.subr.mxu0 0.0
        %844 = vmatpush2.msra.mxu0 0.0
        %845 = vmatprep.subr.mxu0 0.0
        %846 = vmatpush2.msra.mxu0 0.0
        %847 = vmatprep.subr.mxu0 0.0
        %848 = vmatpush2.msra.mxu0 0.0
        %849 = vmatprep.subr.mxu0 0.0
        %850 = vmatpush2.msra.mxu0 0.0
        %851 = vmatprep.subr.mxu0 0.0
        %852 = vmatpush2.msra.mxu0 0.0
        %853 = vmatprep.subr.mxu0 0.0
        %854 = vmatpush2.msra.mxu0 0.0
        %855 = vmatprep.subr.mxu0 0.0
        %856 = vmatpush2.msra.mxu0 0.0
        %857 = vmatprep.subr.mxu0 0.0
        %858 = vmatpush2.msra.mxu0 0.0
        %859 = vmatprep.mubr.f32.mxu0 0.0
        %860 = vmatmul.mubr.f32.gmra.mxu0 %v793
        %v861 = vpop.f32.mrf.mxu0
        %v862 = vadd.f32 0.0, %v861
        %v863 = vpop.f32.mrf.mxu0
        %864 = vdwg.mxu0
        %865 = vrot.lane.b32.xlu0 %v530, 112
        %v866 = vpop.permute.xlu0 %865
        %867 = vrot.lane.b32.xlu0 %v530, 80
        %v868 = vpop.permute.xlu0 %867
        %v869 = vsel %vm538, %v866, 0
        %v871 = vsel %vm538, %v868, 0
        %873 = vmatprep.subr.mxu0 0.0
        %874 = vmatpush1.xpose.msra.mxu0 0.0
        %875 = vmatprep.subr.mxu0 0.0
        %876 = vmatpush1.xpose.msra.mxu0 0.0
        %877 = vmatprep.subr.mxu0 0.0
        %878 = vmatpush1.xpose.msra.mxu0 0.0
        %879 = vmatprep.subr.mxu0 0.0
        %880 = vmatpush1.xpose.msra.mxu0 0.0
        %881 = vmatprep.subr.mxu0 0.0
        %882 = vmatpush1.xpose.msra.mxu0 0.0
        %883 = vmatprep.subr.mxu0 0.0
        %884 = vmatpush1.xpose.msra.mxu0 0.0
        %885 = vmatprep.subr.mxu0 0.0
        %886 = vmatpush1.xpose.msra.mxu0 0.0
        %887 = vmatprep.subr.mxu0 0.0
        %888 = vmatpush1.xpose.msra.mxu0 0.0
        %889 = vmatprep.subr.mxu0 0.0
        %890 = vmatpush1.xpose.msra.mxu0 0.0
        %891 = vmatprep.subr.mxu0 0.0
        %892 = vmatpush1.xpose.msra.mxu0 0.0
        %893 = vmatprep.subr.mxu0 0.0
        %894 = vmatpush1.xpose.msra.mxu0 0.0
        %895 = vmatprep.subr.mxu0 0.0
        %896 = vmatpush1.xpose.msra.mxu0 0.0
        %897 = vmatprep.subr.mxu0 0.0
        %898 = vmatpush1.xpose.msra.mxu0 0.0
        %899 = vmatprep.subr.mxu0 0.0
        %900 = vmatpush1.xpose.msra.mxu0 0.0
        %901 = vmatprep.subr.mxu0 0.0
        %902 = vmatpush1.xpose.msra.mxu0 0.0
        %903 = vmatprep.subr.mxu0 0.0
        %904 = vmatpush1.xpose.msra.mxu0 %v871
        %905 = vmatprep.subr.mxu0 0.0
        %906 = vmatpush2.xpose.msra.mxu0 0.0
        %907 = vmatprep.subr.mxu0 0.0
        %908 = vmatpush2.xpose.msra.mxu0 0.0
        %909 = vmatprep.subr.mxu0 0.0
        %910 = vmatpush2.xpose.msra.mxu0 0.0
        %911 = vmatprep.subr.mxu0 0.0
        %912 = vmatpush2.xpose.msra.mxu0 0.0
        %913 = vmatprep.subr.mxu0 0.0
        %914 = vmatpush2.xpose.msra.mxu0 0.0
        %915 = vmatprep.subr.mxu0 0.0
        %916 = vmatpush2.xpose.msra.mxu0 0.0
        %917 = vmatprep.subr.mxu0 0.0
        %918 = vmatpush2.xpose.msra.mxu0 0.0
        %919 = vmatprep.subr.mxu0 0.0
        %920 = vmatpush2.xpose.msra.mxu0 0.0
        %921 = vmatprep.subr.mxu0 0.0
        %922 = vmatpush2.xpose.msra.mxu0 0.0
        %923 = vmatprep.subr.mxu0 0.0
        %924 = vmatpush2.xpose.msra.mxu0 0.0
        %925 = vmatprep.subr.mxu0 0.0
        %926 = vmatpush2.xpose.msra.mxu0 0.0
        %927 = vmatprep.subr.mxu0 0.0
        %928 = vmatpush2.xpose.msra.mxu0 0.0
        %929 = vmatprep.subr.mxu0 0.0
        %930 = vmatpush2.xpose.msra.mxu0 0.0
        %931 = vmatprep.subr.mxu0 0.0
        %932 = vmatpush2.xpose.msra.mxu0 0.0
        %933 = vmatprep.subr.mxu0 0.0
        %934 = vmatpush2.xpose.msra.mxu0 0.0
        %935 = vmatprep.subr.mxu0 0.0
        %936 = vmatpush2.xpose.msra.mxu0 0.0
        %937 = vmatprep.mubr.f32.mxu0 0.0
        %938 = vmatmul.mubr.f32.gmra.mxu0 %v869
        %v939 = vpop.f32.mrf.mxu0
        %v940 = vadd.f32 0.0, %v939
        %v941 = vpop.f32.mrf.mxu0
        %942 = vdwg.mxu0
        %v943 = vsel %vm538, %v940, -inf
        %944 = vmax.xlane.f32.xlu0 %v943
        %v945 = vpop.xlane.xlu0 %944
        %v946 = vsub.f32 %v940, %v945
        %v947 = vmul.f32 %v946, 1.442695
        %v948 = vpow.pop %v947
        %v949 = vsel %vm538, %v948, 0.0
        %950 = vadd.xlane.f32.xlu0 %v949
        %v951 = vpop.xlane.xlu0 %950
        %v952 = vrcp.pop %v951
        %v953 = vmul.f32 %v948, %v952
        %954 = vrot.lane.b32.xlu0 %v530, 48
        %v955 = vpop.permute.xlu0 %954
        %v958 = vsel %vm538, %v953, 0
        %960 = vmatprep.subr.mxu0 0.0
        %961 = vmatpush1.msra.mxu0 0.0
        %962 = vmatprep.subr.mxu0 0.0
        %963 = vmatpush1.msra.mxu0 0.0
        %964 = vmatprep.subr.mxu0 0.0
        %965 = vmatpush1.msra.mxu0 0.0
        %966 = vmatprep.subr.mxu0 0.0
        %967 = vmatpush1.msra.mxu0 0.0
        %968 = vmatprep.subr.mxu0 0.0
        %969 = vmatpush1.msra.mxu0 0.0
        %970 = vmatprep.subr.mxu0 0.0
        %971 = vmatpush1.msra.mxu0 0.0
        %972 = vmatprep.subr.mxu0 0.0
        %973 = vmatpush1.msra.mxu0 0.0
        %974 = vmatprep.subr.mxu0 0.0
        %975 = vmatpush1.msra.mxu0 0.0
        %976 = vmatprep.subr.mxu0 0.0
        %977 = vmatpush1.msra.mxu0 0.0
        %978 = vmatprep.subr.mxu0 0.0
        %979 = vmatpush1.msra.mxu0 0.0
        %980 = vmatprep.subr.mxu0 0.0
        %981 = vmatpush1.msra.mxu0 0.0
        %982 = vmatprep.subr.mxu0 0.0
        %983 = vmatpush1.msra.mxu0 0.0
        %984 = vmatprep.subr.mxu0 0.0
        %985 = vmatpush1.msra.mxu0 0.0
        %986 = vmatprep.subr.mxu0 0.0
        %987 = vmatpush1.msra.mxu0 0.0
        %988 = vmatprep.subr.mxu0 0.0
        %989 = vmatpush1.msra.mxu0 0.0
        %990 = vmatprep.subr.mxu0 0.0
        %991 = vmatpush1.msra.mxu0 %v955
        %992 = vmatprep.subr.mxu0 0.0
        %993 = vmatpush2.msra.mxu0 0.0
        %994 = vmatprep.subr.mxu0 0.0
        %995 = vmatpush2.msra.mxu0 0.0
        %996 = vmatprep.subr.mxu0 0.0
        %997 = vmatpush2.msra.mxu0 0.0
        %998 = vmatprep.subr.mxu0 0.0
        %999 = vmatpush2.msra.mxu0 0.0
        %1000 = vmatprep.subr.mxu0 0.0
        %1001 = vmatpush2.msra.mxu0 0.0
        %1002 = vmatprep.subr.mxu0 0.0
        %1003 = vmatpush2.msra.mxu0 0.0
        %1004 = vmatprep.subr.mxu0 0.0
        %1005 = vmatpush2.msra.mxu0 0.0
        %1006 = vmatprep.subr.mxu0 0.0
        %1007 = vmatpush2.msra.mxu0 0.0
        %1008 = vmatprep.subr.mxu0 0.0
        %1009 = vmatpush2.msra.mxu0 0.0
        %1010 = vmatprep.subr.mxu0 0.0
        %1011 = vmatpush2.msra.mxu0 0.0
        %1012 = vmatprep.subr.mxu0 0.0
        %1013 = vmatpush2.msra.mxu0 0.0
        %1014 = vmatprep.subr.mxu0 0.0
        %1015 = vmatpush2.msra.mxu0 0.0
        %1016 = vmatprep.subr.mxu0 0.0
        %1017 = vmatpush2.msra.mxu0 0.0
        %1018 = vmatprep.subr.mxu0 0.0
        %1019 = vmatpush2.msra.mxu0 0.0
        %1020 = vmatprep.subr.mxu0 0.0
        %1021 = vmatpush2.msra.mxu0 0.0
        %1022 = vmatprep.subr.mxu0 0.0
        %1023 = vmatpush2.msra.mxu0 0.0
        %1024 = vmatprep.mubr.f32.mxu0 0.0
        %1025 = vmatmul.mubr.f32.gmra.mxu0 %v958
        %v1026 = vpop.f32.mrf.mxu0
        %v1027 = vadd.f32 0.0, %v1026
        %v1028 = vpop.f32.mrf.mxu0
        %1029 = vdwg.mxu0
        %1030 = vrot.lane.b32.xlu0 %v530, 104
        %v1031 = vpop.permute.xlu0 %1030
        %1032 = vrot.lane.b32.xlu0 %v530, 72
        %v1033 = vpop.permute.xlu0 %1032
        %v1034 = vsel %vm538, %v1031, 0
        %v1036 = vsel %vm538, %v1033, 0
        %1038 = vmatprep.subr.mxu0 0.0
        %1039 = vmatpush1.xpose.msra.mxu0 0.0
        %1040 = vmatprep.subr.mxu0 0.0
        %1041 = vmatpush1.xpose.msra.mxu0 0.0
        %1042 = vmatprep.subr.mxu0 0.0
        %1043 = vmatpush1.xpose.msra.mxu0 0.0
        %1044 = vmatprep.subr.mxu0 0.0
        %1045 = vmatpush1.xpose.msra.mxu0 0.0
        %1046 = vmatprep.subr.mxu0 0.0
        %1047 = vmatpush1.xpose.msra.mxu0 0.0
        %1048 = vmatprep.subr.mxu0 0.0
        %1049 = vmatpush1.xpose.msra.mxu0 0.0
        %1050 = vmatprep.subr.mxu0 0.0
        %1051 = vmatpush1.xpose.msra.mxu0 0.0
        %1052 = vmatprep.subr.mxu0 0.0
        %1053 = vmatpush1.xpose.msra.mxu0 0.0
        %1054 = vmatprep.subr.mxu0 0.0
        %1055 = vmatpush1.xpose.msra.mxu0 0.0
        %1056 = vmatprep.subr.mxu0 0.0
        %1057 = vmatpush1.xpose.msra.mxu0 0.0
        %1058 = vmatprep.subr.mxu0 0.0
        %1059 = vmatpush1.xpose.msra.mxu0 0.0
        %1060 = vmatprep.subr.mxu0 0.0
        %1061 = vmatpush1.xpose.msra.mxu0 0.0
        %1062 = vmatprep.subr.mxu0 0.0
        %1063 = vmatpush1.xpose.msra.mxu0 0.0
        %1064 = vmatprep.subr.mxu0 0.0
        %1065 = vmatpush1.xpose.msra.mxu0 0.0
        %1066 = vmatprep.subr.mxu0 0.0
        %1067 = vmatpush1.xpose.msra.mxu0 0.0
        %1068 = vmatprep.subr.mxu0 0.0
        %1069 = vmatpush1.xpose.msra.mxu0 %v1036
        %1070 = vmatprep.subr.mxu0 0.0
        %1071 = vmatpush2.xpose.msra.mxu0 0.0
        %1072 = vmatprep.subr.mxu0 0.0
        %1073 = vmatpush2.xpose.msra.mxu0 0.0
        %1074 = vmatprep.subr.mxu0 0.0
        %1075 = vmatpush2.xpose.msra.mxu0 0.0
        %1076 = vmatprep.subr.mxu0 0.0
        %1077 = vmatpush2.xpose.msra.mxu0 0.0
        %1078 = vmatprep.subr.mxu0 0.0
        %1079 = vmatpush2.xpose.msra.mxu0 0.0
        %1080 = vmatprep.subr.mxu0 0.0
        %1081 = vmatpush2.xpose.msra.mxu0 0.0
        %1082 = vmatprep.subr.mxu0 0.0
        %1083 = vmatpush2.xpose.msra.mxu0 0.0
        %1084 = vmatprep.subr.mxu0 0.0
        %1085 = vmatpush2.xpose.msra.mxu0 0.0
        %1086 = vmatprep.subr.mxu0 0.0
        %1087 = vmatpush2.xpose.msra.mxu0 0.0
        %1088 = vmatprep.subr.mxu0 0.0
        %1089 = vmatpush2.xpose.msra.mxu0 0.0
        %1090 = vmatprep.subr.mxu0 0.0
        %1091 = vmatpush2.xpose.msra.mxu0 0.0
        %1092 = vmatprep.subr.mxu0 0.0
        %1093 = vmatpush2.xpose.msra.mxu0 0.0
        %1094 = vmatprep.subr.mxu0 0.0
        %1095 = vmatpush2.xpose.msra.mxu0 0.0
        %1096 = vmatprep.subr.mxu0 0.0
        %1097 = vmatpush2.xpose.msra.mxu0 0.0
        %1098 = vmatprep.subr.mxu0 0.0
        %1099 = vmatpush2.xpose.msra.mxu0 0.0
        %1100 = vmatprep.subr.mxu0 0.0
        %1101 = vmatpush2.xpose.msra.mxu0 0.0
        %1102 = vmatprep.mubr.f32.mxu0 0.0
        %1103 = vmatmul.mubr.f32.gmra.mxu0 %v1034
        %v1104 = vpop.f32.mrf.mxu0
        %v1105 = vadd.f32 0.0, %v1104
        %v1106 = vpop.f32.mrf.mxu0
        %1107 = vdwg.mxu0
        %v1108 = vsel %vm538, %v1105, -inf
        %1109 = vmax.xlane.f32.xlu0 %v1108
        %v1110 = vpop.xlane.xlu0 %1109
        %v1111 = vsub.f32 %v1105, %v1110
        %v1112 = vmul.f32 %v1111, 1.442695
        %v1113 = vpow.pop %v1112
        %v1114 = vsel %vm538, %v1113, 0.0
        %1115 = vadd.xlane.f32.xlu0 %v1114
        %v1116 = vpop.xlane.xlu0 %1115
        %v1117 = vrcp.pop %v1116
        %v1118 = vmul.f32 %v1113, %v1117
        %1119 = vrot.lane.b32.xlu0 %v530, 40
        %v1120 = vpop.permute.xlu0 %1119
        %v1123 = vsel %vm538, %v1118, 0
        %1125 = vmatprep.subr.mxu0 0.0
        %1126 = vmatpush1.msra.mxu0 0.0
        %1127 = vmatprep.subr.mxu0 0.0
        %1128 = vmatpush1.msra.mxu0 0.0
        %1129 = vmatprep.subr.mxu0 0.0
        %1130 = vmatpush1.msra.mxu0 0.0
        %1131 = vmatprep.subr.mxu0 0.0
        %1132 = vmatpush1.msra.mxu0 0.0
        %1133 = vmatprep.subr.mxu0 0.0
        %1134 = vmatpush1.msra.mxu0 0.0
        %1135 = vmatprep.subr.mxu0 0.0
        %1136 = vmatpush1.msra.mxu0 0.0
        %1137 = vmatprep.subr.mxu0 0.0
        %1138 = vmatpush1.msra.mxu0 0.0
        %1139 = vmatprep.subr.mxu0 0.0
        %1140 = vmatpush1.msra.mxu0 0.0
        %1141 = vmatprep.subr.mxu0 0.0
        %1142 = vmatpush1.msra.mxu0 0.0
        %1143 = vmatprep.subr.mxu0 0.0
        %1144 = vmatpush1.msra.mxu0 0.0
        %1145 = vmatprep.subr.mxu0 0.0
        %1146 = vmatpush1.msra.mxu0 0.0
        %1147 = vmatprep.subr.mxu0 0.0
        %1148 = vmatpush1.msra.mxu0 0.0
        %1149 = vmatprep.subr.mxu0 0.0
        %1150 = vmatpush1.msra.mxu0 0.0
        %1151 = vmatprep.subr.mxu0 0.0
        %1152 = vmatpush1.msra.mxu0 0.0
        %1153 = vmatprep.subr.mxu0 0.0
        %1154 = vmatpush1.msra.mxu0 0.0
        %1155 = vmatprep.subr.mxu0 0.0
        %1156 = vmatpush1.msra.mxu0 %v1120
        %1157 = vmatprep.subr.mxu0 0.0
        %1158 = vmatpush2.msra.mxu0 0.0
        %1159 = vmatprep.subr.mxu0 0.0
        %1160 = vmatpush2.msra.mxu0 0.0
        %1161 = vmatprep.subr.mxu0 0.0
        %1162 = vmatpush2.msra.mxu0 0.0
        %1163 = vmatprep.subr.mxu0 0.0
        %1164 = vmatpush2.msra.mxu0 0.0
        %1165 = vmatprep.subr.mxu0 0.0
        %1166 = vmatpush2.msra.mxu0 0.0
        %1167 = vmatprep.subr.mxu0 0.0
        %1168 = vmatpush2.msra.mxu0 0.0
        %1169 = vmatprep.subr.mxu0 0.0
        %1170 = vmatpush2.msra.mxu0 0.0
        %1171 = vmatprep.subr.mxu0 0.0
        %1172 = vmatpush2.msra.mxu0 0.0
        %1173 = vmatprep.subr.mxu0 0.0
        %1174 = vmatpush2.msra.mxu0 0.0
        %1175 = vmatprep.subr.mxu0 0.0
        %1176 = vmatpush2.msra.mxu0 0.0
        %1177 = vmatprep.subr.mxu0 0.0
        %1178 = vmatpush2.msra.mxu0 0.0
        %1179 = vmatprep.subr.mxu0 0.0
        %1180 = vmatpush2.msra.mxu0 0.0
        %1181 = vmatprep.subr.mxu0 0.0
        %1182 = vmatpush2.msra.mxu0 0.0
        %1183 = vmatprep.subr.mxu0 0.0
        %1184 = vmatpush2.msra.mxu0 0.0
        %1185 = vmatprep.subr.mxu0 0.0
        %1186 = vmatpush2.msra.mxu0 0.0
        %1187 = vmatprep.subr.mxu0 0.0
        %1188 = vmatpush2.msra.mxu0 0.0
        %1189 = vmatprep.mubr.f32.mxu0 0.0
        %1190 = vmatmul.mubr.f32.gmra.mxu0 %v1123
        %v1191 = vpop.f32.mrf.mxu0
        %v1192 = vadd.f32 0.0, %v1191
        %v1193 = vpop.f32.mrf.mxu0
        %1194 = vdwg.mxu0
        %1196 = vrot.lane.b32.xlu0 %v862, 8
        %v1197 = vpop.permute.xlu0 %1196
        %1200 = vrot.lane.b32.xlu0 %v1027, 16
        %v1201 = vpop.permute.xlu0 %1200
        %1204 = vrot.lane.b32.xlu0 %v1192, 24
        %v1205 = vpop.permute.xlu0 %1204
        %v1207 = vsel %vm538, %v697, %v1197
        %vm1208 = vcmask 130048
        %v1209 = vsel %vm1208, %v1207, %v1201
        %vm1210 = vcmask 195584
        %v1211 = vsel %vm1210, %v1209, %v1205
        %v1212 = vpack.c.bf16 %v1211, %v1211
        %v1213 = vld [vmem:[%s5] sm:$0xf]
        %v1214 = vld [vmem:[%s5 + $0x4] sm:$0xf]
        %v1215 = vld [vmem:[%s5 + $0x8] sm:$0xf]
        %v1216 = vld [vmem:[%s5 + $0xc] sm:$0xf]
        %v1217 = vlaneseq
        %v1218 = vshrl.u32 %v1217, 7
        %v1219 = vsub.s32 0, %v1218
        %v1220 = vrot.slane %v466, %v1219
        %v1225 = vunpack.c.l.b16 %v1213
        %v1226 = vunpack.c.l.b16 %v1214
        %v1227 = vunpack.c.l.b16 %v1215
        %v1228 = vunpack.c.l.b16 %v1216
        %v1229 = vpack.c.b16 %v1226, %v1225
        %v1230 = vpack.c.b16 %v1228, %v1227
        %v1234 = vsel %vm491, %v1212, 0
        %1236 = vmatprep.subr.bf16.mxu0 0
        %1237 = vmatpush1.bf16.msra.mxu0 0
        %1238 = vmatprep.subr.bf16.mxu0 0
        %1239 = vmatpush1.bf16.msra.mxu0 0
        %1240 = vmatprep.subr.bf16.mxu0 0
        %1241 = vmatpush1.bf16.msra.mxu0 0
        %1242 = vmatprep.subr.bf16.mxu0 0
        %1243 = vmatpush1.bf16.msra.mxu0 0
        %1244 = vmatprep.subr.bf16.mxu0 0
        %1245 = vmatpush1.bf16.msra.mxu0 0
        %1246 = vmatprep.subr.bf16.mxu0 0
        %1247 = vmatpush1.bf16.msra.mxu0 0
        %1248 = vmatprep.subr.bf16.mxu0 0
        %1249 = vmatpush1.bf16.msra.mxu0 %v1230
        %1250 = vmatprep.subr.bf16.mxu0 0
        %1251 = vmatpush1.bf16.msra.mxu0 %v1229
        %1252 = vmatprep.subr.bf16.mxu0 0
        %1253 = vmatpush2.bf16.msra.mxu0 0
        %1254 = vmatprep.subr.bf16.mxu0 0
        %1255 = vmatpush2.bf16.msra.mxu0 0
        %1256 = vmatprep.subr.bf16.mxu0 0
        %1257 = vmatpush2.bf16.msra.mxu0 0
        %1258 = vmatprep.subr.bf16.mxu0 0
        %1259 = vmatpush2.bf16.msra.mxu0 0
        %1260 = vmatprep.subr.bf16.mxu0 0
        %1261 = vmatpush2.bf16.msra.mxu0 0
        %1262 = vmatprep.subr.bf16.mxu0 0
        %1263 = vmatpush2.bf16.msra.mxu0 0
        %1264 = vmatprep.subr.bf16.mxu0 0
        %1265 = vmatpush2.bf16.msra.mxu0 0
        %1266 = vmatprep.subr.bf16.mxu0 0
        %1267 = vmatpush2.bf16.msra.mxu0 0
        %1268 = vmatprep.mubr.bf16.mxu0 0
        %1269 = vmatmul.mubr.bf16.gmra.mxu0 %v1234
        %v1270 = vpop.f32.mrf.mxu0
        %v1271 = vadd.f32 %v1220, %v1270
        %v1272 = vpop.f32.mrf.mxu0
        %v1273 = vpop.f32.mrf.mxu0
        %v1274 = vpop.f32.mrf.mxu0
        %1275 = vdwg.mxu0
        %v1276 = vadd.f32 %v461, %v1271
        %v1277 = vsel %vm491, %v1276, 0.0
        %1278 = vadd.xlane.f32.xlu0 %v1277
        %v1279 = vpop.xlane.xlu0 %1278
        %v1280 = vrcp.pop 32.0
        %v1281 = vmul.f32 %v1279, %v1280
        %v1282 = vsub.f32 %v1276, %v1281
        %v1283 = vmul.f32 %v1282, %v1282
        %v1284 = vsel %vm491, %v1283, 0.0
        %1285 = vadd.xlane.f32.xlu0 %v1284
        %v1286 = vpop.xlane.xlu0 %1285
        %v1287 = vmul.f32 %v1286, %v1280
        %v1288 = vadd.f32 %v1287, 1e-05
        %v1289 = vrsqrt.pop %v1288
        %v1290 = vmul.f32 %v1282, %v1289
        %v1291 = vlaneseq
        %v1292 = vshrl.u32 %v1291, 7
        %v1293 = vsub.s32 1, %v1292
        %v1294 = vrot.slane %v466, %v1293
        %v1295 = vmul.f32 %v1290, %v1294
        %v1296 = vlaneseq
        %v1297 = vshrl.u32 %v1296, 7
        %v1298 = vsub.s32 2, %v1297
        %v1299 = vrot.slane %v466, %v1298
        %v1300 = vadd.f32 %v1295, %v1299
        %v1301 = vpack.c.bf16 %v1300, %v1300
        %v1302 = vld [vmem:[%s6] sm:$0xff]
        %v1303 = vld [vmem:[%s6 + $0x8] sm:$0xff]
        %v1304 = vld [vmem:[%s6 + $0x10] sm:$0xff]
        %v1305 = vld [vmem:[%s6 + $0x18] sm:$0xff]
        %v1306 = vld [vmem:[%s6 + $0x20] sm:$0xff]
        %v1307 = vld [vmem:[%s6 + $0x28] sm:$0xff]
        %v1308 = vld [vmem:[%s6 + $0x30] sm:$0xff]
        %v1309 = vld [vmem:[%s6 + $0x38] sm:$0xff]
        %v1310 = vld [vmem:[%s6 + $0x40] sm:$0xff]
        %v1311 = vld [vmem:[%s6 + $0x48] sm:$0xff]
        %v1312 = vld [vmem:[%s6 + $0x50] sm:$0xff]
        %v1313 = vld [vmem:[%s6 + $0x58] sm:$0xff]
        %v1314 = vld [vmem:[%s6 + $0x60] sm:$0xff]
        %v1315 = vld [vmem:[%s6 + $0x68] sm:$0xff]
        %v1316 = vld [vmem:[%s6 + $0x70] sm:$0xff]
        %v1317 = vld [vmem:[%s6 + $0x78] sm:$0xff]
        %v1318 = vld [vmem:[%s6 + $0x80] sm:$0xff]
        %v1319 = vld [vmem:[%s6 + $0x88] sm:$0xff]
        %v1320 = vld [vmem:[%s6 + $0x90] sm:$0xff]
        %v1321 = vld [vmem:[%s6 + $0x98] sm:$0xff]
        %v1322 = vld [vmem:[%s6 + $0xa0] sm:$0xff]
        %v1323 = vld [vmem:[%s6 + $0xa8] sm:$0xff]
        %v1324 = vld [vmem:[%s6 + $0xb0] sm:$0xff]
        %v1325 = vld [vmem:[%s6 + $0xb8] sm:$0xff]
        %v1326 = vld [vmem:[%s6 + $0xc0] sm:$0xff]
        %v1327 = vld [vmem:[%s6 + $0xc8] sm:$0xff]
        %v1328 = vld [vmem:[%s6 + $0xd0] sm:$0xff]
        %v1329 = vld [vmem:[%s6 + $0xd8] sm:$0xff]
        %v1330 = vld [vmem:[%s6 + $0xe0] sm:$0xff]
        %v1331 = vld [vmem:[%s6 + $0xe8] sm:$0xff]
        %v1332 = vld [vmem:[%s6 + $0xf0] sm:$0xff]
        %v1333 = vld [vmem:[%s6 + $0xf8] sm:$0xff]
        %v1334 = vld [vmem:[%s7] sm:$0xff]
        %v1335 = vld [vmem:[%s7 + $0x8] sm:$0xff]
        %v1338 = vlaneseq
        %v1339 = vshrl.u32 %v1338, 7
        %v1340 = vsub.s32 0, %v1339
        %v1341 = vrot.slane %v1334, %v1340
        %v1342 = vlaneseq
        %v1343 = vshrl.u32 %v1342, 7
        %v1344 = vsub.s32 1, %v1343
        %v1345 = vrot.slane %v1334, %v1344
        %v1346 = vlaneseq
        %v1347 = vshrl.u32 %v1346, 7
        %v1348 = vsub.s32 2, %v1347
        %v1349 = vrot.slane %v1334, %v1348
        %v1350 = vlaneseq
        %v1351 = vshrl.u32 %v1350, 7
        %v1352 = vsub.s32 3, %v1351
        %v1353 = vrot.slane %v1334, %v1352
        %v1354 = vlaneseq
        %v1355 = vshrl.u32 %v1354, 7
        %v1356 = vsub.s32 4, %v1355
        %v1357 = vrot.slane %v1334, %v1356
        %v1358 = vlaneseq
        %v1359 = vshrl.u32 %v1358, 7
        %v1360 = vsub.s32 5, %v1359
        %v1361 = vrot.slane %v1334, %v1360
        %v1362 = vlaneseq
        %v1363 = vshrl.u32 %v1362, 7
        %v1364 = vsub.s32 6, %v1363
        %v1365 = vrot.slane %v1334, %v1364
        %v1366 = vlaneseq
        %v1367 = vshrl.u32 %v1366, 7
        %v1368 = vsub.s32 7, %v1367
        %v1369 = vrot.slane %v1334, %v1368
        %v1370 = vlaneseq
        %v1371 = vshrl.u32 %v1370, 7
        %v1372 = vsub.s32 0, %v1371
        %v1373 = vrot.slane %v1335, %v1372
        %v1374 = vlaneseq
        %v1375 = vshrl.u32 %v1374, 7
        %v1376 = vsub.s32 1, %v1375
        %v1377 = vrot.slane %v1335, %v1376
        %v1378 = vlaneseq
        %v1379 = vshrl.u32 %v1378, 7
        %v1380 = vsub.s32 2, %v1379
        %v1381 = vrot.slane %v1335, %v1380
        %v1382 = vlaneseq
        %v1383 = vshrl.u32 %v1382, 7
        %v1384 = vsub.s32 3, %v1383
        %v1385 = vrot.slane %v1335, %v1384
        %v1386 = vlaneseq
        %v1387 = vshrl.u32 %v1386, 7
        %v1388 = vsub.s32 4, %v1387
        %v1389 = vrot.slane %v1335, %v1388
        %v1390 = vlaneseq
        %v1391 = vshrl.u32 %v1390, 7
        %v1392 = vsub.s32 5, %v1391
        %v1393 = vrot.slane %v1335, %v1392
        %v1394 = vlaneseq
        %v1395 = vshrl.u32 %v1394, 7
        %v1396 = vsub.s32 6, %v1395
        %v1397 = vrot.slane %v1335, %v1396
        %v1398 = vlaneseq
        %v1399 = vshrl.u32 %v1398, 7
        %v1400 = vsub.s32 7, %v1399
        %v1401 = vrot.slane %v1335, %v1400
        %v1450 = vunpack.c.l.b16 %v1302
        %v1451 = vunpack.c.h.b16 %v1302
        %v1452 = vunpack.c.l.b16 %v1303
        %v1453 = vunpack.c.h.b16 %v1303
        %v1454 = vunpack.c.l.b16 %v1304
        %v1455 = vunpack.c.h.b16 %v1304
        %v1456 = vunpack.c.l.b16 %v1305
        %v1457 = vunpack.c.h.b16 %v1305
        %v1458 = vunpack.c.l.b16 %v1306
        %v1459 = vunpack.c.h.b16 %v1306
        %v1460 = vunpack.c.l.b16 %v1307
        %v1461 = vunpack.c.h.b16 %v1307
        %v1462 = vunpack.c.l.b16 %v1308
        %v1463 = vunpack.c.h.b16 %v1308
        %v1464 = vunpack.c.l.b16 %v1309
        %v1465 = vunpack.c.h.b16 %v1309
        %v1466 = vunpack.c.l.b16 %v1310
        %v1467 = vunpack.c.h.b16 %v1310
        %v1468 = vunpack.c.l.b16 %v1311
        %v1469 = vunpack.c.h.b16 %v1311
        %v1470 = vunpack.c.l.b16 %v1312
        %v1471 = vunpack.c.h.b16 %v1312
        %v1472 = vunpack.c.l.b16 %v1313
        %v1473 = vunpack.c.h.b16 %v1313
        %v1474 = vunpack.c.l.b16 %v1314
        %v1475 = vunpack.c.h.b16 %v1314
        %v1476 = vunpack.c.l.b16 %v1315
        %v1477 = vunpack.c.h.b16 %v1315
        %v1478 = vunpack.c.l.b16 %v1316
        %v1479 = vunpack.c.h.b16 %v1316
        %v1480 = vunpack.c.l.b16 %v1317
        %v1481 = vunpack.c.h.b16 %v1317
        %v1482 = vunpack.c.l.b16 %v1318
        %v1483 = vunpack.c.h.b16 %v1318
        %v1484 = vunpack.c.l.b16 %v1319
        %v1485 = vunpack.c.h.b16 %v1319
        %v1486 = vunpack.c.l.b16 %v1320
        %v1487 = vunpack.c.h.b16 %v1320
        %v1488 = vunpack.c.l.b16 %v1321
        %v1489 = vunpack.c.h.b16 %v1321
        %v1490 = vunpack.c.l.b16 %v1322
        %v1491 = vunpack.c.h.b16 %v1322
        %v1492 = vunpack.c.l.b16 %v1323
        %v1493 = vunpack.c.h.b16 %v1323
        %v1494 = vunpack.c.l.b16 %v1324
        %v1495 = vunpack.c.h.b16 %v1324
        %v1496 = vunpack.c.l.b16 %v1325
        %v1497 = vunpack.c.h.b16 %v1325
        %v1498 = vunpack.c.l.b16 %v1326
        %v1499 = vunpack.c.h.b16 %v1326
        %v1500 = vunpack.c.l.b16 %v1327
        %v1501 = vunpack.c.h.b16 %v1327
        %v1502 = vunpack.c.l.b16 %v1328
        %v1503 = vunpack.c.h.b16 %v1328
        %v1504 = vunpack.c.l.b16 %v1329
        %v1505 = vunpack.c.h.b16 %v1329
        %v1506 = vunpack.c.l.b16 %v1330
        %v1507 = vunpack.c.h.b16 %v1330
        %v1508 = vunpack.c.l.b16 %v1331
        %v1509 = vunpack.c.h.b16 %v1331
        %v1510 = vunpack.c.l.b16 %v1332
        %v1511 = vunpack.c.h.b16 %v1332
        %v1512 = vunpack.c.l.b16 %v1333
        %v1513 = vunpack.c.h.b16 %v1333
        %v1514 = vpack.c.b16 %v1466, %v1450
        %v1515 = vpack.c.b16 %v1467, %v1451
        %v1516 = vpack.c.b16 %v1468, %v1452
        %v1517 = vpack.c.b16 %v1469, %v1453
        %v1518 = vpack.c.b16 %v1470, %v1454
        %v1519 = vpack.c.b16 %v1471, %v1455
        %v1520 = vpack.c.b16 %v1472, %v1456
        %v1521 = vpack.c.b16 %v1473, %v1457
        %v1522 = vpack.c.b16 %v1474, %v1458
        %v1523 = vpack.c.b16 %v1475, %v1459
        %v1524 = vpack.c.b16 %v1476, %v1460
        %v1525 = vpack.c.b16 %v1477, %v1461
        %v1526 = vpack.c.b16 %v1478, %v1462
        %v1527 = vpack.c.b16 %v1479, %v1463
        %v1528 = vpack.c.b16 %v1480, %v1464
        %v1529 = vpack.c.b16 %v1481, %v1465
        %v1530 = vpack.c.b16 %v1498, %v1482
        %v1531 = vpack.c.b16 %v1499, %v1483
        %v1532 = vpack.c.b16 %v1500, %v1484
        %v1533 = vpack.c.b16 %v1501, %v1485
        %v1534 = vpack.c.b16 %v1502, %v1486
        %v1535 = vpack.c.b16 %v1503, %v1487
        %v1536 = vpack.c.b16 %v1504, %v1488
        %v1537 = vpack.c.b16 %v1505, %v1489
        %v1538 = vpack.c.b16 %v1506, %v1490
        %v1539 = vpack.c.b16 %v1507, %v1491
        %v1540 = vpack.c.b16 %v1508, %v1492
        %v1541 = vpack.c.b16 %v1509, %v1493
        %v1542 = vpack.c.b16 %v1510, %v1494
        %v1543 = vpack.c.b16 %v1511, %v1495
        %v1544 = vpack.c.b16 %v1512, %v1496
        %v1545 = vpack.c.b16 %v1513, %v1497
        %v1579 = vsel %vm491, %v1301, 0
        %1581 = vmatprep.subr.bf16.mxu0 0
        %1582 = vmatpush1.bf16.msra.mxu0 0
        %1583 = vmatprep.subr.bf16.mxu0 0
        %1584 = vmatpush1.bf16.msra.mxu0 0
        %1585 = vmatprep.subr.bf16.mxu0 0
        %1586 = vmatpush1.bf16.msra.mxu0 0
        %1587 = vmatprep.subr.bf16.mxu0 0
        %1588 = vmatpush1.bf16.msra.mxu0 0
        %1589 = vmatprep.subr.bf16.mxu0 0
        %1590 = vmatpush1.bf16.msra.mxu0 0
        %1591 = vmatprep.subr.bf16.mxu0 0
        %1592 = vmatpush1.bf16.msra.mxu0 0
        %1593 = vmatprep.subr.bf16.mxu0 %v1531
        %1594 = vmatpush1.bf16.msra.mxu0 %v1530
        %1595 = vmatprep.subr.bf16.mxu0 %v1515
        %1596 = vmatpush1.bf16.msra.mxu0 %v1514
        %1597 = vmatprep.subr.bf16.mxu0 0
        %1598 = vmatpush2.bf16.msra.mxu0 0
        %1599 = vmatprep.subr.bf16.mxu0 0
        %1600 = vmatpush2.bf16.msra.mxu0 0
        %1601 = vmatprep.subr.bf16.mxu0 0
        %1602 = vmatpush2.bf16.msra.mxu0 0
        %1603 = vmatprep.subr.bf16.mxu0 0
        %1604 = vmatpush2.bf16.msra.mxu0 0
        %1605 = vmatprep.subr.bf16.mxu0 0
        %1606 = vmatpush2.bf16.msra.mxu0 0
        %1607 = vmatprep.subr.bf16.mxu0 0
        %1608 = vmatpush2.bf16.msra.mxu0 0
        %1609 = vmatprep.subr.bf16.mxu0 0
        %1610 = vmatpush2.bf16.msra.mxu0 0
        %1611 = vmatprep.subr.bf16.mxu0 0
        %1612 = vmatpush2.bf16.msra.mxu0 0
        %1613 = vmatprep.mubr.bf16.mxu0 0
        %1614 = vmatmul.mubr.bf16.gmra.mxu0 %v1579
        %v1615 = vpop.f32.mrf.mxu0
        %v1616 = vadd.f32 %v1341, %v1615
        %v1617 = vpop.f32.mrf.mxu0
        %v1618 = vadd.f32 %v1345, %v1617
        %v1619 = vpop.f32.mrf.mxu0
        %v1620 = vpop.f32.mrf.mxu0
        %1621 = vdwg.mxu0
        %1622 = vmatprep.subr.bf16.mxu0 0
        %1623 = vmatpush1.bf16.msra.mxu0 0
        %1624 = vmatprep.subr.bf16.mxu0 0
        %1625 = vmatpush1.bf16.msra.mxu0 0
        %1626 = vmatprep.subr.bf16.mxu0 0
        %1627 = vmatpush1.bf16.msra.mxu0 0
        %1628 = vmatprep.subr.bf16.mxu0 0
        %1629 = vmatpush1.bf16.msra.mxu0 0
        %1630 = vmatprep.subr.bf16.mxu0 0
        %1631 = vmatpush1.bf16.msra.mxu0 0
        %1632 = vmatprep.subr.bf16.mxu0 0
        %1633 = vmatpush1.bf16.msra.mxu0 0
        %1634 = vmatprep.subr.bf16.mxu0 %v1533
        %1635 = vmatpush1.bf16.msra.mxu0 %v1532
        %1636 = vmatprep.subr.bf16.mxu0 %v1517
        %1637 = vmatpush1.bf16.msra.mxu0 %v1516
        %1638 = vmatprep.subr.bf16.mxu0 0
        %1639 = vmatpush2.bf16.msra.mxu0 0
        %1640 = vmatprep.subr.bf16.mxu0 0
        %1641 = vmatpush2.bf16.msra.mxu0 0
        %1642 = vmatprep.subr.bf16.mxu0 0
        %1643 = vmatpush2.bf16.msra.mxu0 0
        %1644 = vmatprep.subr.bf16.mxu0 0
        %1645 = vmatpush2.bf16.msra.mxu0 0
        %1646 = vmatprep.subr.bf16.mxu0 0
        %1647 = vmatpush2.bf16.msra.mxu0 0
        %1648 = vmatprep.subr.bf16.mxu0 0
        %1649 = vmatpush2.bf16.msra.mxu0 0
        %1650 = vmatprep.subr.bf16.mxu0 0
        %1651 = vmatpush2.bf16.msra.mxu0 0
        %1652 = vmatprep.subr.bf16.mxu0 0
        %1653 = vmatpush2.bf16.msra.mxu0 0
        %1654 = vmatprep.mubr.bf16.mxu0 0
        %1655 = vmatmul.mubr.bf16.gmra.mxu0 %v1579
        %v1656 = vpop.f32.mrf.mxu0
        %v1657 = vadd.f32 %v1349, %v1656
        %v1658 = vpop.f32.mrf.mxu0
        %v1659 = vadd.f32 %v1353, %v1658
        %v1660 = vpop.f32.mrf.mxu0
        %v1661 = vpop.f32.mrf.mxu0
        %1662 = vdwg.mxu0
        %1663 = vmatprep.subr.bf16.mxu0 0
        %1664 = vmatpush1.bf16.msra.mxu0 0
        %1665 = vmatprep.subr.bf16.mxu0 0
        %1666 = vmatpush1.bf16.msra.mxu0 0
        %1667 = vmatprep.subr.bf16.mxu0 0
        %1668 = vmatpush1.bf16.msra.mxu0 0
        %1669 = vmatprep.subr.bf16.mxu0 0
        %1670 = vmatpush1.bf16.msra.mxu0 0
        %1671 = vmatprep.subr.bf16.mxu0 0
        %1672 = vmatpush1.bf16.msra.mxu0 0
        %1673 = vmatprep.subr.bf16.mxu0 0
        %1674 = vmatpush1.bf16.msra.mxu0 0
        %1675 = vmatprep.subr.bf16.mxu0 %v1535
        %1676 = vmatpush1.bf16.msra.mxu0 %v1534
        %1677 = vmatprep.subr.bf16.mxu0 %v1519
        %1678 = vmatpush1.bf16.msra.mxu0 %v1518
        %1679 = vmatprep.subr.bf16.mxu0 0
        %1680 = vmatpush2.bf16.msra.mxu0 0
        %1681 = vmatprep.subr.bf16.mxu0 0
        %1682 = vmatpush2.bf16.msra.mxu0 0
        %1683 = vmatprep.subr.bf16.mxu0 0
        %1684 = vmatpush2.bf16.msra.mxu0 0
        %1685 = vmatprep.subr.bf16.mxu0 0
        %1686 = vmatpush2.bf16.msra.mxu0 0
        %1687 = vmatprep.subr.bf16.mxu0 0
        %1688 = vmatpush2.bf16.msra.mxu0 0
        %1689 = vmatprep.subr.bf16.mxu0 0
        %1690 = vmatpush2.bf16.msra.mxu0 0
        %1691 = vmatprep.subr.bf16.mxu0 0
        %1692 = vmatpush2.bf16.msra.mxu0 0
        %1693 = vmatprep.subr.bf16.mxu0 0
        %1694 = vmatpush2.bf16.msra.mxu0 0
        %1695 = vmatprep.mubr.bf16.mxu0 0
        %1696 = vmatmul.mubr.bf16.gmra.mxu0 %v1579
        %v1697 = vpop.f32.mrf.mxu0
        %v1698 = vadd.f32 %v1357, %v1697
        %v1699 = vpop.f32.mrf.mxu0
        %v1700 = vadd.f32 %v1361, %v1699
        %v1701 = vpop.f32.mrf.mxu0
        %v1702 = vpop.f32.mrf.mxu0
        %1703 = vdwg.mxu0
        %1704 = vmatprep.subr.bf16.mxu0 0
        %1705 = vmatpush1.bf16.msra.mxu0 0
        %1706 = vmatprep.subr.bf16.mxu0 0
        %1707 = vmatpush1.bf16.msra.mxu0 0
        %1708 = vmatprep.subr.bf16.mxu0 0
        %1709 = vmatpush1.bf16.msra.mxu0 0
        %1710 = vmatprep.subr.bf16.mxu0 0
        %1711 = vmatpush1.bf16.msra.mxu0 0
        %1712 = vmatprep.subr.bf16.mxu0 0
        %1713 = vmatpush1.bf16.msra.mxu0 0
        %1714 = vmatprep.subr.bf16.mxu0 0
        %1715 = vmatpush1.bf16.msra.mxu0 0
        %1716 = vmatprep.subr.bf16.mxu0 %v1537
        %1717 = vmatpush1.bf16.msra.mxu0 %v1536
        %1718 = vmatprep.subr.bf16.mxu0 %v1521
        %1719 = vmatpush1.bf16.msra.mxu0 %v1520
        %1720 = vmatprep.subr.bf16.mxu0 0
        %1721 = vmatpush2.bf16.msra.mxu0 0
        %1722 = vmatprep.subr.bf16.mxu0 0
        %1723 = vmatpush2.bf16.msra.mxu0 0
        %1724 = vmatprep.subr.bf16.mxu0 0
        %1725 = vmatpush2.bf16.msra.mxu0 0
        %1726 = vmatprep.subr.bf16.mxu0 0
        %1727 = vmatpush2.bf16.msra.mxu0 0
        %1728 = vmatprep.subr.bf16.mxu0 0
        %1729 = vmatpush2.bf16.msra.mxu0 0
        %1730 = vmatprep.subr.bf16.mxu0 0
        %1731 = vmatpush2.bf16.msra.mxu0 0
        %1732 = vmatprep.subr.bf16.mxu0 0
        %1733 = vmatpush2.bf16.msra.mxu0 0
        %1734 = vmatprep.subr.bf16.mxu0 0
        %1735 = vmatpush2.bf16.msra.mxu0 0
        %1736 = vmatprep.mubr.bf16.mxu0 0
        %1737 = vmatmul.mubr.bf16.gmra.mxu0 %v1579
        %v1738 = vpop.f32.mrf.mxu0
        %v1739 = vadd.f32 %v1365, %v1738
        %v1740 = vpop.f32.mrf.mxu0
        %v1741 = vadd.f32 %v1369, %v1740
        %v1742 = vpop.f32.mrf.mxu0
        %v1743 = vpop.f32.mrf.mxu0
        %1744 = vdwg.mxu0
        %1745 = vmatprep.subr.bf16.mxu0 0
        %1746 = vmatpush1.bf16.msra.mxu0 0
        %1747 = vmatprep.subr.bf16.mxu0 0
        %1748 = vmatpush1.bf16.msra.mxu0 0
        %1749 = vmatprep.subr.bf16.mxu0 0
        %1750 = vmatpush1.bf16.msra.mxu0 0
        %1751 = vmatprep.subr.bf16.mxu0 0
        %1752 = vmatpush1.bf16.msra.mxu0 0
        %1753 = vmatprep.subr.bf16.mxu0 0
        %1754 = vmatpush1.bf16.msra.mxu0 0
        %1755 = vmatprep.subr.bf16.mxu0 0
        %1756 = vmatpush1.bf16.msra.mxu0 0
        %1757 = vmatprep.subr.bf16.mxu0 %v1539
        %1758 = vmatpush1.bf16.msra.mxu0 %v1538
        %1759 = vmatprep.subr.bf16.mxu0 %v1523
        %1760 = vmatpush1.bf16.msra.mxu0 %v1522
        %1761 = vmatprep.subr.bf16.mxu0 0
        %1762 = vmatpush2.bf16.msra.mxu0 0
        %1763 = vmatprep.subr.bf16.mxu0 0
        %1764 = vmatpush2.bf16.msra.mxu0 0
        %1765 = vmatprep.subr.bf16.mxu0 0
        %1766 = vmatpush2.bf16.msra.mxu0 0
        %1767 = vmatprep.subr.bf16.mxu0 0
        %1768 = vmatpush2.bf16.msra.mxu0 0
        %1769 = vmatprep.subr.bf16.mxu0 0
        %1770 = vmatpush2.bf16.msra.mxu0 0
        %1771 = vmatprep.subr.bf16.mxu0 0
        %1772 = vmatpush2.bf16.msra.mxu0 0
        %1773 = vmatprep.subr.bf16.mxu0 0
        %1774 = vmatpush2.bf16.msra.mxu0 0
        %1775 = vmatprep.subr.bf16.mxu0 0
        %1776 = vmatpush2.bf16.msra.mxu0 0
        %1777 = vmatprep.mubr.bf16.mxu0 0
        %1778 = vmatmul.mubr.bf16.gmra.mxu0 %v1579
        %v1779 = vpop.f32.mrf.mxu0
        %v1780 = vadd.f32 %v1373, %v1779
        %v1781 = vpop.f32.mrf.mxu0
        %v1782 = vadd.f32 %v1377, %v1781
        %v1783 = vpop.f32.mrf.mxu0
        %v1784 = vpop.f32.mrf.mxu0
        %1785 = vdwg.mxu0
        %1786 = vmatprep.subr.bf16.mxu0 0
        %1787 = vmatpush1.bf16.msra.mxu0 0
        %1788 = vmatprep.subr.bf16.mxu0 0
        %1789 = vmatpush1.bf16.msra.mxu0 0
        %1790 = vmatprep.subr.bf16.mxu0 0
        %1791 = vmatpush1.bf16.msra.mxu0 0
        %1792 = vmatprep.subr.bf16.mxu0 0
        %1793 = vmatpush1.bf16.msra.mxu0 0
        %1794 = vmatprep.subr.bf16.mxu0 0
        %1795 = vmatpush1.bf16.msra.mxu0 0
        %1796 = vmatprep.subr.bf16.mxu0 0
        %1797 = vmatpush1.bf16.msra.mxu0 0
        %1798 = vmatprep.subr.bf16.mxu0 %v1541
        %1799 = vmatpush1.bf16.msra.mxu0 %v1540
        %1800 = vmatprep.subr.bf16.mxu0 %v1525
        %1801 = vmatpush1.bf16.msra.mxu0 %v1524
        %1802 = vmatprep.subr.bf16.mxu0 0
        %1803 = vmatpush2.bf16.msra.mxu0 0
        %1804 = vmatprep.subr.bf16.mxu0 0
        %1805 = vmatpush2.bf16.msra.mxu0 0
        %1806 = vmatprep.subr.bf16.mxu0 0
        %1807 = vmatpush2.bf16.msra.mxu0 0
        %1808 = vmatprep.subr.bf16.mxu0 0
        %1809 = vmatpush2.bf16.msra.mxu0 0
        %1810 = vmatprep.subr.bf16.mxu0 0
        %1811 = vmatpush2.bf16.msra.mxu0 0
        %1812 = vmatprep.subr.bf16.mxu0 0
        %1813 = vmatpush2.bf16.msra.mxu0 0
        %1814 = vmatprep.subr.bf16.mxu0 0
        %1815 = vmatpush2.bf16.msra.mxu0 0
        %1816 = vmatprep.subr.bf16.mxu0 0
        %1817 = vmatpush2.bf16.msra.mxu0 0
        %1818 = vmatprep.mubr.bf16.mxu0 0
        %1819 = vmatmul.mubr.bf16.gmra.mxu0 %v1579
        %v1820 = vpop.f32.mrf.mxu0
        %v1821 = vadd.f32 %v1381, %v1820
        %v1822 = vpop.f32.mrf.mxu0
        %v1823 = vadd.f32 %v1385, %v1822
        %v1824 = vpop.f32.mrf.mxu0
        %v1825 = vpop.f32.mrf.mxu0
        %1826 = vdwg.mxu0
        %1827 = vmatprep.subr.bf16.mxu0 0
        %1828 = vmatpush1.bf16.msra.mxu0 0
        %1829 = vmatprep.subr.bf16.mxu0 0
        %1830 = vmatpush1.bf16.msra.mxu0 0
        %1831 = vmatprep.subr.bf16.mxu0 0
        %1832 = vmatpush1.bf16.msra.mxu0 0
        %1833 = vmatprep.subr.bf16.mxu0 0
        %1834 = vmatpush1.bf16.msra.mxu0 0
        %1835 = vmatprep.subr.bf16.mxu0 0
        %1836 = vmatpush1.bf16.msra.mxu0 0
        %1837 = vmatprep.subr.bf16.mxu0 0
        %1838 = vmatpush1.bf16.msra.mxu0 0
        %1839 = vmatprep.subr.bf16.mxu0 %v1543
        %1840 = vmatpush1.bf16.msra.mxu0 %v1542
        %1841 = vmatprep.subr.bf16.mxu0 %v1527
        %1842 = vmatpush1.bf16.msra.mxu0 %v1526
        %1843 = vmatprep.subr.bf16.mxu0 0
        %1844 = vmatpush2.bf16.msra.mxu0 0
        %1845 = vmatprep.subr.bf16.mxu0 0
        %1846 = vmatpush2.bf16.msra.mxu0 0
        %1847 = vmatprep.subr.bf16.mxu0 0
        %1848 = vmatpush2.bf16.msra.mxu0 0
        %1849 = vmatprep.subr.bf16.mxu0 0
        %1850 = vmatpush2.bf16.msra.mxu0 0
        %1851 = vmatprep.subr.bf16.mxu0 0
        %1852 = vmatpush2.bf16.msra.mxu0 0
        %1853 = vmatprep.subr.bf16.mxu0 0
        %1854 = vmatpush2.bf16.msra.mxu0 0
        %1855 = vmatprep.subr.bf16.mxu0 0
        %1856 = vmatpush2.bf16.msra.mxu0 0
        %1857 = vmatprep.subr.bf16.mxu0 0
        %1858 = vmatpush2.bf16.msra.mxu0 0
        %1859 = vmatprep.mubr.bf16.mxu0 0
        %1860 = vmatmul.mubr.bf16.gmra.mxu0 %v1579
        %v1861 = vpop.f32.mrf.mxu0
        %v1862 = vadd.f32 %v1389, %v1861
        %v1863 = vpop.f32.mrf.mxu0
        %v1864 = vadd.f32 %v1393, %v1863
        %v1865 = vpop.f32.mrf.mxu0
        %v1866 = vpop.f32.mrf.mxu0
        %1867 = vdwg.mxu0
        %1868 = vmatprep.subr.bf16.mxu0 0
        %1869 = vmatpush1.bf16.msra.mxu0 0
        %1870 = vmatprep.subr.bf16.mxu0 0
        %1871 = vmatpush1.bf16.msra.mxu0 0
        %1872 = vmatprep.subr.bf16.mxu0 0
        %1873 = vmatpush1.bf16.msra.mxu0 0
        %1874 = vmatprep.subr.bf16.mxu0 0
        %1875 = vmatpush1.bf16.msra.mxu0 0
        %1876 = vmatprep.subr.bf16.mxu0 0
        %1877 = vmatpush1.bf16.msra.mxu0 0
        %1878 = vmatprep.subr.bf16.mxu0 0
        %1879 = vmatpush1.bf16.msra.mxu0 0
        %1880 = vmatprep.subr.bf16.mxu0 %v1545
        %1881 = vmatpush1.bf16.msra.mxu0 %v1544
        %1882 = vmatprep.subr.bf16.mxu0 %v1529
        %1883 = vmatpush1.bf16.msra.mxu0 %v1528
        %1884 = vmatprep.subr.bf16.mxu0 0
        %1885 = vmatpush2.bf16.msra.mxu0 0
        %1886 = vmatprep.subr.bf16.mxu0 0
        %1887 = vmatpush2.bf16.msra.mxu0 0
        %1888 = vmatprep.subr.bf16.mxu0 0
        %1889 = vmatpush2.bf16.msra.mxu0 0
        %1890 = vmatprep.subr.bf16.mxu0 0
        %1891 = vmatpush2.bf16.msra.mxu0 0
        %1892 = vmatprep.subr.bf16.mxu0 0
        %1893 = vmatpush2.bf16.msra.mxu0 0
        %1894 = vmatprep.subr.bf16.mxu0 0
        %1895 = vmatpush2.bf16.msra.mxu0 0
        %1896 = vmatprep.subr.bf16.mxu0 0
        %1897 = vmatpush2.bf16.msra.mxu0 0
        %1898 = vmatprep.subr.bf16.mxu0 0
        %1899 = vmatpush2.bf16.msra.mxu0 0
        %1900 = vmatprep.mubr.bf16.mxu0 0
        %1901 = vmatmul.mubr.bf16.gmra.mxu0 %v1579
        %v1902 = vpop.f32.mrf.mxu0
        %v1903 = vadd.f32 %v1397, %v1902
        %v1904 = vpop.f32.mrf.mxu0
        %v1905 = vadd.f32 %v1401, %v1904
        %v1906 = vpop.f32.mrf.mxu0
        %v1907 = vpop.f32.mrf.mxu0
        %1908 = vdwg.mxu0
        %v1909 = vmax.f32 %v1616, 0.0
        %v1910 = vmax.f32 %v1618, 0.0
        %v1911 = vmax.f32 %v1657, 0.0
        %v1912 = vmax.f32 %v1659, 0.0
        %v1913 = vmax.f32 %v1698, 0.0
        %v1914 = vmax.f32 %v1700, 0.0
        %v1915 = vmax.f32 %v1739, 0.0
        %v1916 = vmax.f32 %v1741, 0.0
        %v1917 = vmax.f32 %v1780, 0.0
        %v1918 = vmax.f32 %v1782, 0.0
        %v1919 = vmax.f32 %v1821, 0.0
        %v1920 = vmax.f32 %v1823, 0.0
        %v1921 = vmax.f32 %v1862, 0.0
        %v1922 = vmax.f32 %v1864, 0.0
        %v1923 = vmax.f32 %v1903, 0.0
        %v1924 = vmax.f32 %v1905, 0.0
        %v1925 = vpack.c.bf16 %v1909, %v1909
        %v1926 = vpack.c.bf16 %v1910, %v1910
        %v1927 = vpack.c.bf16 %v1911, %v1911
        %v1928 = vpack.c.bf16 %v1912, %v1912
        %v1929 = vpack.c.bf16 %v1913, %v1913
        %v1930 = vpack.c.bf16 %v1914, %v1914
        %v1931 = vpack.c.bf16 %v1915, %v1915
        %v1932 = vpack.c.bf16 %v1916, %v1916
        %v1933 = vpack.c.bf16 %v1917, %v1917
        %v1934 = vpack.c.bf16 %v1918, %v1918
        %v1935 = vpack.c.bf16 %v1919, %v1919
        %v1936 = vpack.c.bf16 %v1920, %v1920
        %v1937 = vpack.c.bf16 %v1921, %v1921
        %v1938 = vpack.c.bf16 %v1922, %v1922
        %v1939 = vpack.c.bf16 %v1923, %v1923
        %v1940 = vpack.c.bf16 %v1924, %v1924
        %v1941 = vld [vmem:[%s8] sm:$0xf]
        %v1942 = vld [vmem:[%s8 + $0x4] sm:$0xf]
        %v1943 = vld [vmem:[%s8 + $0x8] sm:$0xf]
        %v1944 = vld [vmem:[%s8 + $0xc] sm:$0xf]
        %v1945 = vld [vmem:[%s8 + $0x10] sm:$0xf]
        %v1946 = vld [vmem:[%s8 + $0x14] sm:$0xf]
        %v1947 = vld [vmem:[%s8 + $0x18] sm:$0xf]
        %v1948 = vld [vmem:[%s8 + $0x1c] sm:$0xf]
        %v1949 = vld [vmem:[%s8 + $0x20] sm:$0xf]
        %v1950 = vld [vmem:[%s8 + $0x24] sm:$0xf]
        %v1951 = vld [vmem:[%s8 + $0x28] sm:$0xf]
        %v1952 = vld [vmem:[%s8 + $0x2c] sm:$0xf]
        %v1953 = vld [vmem:[%s8 + $0x30] sm:$0xf]
        %v1954 = vld [vmem:[%s8 + $0x34] sm:$0xf]
        %v1955 = vld [vmem:[%s8 + $0x38] sm:$0xf]
        %v1956 = vld [vmem:[%s8 + $0x3c] sm:$0xf]
        %v1957 = vld [vmem:[%s8 + $0x40] sm:$0xf]
        %v1958 = vld [vmem:[%s8 + $0x44] sm:$0xf]
        %v1959 = vld [vmem:[%s8 + $0x48] sm:$0xf]
        %v1960 = vld [vmem:[%s8 + $0x4c] sm:$0xf]
        %v1961 = vld [vmem:[%s8 + $0x50] sm:$0xf]
        %v1962 = vld [vmem:[%s8 + $0x54] sm:$0xf]
        %v1963 = vld [vmem:[%s8 + $0x58] sm:$0xf]
        %v1964 = vld [vmem:[%s8 + $0x5c] sm:$0xf]
        %v1965 = vld [vmem:[%s8 + $0x60] sm:$0xf]
        %v1966 = vld [vmem:[%s8 + $0x64] sm:$0xf]
        %v1967 = vld [vmem:[%s8 + $0x68] sm:$0xf]
        %v1968 = vld [vmem:[%s8 + $0x6c] sm:$0xf]
        %v1969 = vld [vmem:[%s8 + $0x70] sm:$0xf]
        %v1970 = vld [vmem:[%s8 + $0x74] sm:$0xf]
        %v1971 = vld [vmem:[%s8 + $0x78] sm:$0xf]
        %v1972 = vld [vmem:[%s8 + $0x7c] sm:$0xf]
        %v1973 = vld [vmem:[%s8 + $0x80] sm:$0xf]
        %v1974 = vld [vmem:[%s8 + $0x84] sm:$0xf]
        %v1975 = vld [vmem:[%s8 + $0x88] sm:$0xf]
        %v1976 = vld [vmem:[%s8 + $0x8c] sm:$0xf]
        %v1977 = vld [vmem:[%s8 + $0x90] sm:$0xf]
        %v1978 = vld [vmem:[%s8 + $0x94] sm:$0xf]
        %v1979 = vld [vmem:[%s8 + $0x98] sm:$0xf]
        %v1980 = vld [vmem:[%s8 + $0x9c] sm:$0xf]
        %v1981 = vld [vmem:[%s8 + $0xa0] sm:$0xf]
        %v1982 = vld [vmem:[%s8 + $0xa4] sm:$0xf]
        %v1983 = vld [vmem:[%s8 + $0xa8] sm:$0xf]
        %v1984 = vld [vmem:[%s8 + $0xac] sm:$0xf]
        %v1985 = vld [vmem:[%s8 + $0xb0] sm:$0xf]
        %v1986 = vld [vmem:[%s8 + $0xb4] sm:$0xf]
        %v1987 = vld [vmem:[%s8 + $0xb8] sm:$0xf]
        %v1988 = vld [vmem:[%s8 + $0xbc] sm:$0xf]
        %v1989 = vld [vmem:[%s8 + $0xc0] sm:$0xf]
        %v1990 = vld [vmem:[%s8 + $0xc4] sm:$0xf]
        %v1991 = vld [vmem:[%s8 + $0xc8] sm:$0xf]
        %v1992 = vld [vmem:[%s8 + $0xcc] sm:$0xf]
        %v1993 = vld [vmem:[%s8 + $0xd0] sm:$0xf]
        %v1994 = vld [vmem:[%s8 + $0xd4] sm:$0xf]
        %v1995 = vld [vmem:[%s8 + $0xd8] sm:$0xf]
        %v1996 = vld [vmem:[%s8 + $0xdc] sm:$0xf]
        %v1997 = vld [vmem:[%s8 + $0xe0] sm:$0xf]
        %v1998 = vld [vmem:[%s8 + $0xe4] sm:$0xf]
        %v1999 = vld [vmem:[%s8 + $0xe8] sm:$0xf]
        %v2000 = vld [vmem:[%s8 + $0xec] sm:$0xf]
        %v2001 = vld [vmem:[%s8 + $0xf0] sm:$0xf]
        %v2002 = vld [vmem:[%s8 + $0xf4] sm:$0xf]
        %v2003 = vld [vmem:[%s8 + $0xf8] sm:$0xf]
        %v2004 = vld [vmem:[%s8 + $0xfc] sm:$0xf]
        %v2005 = vld [vmem:[%s8 + $0x100] sm:$0xf]
        %v2006 = vld [vmem:[%s8 + $0x104] sm:$0xf]
        %v2007 = vld [vmem:[%s8 + $0x108] sm:$0xf]
        %v2008 = vld [vmem:[%s8 + $0x10c] sm:$0xf]
        %v2009 = vld [vmem:[%s8 + $0x110] sm:$0xf]
        %v2010 = vld [vmem:[%s8 + $0x114] sm:$0xf]
        %v2011 = vld [vmem:[%s8 + $0x118] sm:$0xf]
        %v2012 = vld [vmem:[%s8 + $0x11c] sm:$0xf]
        %v2013 = vld [vmem:[%s8 + $0x120] sm:$0xf]
        %v2014 = vld [vmem:[%s8 + $0x124] sm:$0xf]
        %v2015 = vld [vmem:[%s8 + $0x128] sm:$0xf]
        %v2016 = vld [vmem:[%s8 + $0x12c] sm:$0xf]
        %v2017 = vld [vmem:[%s8 + $0x130] sm:$0xf]
        %v2018 = vld [vmem:[%s8 + $0x134] sm:$0xf]
        %v2019 = vld [vmem:[%s8 + $0x138] sm:$0xf]
        %v2020 = vld [vmem:[%s8 + $0x13c] sm:$0xf]
        %v2021 = vld [vmem:[%s8 + $0x140] sm:$0xf]
        %v2022 = vld [vmem:[%s8 + $0x144] sm:$0xf]
        %v2023 = vld [vmem:[%s8 + $0x148] sm:$0xf]
        %v2024 = vld [vmem:[%s8 + $0x14c] sm:$0xf]
        %v2025 = vld [vmem:[%s8 + $0x150] sm:$0xf]
        %v2026 = vld [vmem:[%s8 + $0x154] sm:$0xf]
        %v2027 = vld [vmem:[%s8 + $0x158] sm:$0xf]
        %v2028 = vld [vmem:[%s8 + $0x15c] sm:$0xf]
        %v2029 = vld [vmem:[%s8 + $0x160] sm:$0xf]
        %v2030 = vld [vmem:[%s8 + $0x164] sm:$0xf]
        %v2031 = vld [vmem:[%s8 + $0x168] sm:$0xf]
        %v2032 = vld [vmem:[%s8 + $0x16c] sm:$0xf]
        %v2033 = vld [vmem:[%s8 + $0x170] sm:$0xf]
        %v2034 = vld [vmem:[%s8 + $0x174] sm:$0xf]
        %v2035 = vld [vmem:[%s8 + $0x178] sm:$0xf]
        %v2036 = vld [vmem:[%s8 + $0x17c] sm:$0xf]
        %v2037 = vld [vmem:[%s8 + $0x180] sm:$0xf]
        %v2038 = vld [vmem:[%s8 + $0x184] sm:$0xf]
        %v2039 = vld [vmem:[%s8 + $0x188] sm:$0xf]
        %v2040 = vld [vmem:[%s8 + $0x18c] sm:$0xf]
        %v2041 = vld [vmem:[%s8 + $0x190] sm:$0xf]
        %v2042 = vld [vmem:[%s8 + $0x194] sm:$0xf]
        %v2043 = vld [vmem:[%s8 + $0x198] sm:$0xf]
        %v2044 = vld [vmem:[%s8 + $0x19c] sm:$0xf]
        %v2045 = vld [vmem:[%s8 + $0x1a0] sm:$0xf]
        %v2046 = vld [vmem:[%s8 + $0x1a4] sm:$0xf]
        %v2047 = vld [vmem:[%s8 + $0x1a8] sm:$0xf]
        %v2048 = vld [vmem:[%s8 + $0x1ac] sm:$0xf]
        %v2049 = vld [vmem:[%s8 + $0x1b0] sm:$0xf]
        %v2050 = vld [vmem:[%s8 + $0x1b4] sm:$0xf]
        %v2051 = vld [vmem:[%s8 + $0x1b8] sm:$0xf]
        %v2052 = vld [vmem:[%s8 + $0x1bc] sm:$0xf]
        %v2053 = vld [vmem:[%s8 + $0x1c0] sm:$0xf]
        %v2054 = vld [vmem:[%s8 + $0x1c4] sm:$0xf]
        %v2055 = vld [vmem:[%s8 + $0x1c8] sm:$0xf]
        %v2056 = vld [vmem:[%s8 + $0x1cc] sm:$0xf]
        %v2057 = vld [vmem:[%s8 + $0x1d0] sm:$0xf]
        %v2058 = vld [vmem:[%s8 + $0x1d4] sm:$0xf]
        %v2059 = vld [vmem:[%s8 + $0x1d8] sm:$0xf]
        %v2060 = vld [vmem:[%s8 + $0x1dc] sm:$0xf]
        %v2061 = vld [vmem:[%s8 + $0x1e0] sm:$0xf]
        %v2062 = vld [vmem:[%s8 + $0x1e4] sm:$0xf]
        %v2063 = vld [vmem:[%s8 + $0x1e8] sm:$0xf]
        %v2064 = vld [vmem:[%s8 + $0x1ec] sm:$0xf]
        %v2065 = vld [vmem:[%s8 + $0x1f0] sm:$0xf]
        %v2066 = vld [vmem:[%s8 + $0x1f4] sm:$0xf]
        %v2067 = vld [vmem:[%s8 + $0x1f8] sm:$0xf]
        %v2068 = vld [vmem:[%s8 + $0x1fc] sm:$0xf]
        %v2069 = vld [vmem:[%s8 + $0x200] sm:$0xf]
        %v2070 = vld [vmem:[%s8 + $0x204] sm:$0xf]
        %v2071 = vld [vmem:[%s8 + $0x208] sm:$0xf]
        %v2072 = vld [vmem:[%s8 + $0x20c] sm:$0xf]
        %v2073 = vld [vmem:[%s8 + $0x210] sm:$0xf]
        %v2074 = vld [vmem:[%s8 + $0x214] sm:$0xf]
        %v2075 = vld [vmem:[%s8 + $0x218] sm:$0xf]
        %v2076 = vld [vmem:[%s8 + $0x21c] sm:$0xf]
        %v2077 = vld [vmem:[%s8 + $0x220] sm:$0xf]
        %v2078 = vld [vmem:[%s8 + $0x224] sm:$0xf]
        %v2079 = vld [vmem:[%s8 + $0x228] sm:$0xf]
        %v2080 = vld [vmem:[%s8 + $0x22c] sm:$0xf]
        %v2081 = vld [vmem:[%s8 + $0x230] sm:$0xf]
        %v2082 = vld [vmem:[%s8 + $0x234] sm:$0xf]
        %v2083 = vld [vmem:[%s8 + $0x238] sm:$0xf]
        %v2084 = vld [vmem:[%s8 + $0x23c] sm:$0xf]
        %v2085 = vld [vmem:[%s8 + $0x240] sm:$0xf]
        %v2086 = vld [vmem:[%s8 + $0x244] sm:$0xf]
        %v2087 = vld [vmem:[%s8 + $0x248] sm:$0xf]
        %v2088 = vld [vmem:[%s8 + $0x24c] sm:$0xf]
        %v2089 = vld [vmem:[%s8 + $0x250] sm:$0xf]
        %v2090 = vld [vmem:[%s8 + $0x254] sm:$0xf]
        %v2091 = vld [vmem:[%s8 + $0x258] sm:$0xf]
        %v2092 = vld [vmem:[%s8 + $0x25c] sm:$0xf]
        %v2093 = vld [vmem:[%s8 + $0x260] sm:$0xf]
        %v2094 = vld [vmem:[%s8 + $0x264] sm:$0xf]
        %v2095 = vld [vmem:[%s8 + $0x268] sm:$0xf]
        %v2096 = vld [vmem:[%s8 + $0x26c] sm:$0xf]
        %v2097 = vld [vmem:[%s8 + $0x270] sm:$0xf]
        %v2098 = vld [vmem:[%s8 + $0x274] sm:$0xf]
        %v2099 = vld [vmem:[%s8 + $0x278] sm:$0xf]
        %v2100 = vld [vmem:[%s8 + $0x27c] sm:$0xf]
        %v2101 = vld [vmem:[%s8 + $0x280] sm:$0xf]
        %v2102 = vld [vmem:[%s8 + $0x284] sm:$0xf]
        %v2103 = vld [vmem:[%s8 + $0x288] sm:$0xf]
        %v2104 = vld [vmem:[%s8 + $0x28c] sm:$0xf]
        %v2105 = vld [vmem:[%s8 + $0x290] sm:$0xf]
        %v2106 = vld [vmem:[%s8 + $0x294] sm:$0xf]
        %v2107 = vld [vmem:[%s8 + $0x298] sm:$0xf]
        %v2108 = vld [vmem:[%s8 + $0x29c] sm:$0xf]
        %v2109 = vld [vmem:[%s8 + $0x2a0] sm:$0xf]
        %v2110 = vld [vmem:[%s8 + $0x2a4] sm:$0xf]
        %v2111 = vld [vmem:[%s8 + $0x2a8] sm:$0xf]
        %v2112 = vld [vmem:[%s8 + $0x2ac] sm:$0xf]
        %v2113 = vld [vmem:[%s8 + $0x2b0] sm:$0xf]
        %v2114 = vld [vmem:[%s8 + $0x2b4] sm:$0xf]
        %v2115 = vld [vmem:[%s8 + $0x2b8] sm:$0xf]
        %v2116 = vld [vmem:[%s8 + $0x2bc] sm:$0xf]
        %v2117 = vld [vmem:[%s8 + $0x2c0] sm:$0xf]
        %v2118 = vld [vmem:[%s8 + $0x2c4] sm:$0xf]
        %v2119 = vld [vmem:[%s8 + $0x2c8] sm:$0xf]
        %v2120 = vld [vmem:[%s8 + $0x2cc] sm:$0xf]
        %v2121 = vld [vmem:[%s8 + $0x2d0] sm:$0xf]
        %v2122 = vld [vmem:[%s8 + $0x2d4] sm:$0xf]
        %v2123 = vld [vmem:[%s8 + $0x2d8] sm:$0xf]
        %v2124 = vld [vmem:[%s8 + $0x2dc] sm:$0xf]
        %v2125 = vld [vmem:[%s8 + $0x2e0] sm:$0xf]
        %v2126 = vld [vmem:[%s8 + $0x2e4] sm:$0xf]
        %v2127 = vld [vmem:[%s8 + $0x2e8] sm:$0xf]
        %v2128 = vld [vmem:[%s8 + $0x2ec] sm:$0xf]
        %v2129 = vld [vmem:[%s8 + $0x2f0] sm:$0xf]
        %v2130 = vld [vmem:[%s8 + $0x2f4] sm:$0xf]
        %v2131 = vld [vmem:[%s8 + $0x2f8] sm:$0xf]
        %v2132 = vld [vmem:[%s8 + $0x2fc] sm:$0xf]
        %v2133 = vld [vmem:[%s8 + $0x300] sm:$0xf]
        %v2134 = vld [vmem:[%s8 + $0x304] sm:$0xf]
        %v2135 = vld [vmem:[%s8 + $0x308] sm:$0xf]
        %v2136 = vld [vmem:[%s8 + $0x30c] sm:$0xf]
        %v2137 = vld [vmem:[%s8 + $0x310] sm:$0xf]
        %v2138 = vld [vmem:[%s8 + $0x314] sm:$0xf]
        %v2139 = vld [vmem:[%s8 + $0x318] sm:$0xf]
        %v2140 = vld [vmem:[%s8 + $0x31c] sm:$0xf]
        %v2141 = vld [vmem:[%s8 + $0x320] sm:$0xf]
        %v2142 = vld [vmem:[%s8 + $0x324] sm:$0xf]
        %v2143 = vld [vmem:[%s8 + $0x328] sm:$0xf]
        %v2144 = vld [vmem:[%s8 + $0x32c] sm:$0xf]
        %v2145 = vld [vmem:[%s8 + $0x330] sm:$0xf]
        %v2146 = vld [vmem:[%s8 + $0x334] sm:$0xf]
        %v2147 = vld [vmem:[%s8 + $0x338] sm:$0xf]
        %v2148 = vld [vmem:[%s8 + $0x33c] sm:$0xf]
        %v2149 = vld [vmem:[%s8 + $0x340] sm:$0xf]
        %v2150 = vld [vmem:[%s8 + $0x344] sm:$0xf]
        %v2151 = vld [vmem:[%s8 + $0x348] sm:$0xf]
        %v2152 = vld [vmem:[%s8 + $0x34c] sm:$0xf]
        %v2153 = vld [vmem:[%s8 + $0x350] sm:$0xf]
        %v2154 = vld [vmem:[%s8 + $0x354] sm:$0xf]
        %v2155 = vld [vmem:[%s8 + $0x358] sm:$0xf]
        %v2156 = vld [vmem:[%s8 + $0x35c] sm:$0xf]
        %v2157 = vld [vmem:[%s8 + $0x360] sm:$0xf]
        %v2158 = vld [vmem:[%s8 + $0x364] sm:$0xf]
        %v2159 = vld [vmem:[%s8 + $0x368] sm:$0xf]
        %v2160 = vld [vmem:[%s8 + $0x36c] sm:$0xf]
        %v2161 = vld [vmem:[%s8 + $0x370] sm:$0xf]
        %v2162 = vld [vmem:[%s8 + $0x374] sm:$0xf]
        %v2163 = vld [vmem:[%s8 + $0x378] sm:$0xf]
        %v2164 = vld [vmem:[%s8 + $0x37c] sm:$0xf]
        %v2165 = vld [vmem:[%s8 + $0x380] sm:$0xf]
        %v2166 = vld [vmem:[%s8 + $0x384] sm:$0xf]
        %v2167 = vld [vmem:[%s8 + $0x388] sm:$0xf]
        %v2168 = vld [vmem:[%s8 + $0x38c] sm:$0xf]
        %v2169 = vld [vmem:[%s8 + $0x390] sm:$0xf]
        %v2170 = vld [vmem:[%s8 + $0x394] sm:$0xf]
        %v2171 = vld [vmem:[%s8 + $0x398] sm:$0xf]
        %v2172 = vld [vmem:[%s8 + $0x39c] sm:$0xf]
        %v2173 = vld [vmem:[%s8 + $0x3a0] sm:$0xf]
        %v2174 = vld [vmem:[%s8 + $0x3a4] sm:$0xf]
        %v2175 = vld [vmem:[%s8 + $0x3a8] sm:$0xf]
        %v2176 = vld [vmem:[%s8 + $0x3ac] sm:$0xf]
        %v2177 = vld [vmem:[%s8 + $0x3b0] sm:$0xf]
        %v2178 = vld [vmem:[%s8 + $0x3b4] sm:$0xf]
        %v2179 = vld [vmem:[%s8 + $0x3b8] sm:$0xf]
        %v2180 = vld [vmem:[%s8 + $0x3bc] sm:$0xf]
        %v2181 = vld [vmem:[%s8 + $0x3c0] sm:$0xf]
        %v2182 = vld [vmem:[%s8 + $0x3c4] sm:$0xf]
        %v2183 = vld [vmem:[%s8 + $0x3c8] sm:$0xf]
        %v2184 = vld [vmem:[%s8 + $0x3cc] sm:$0xf]
        %v2185 = vld [vmem:[%s8 + $0x3d0] sm:$0xf]
        %v2186 = vld [vmem:[%s8 + $0x3d4] sm:$0xf]
        %v2187 = vld [vmem:[%s8 + $0x3d8] sm:$0xf]
        %v2188 = vld [vmem:[%s8 + $0x3dc] sm:$0xf]
        %v2189 = vld [vmem:[%s8 + $0x3e0] sm:$0xf]
        %v2190 = vld [vmem:[%s8 + $0x3e4] sm:$0xf]
        %v2191 = vld [vmem:[%s8 + $0x3e8] sm:$0xf]
        %v2192 = vld [vmem:[%s8 + $0x3ec] sm:$0xf]
        %v2193 = vld [vmem:[%s8 + $0x3f0] sm:$0xf]
        %v2194 = vld [vmem:[%s8 + $0x3f4] sm:$0xf]
        %v2195 = vld [vmem:[%s8 + $0x3f8] sm:$0xf]
        %v2196 = vld [vmem:[%s8 + $0x3fc] sm:$0xf]
        %v2197 = vlaneseq
        %v2198 = vshrl.u32 %v2197, 7
        %v2199 = vsub.s32 3, %v2198
        %v2200 = vrot.slane %v466, %v2199
        %v2457 = vunpack.c.l.b16 %v1941
        %v2458 = vunpack.c.l.b16 %v1942
        %v2459 = vunpack.c.l.b16 %v1943
        %v2460 = vunpack.c.l.b16 %v1944
        %v2461 = vunpack.c.l.b16 %v1945
        %v2462 = vunpack.c.l.b16 %v1946
        %v2463 = vunpack.c.l.b16 %v1947
        %v2464 = vunpack.c.l.b16 %v1948
        %v2465 = vunpack.c.l.b16 %v1949
        %v2466 = vunpack.c.l.b16 %v1950
        %v2467 = vunpack.c.l.b16 %v1951
        %v2468 = vunpack.c.l.b16 %v1952
        %v2469 = vunpack.c.l.b16 %v1953
        %v2470 = vunpack.c.l.b16 %v1954
        %v2471 = vunpack.c.l.b16 %v1955
        %v2472 = vunpack.c.l.b16 %v1956
        %v2473 = vunpack.c.l.b16 %v1957
        %v2474 = vunpack.c.l.b16 %v1958
        %v2475 = vunpack.c.l.b16 %v1959
        %v2476 = vunpack.c.l.b16 %v1960
        %v2477 = vunpack.c.l.b16 %v1961
        %v2478 = vunpack.c.l.b16 %v1962
        %v2479 = vunpack.c.l.b16 %v1963
        %v2480 = vunpack.c.l.b16 %v1964
        %v2481 = vunpack.c.l.b16 %v1965
        %v2482 = vunpack.c.l.b16 %v1966
        %v2483 = vunpack.c.l.b16 %v1967
        %v2484 = vunpack.c.l.b16 %v1968
        %v2485 = vunpack.c.l.b16 %v1969
        %v2486 = vunpack.c.l.b16 %v1970
        %v2487 = vunpack.c.l.b16 %v1971
        %v2488 = vunpack.c.l.b16 %v1972
        %v2489 = vunpack.c.l.b16 %v1973
        %v2490 = vunpack.c.l.b16 %v1974
        %v2491 = vunpack.c.l.b16 %v1975
        %v2492 = vunpack.c.l.b16 %v1976
        %v2493 = vunpack.c.l.b16 %v1977
        %v2494 = vunpack.c.l.b16 %v1978
        %v2495 = vunpack.c.l.b16 %v1979
        %v2496 = vunpack.c.l.b16 %v1980
        %v2497 = vunpack.c.l.b16 %v1981
        %v2498 = vunpack.c.l.b16 %v1982
        %v2499 = vunpack.c.l.b16 %v1983
        %v2500 = vunpack.c.l.b16 %v1984
        %v2501 = vunpack.c.l.b16 %v1985
        %v2502 = vunpack.c.l.b16 %v1986
        %v2503 = vunpack.c.l.b16 %v1987
        %v2504 = vunpack.c.l.b16 %v1988
        %v2505 = vunpack.c.l.b16 %v1989
        %v2506 = vunpack.c.l.b16 %v1990
        %v2507 = vunpack.c.l.b16 %v1991
        %v2508 = vunpack.c.l.b16 %v1992
        %v2509 = vunpack.c.l.b16 %v1993
        %v2510 = vunpack.c.l.b16 %v1994
        %v2511 = vunpack.c.l.b16 %v1995
        %v2512 = vunpack.c.l.b16 %v1996
        %v2513 = vunpack.c.l.b16 %v1997
        %v2514 = vunpack.c.l.b16 %v1998
        %v2515 = vunpack.c.l.b16 %v1999
        %v2516 = vunpack.c.l.b16 %v2000
        %v2517 = vunpack.c.l.b16 %v2001
        %v2518 = vunpack.c.l.b16 %v2002
        %v2519 = vunpack.c.l.b16 %v2003
        %v2520 = vunpack.c.l.b16 %v2004
        %v2521 = vunpack.c.l.b16 %v2005
        %v2522 = vunpack.c.l.b16 %v2006
        %v2523 = vunpack.c.l.b16 %v2007
        %v2524 = vunpack.c.l.b16 %v2008
        %v2525 = vunpack.c.l.b16 %v2009
        %v2526 = vunpack.c.l.b16 %v2010
        %v2527 = vunpack.c.l.b16 %v2011
        %v2528 = vunpack.c.l.b16 %v2012
        %v2529 = vunpack.c.l.b16 %v2013
        %v2530 = vunpack.c.l.b16 %v2014
        %v2531 = vunpack.c.l.b16 %v2015
        %v2532 = vunpack.c.l.b16 %v2016
        %v2533 = vunpack.c.l.b16 %v2017
        %v2534 = vunpack.c.l.b16 %v2018
        %v2535 = vunpack.c.l.b16 %v2019
        %v2536 = vunpack.c.l.b16 %v2020
        %v2537 = vunpack.c.l.b16 %v2021
        %v2538 = vunpack.c.l.b16 %v2022
        %v2539 = vunpack.c.l.b16 %v2023
        %v2540 = vunpack.c.l.b16 %v2024
        %v2541 = vunpack.c.l.b16 %v2025
        %v2542 = vunpack.c.l.b16 %v2026
        %v2543 = vunpack.c.l.b16 %v2027
        %v2544 = vunpack.c.l.b16 %v2028
        %v2545 = vunpack.c.l.b16 %v2029
        %v2546 = vunpack.c.l.b16 %v2030
        %v2547 = vunpack.c.l.b16 %v2031
        %v2548 = vunpack.c.l.b16 %v2032
        %v2549 = vunpack.c.l.b16 %v2033
        %v2550 = vunpack.c.l.b16 %v2034
        %v2551 = vunpack.c.l.b16 %v2035
        %v2552 = vunpack.c.l.b16 %v2036
        %v2553 = vunpack.c.l.b16 %v2037
        %v2554 = vunpack.c.l.b16 %v2038
        %v2555 = vunpack.c.l.b16 %v2039
        %v2556 = vunpack.c.l.b16 %v2040
        %v2557 = vunpack.c.l.b16 %v2041
        %v2558 = vunpack.c.l.b16 %v2042
        %v2559 = vunpack.c.l.b16 %v2043
        %v2560 = vunpack.c.l.b16 %v2044
        %v2561 = vunpack.c.l.b16 %v2045
        %v2562 = vunpack.c.l.b16 %v2046
        %v2563 = vunpack.c.l.b16 %v2047
        %v2564 = vunpack.c.l.b16 %v2048
        %v2565 = vunpack.c.l.b16 %v2049
        %v2566 = vunpack.c.l.b16 %v2050
        %v2567 = vunpack.c.l.b16 %v2051
        %v2568 = vunpack.c.l.b16 %v2052
        %v2569 = vunpack.c.l.b16 %v2053
        %v2570 = vunpack.c.l.b16 %v2054
        %v2571 = vunpack.c.l.b16 %v2055
        %v2572 = vunpack.c.l.b16 %v2056
        %v2573 = vunpack.c.l.b16 %v2057
        %v2574 = vunpack.c.l.b16 %v2058
        %v2575 = vunpack.c.l.b16 %v2059
        %v2576 = vunpack.c.l.b16 %v2060
        %v2577 = vunpack.c.l.b16 %v2061
        %v2578 = vunpack.c.l.b16 %v2062
        %v2579 = vunpack.c.l.b16 %v2063
        %v2580 = vunpack.c.l.b16 %v2064
        %v2581 = vunpack.c.l.b16 %v2065
        %v2582 = vunpack.c.l.b16 %v2066
        %v2583 = vunpack.c.l.b16 %v2067
        %v2584 = vunpack.c.l.b16 %v2068
        %v2585 = vunpack.c.l.b16 %v2069
        %v2586 = vunpack.c.l.b16 %v2070
        %v2587 = vunpack.c.l.b16 %v2071
        %v2588 = vunpack.c.l.b16 %v2072
        %v2589 = vunpack.c.l.b16 %v2073
        %v2590 = vunpack.c.l.b16 %v2074
        %v2591 = vunpack.c.l.b16 %v2075
        %v2592 = vunpack.c.l.b16 %v2076
        %v2593 = vunpack.c.l.b16 %v2077
        %v2594 = vunpack.c.l.b16 %v2078
        %v2595 = vunpack.c.l.b16 %v2079
        %v2596 = vunpack.c.l.b16 %v2080
        %v2597 = vunpack.c.l.b16 %v2081
        %v2598 = vunpack.c.l.b16 %v2082
        %v2599 = vunpack.c.l.b16 %v2083
        %v2600 = vunpack.c.l.b16 %v2084
        %v2601 = vunpack.c.l.b16 %v2085
        %v2602 = vunpack.c.l.b16 %v2086
        %v2603 = vunpack.c.l.b16 %v2087
        %v2604 = vunpack.c.l.b16 %v2088
        %v2605 = vunpack.c.l.b16 %v2089
        %v2606 = vunpack.c.l.b16 %v2090
        %v2607 = vunpack.c.l.b16 %v2091
        %v2608 = vunpack.c.l.b16 %v2092
        %v2609 = vunpack.c.l.b16 %v2093
        %v2610 = vunpack.c.l.b16 %v2094
        %v2611 = vunpack.c.l.b16 %v2095
        %v2612 = vunpack.c.l.b16 %v2096
        %v2613 = vunpack.c.l.b16 %v2097
        %v2614 = vunpack.c.l.b16 %v2098
        %v2615 = vunpack.c.l.b16 %v2099
        %v2616 = vunpack.c.l.b16 %v2100
        %v2617 = vunpack.c.l.b16 %v2101
        %v2618 = vunpack.c.l.b16 %v2102
        %v2619 = vunpack.c.l.b16 %v2103
        %v2620 = vunpack.c.l.b16 %v2104
        %v2621 = vunpack.c.l.b16 %v2105
        %v2622 = vunpack.c.l.b16 %v2106
        %v2623 = vunpack.c.l.b16 %v2107
        %v2624 = vunpack.c.l.b16 %v2108
        %v2625 = vunpack.c.l.b16 %v2109
        %v2626 = vunpack.c.l.b16 %v2110
        %v2627 = vunpack.c.l.b16 %v2111
        %v2628 = vunpack.c.l.b16 %v2112
        %v2629 = vunpack.c.l.b16 %v2113
        %v2630 = vunpack.c.l.b16 %v2114
        %v2631 = vunpack.c.l.b16 %v2115
        %v2632 = vunpack.c.l.b16 %v2116
        %v2633 = vunpack.c.l.b16 %v2117
        %v2634 = vunpack.c.l.b16 %v2118
        %v2635 = vunpack.c.l.b16 %v2119
        %v2636 = vunpack.c.l.b16 %v2120
        %v2637 = vunpack.c.l.b16 %v2121
        %v2638 = vunpack.c.l.b16 %v2122
        %v2639 = vunpack.c.l.b16 %v2123
        %v2640 = vunpack.c.l.b16 %v2124
        %v2641 = vunpack.c.l.b16 %v2125
        %v2642 = vunpack.c.l.b16 %v2126
        %v2643 = vunpack.c.l.b16 %v2127
        %v2644 = vunpack.c.l.b16 %v2128
        %v2645 = vunpack.c.l.b16 %v2129
        %v2646 = vunpack.c.l.b16 %v2130
        %v2647 = vunpack.c.l.b16 %v2131
        %v2648 = vunpack.c.l.b16 %v2132
        %v2649 = vunpack.c.l.b16 %v2133
        %v2650 = vunpack.c.l.b16 %v2134
        %v2651 = vunpack.c.l.b16 %v2135
        %v2652 = vunpack.c.l.b16 %v2136
        %v2653 = vunpack.c.l.b16 %v2137
        %v2654 = vunpack.c.l.b16 %v2138
        %v2655 = vunpack.c.l.b16 %v2139
        %v2656 = vunpack.c.l.b16 %v2140
        %v2657 = vunpack.c.l.b16 %v2141
        %v2658 = vunpack.c.l.b16 %v2142
        %v2659 = vunpack.c.l.b16 %v2143
        %v2660 = vunpack.c.l.b16 %v2144
        %v2661 = vunpack.c.l.b16 %v2145
        %v2662 = vunpack.c.l.b16 %v2146
        %v2663 = vunpack.c.l.b16 %v2147
        %v2664 = vunpack.c.l.b16 %v2148
        %v2665 = vunpack.c.l.b16 %v2149
        %v2666 = vunpack.c.l.b16 %v2150
        %v2667 = vunpack.c.l.b16 %v2151
        %v2668 = vunpack.c.l.b16 %v2152
        %v2669 = vunpack.c.l.b16 %v2153
        %v2670 = vunpack.c.l.b16 %v2154
        %v2671 = vunpack.c.l.b16 %v2155
        %v2672 = vunpack.c.l.b16 %v2156
        %v2673 = vunpack.c.l.b16 %v2157
        %v2674 = vunpack.c.l.b16 %v2158
        %v2675 = vunpack.c.l.b16 %v2159
        %v2676 = vunpack.c.l.b16 %v2160
        %v2677 = vunpack.c.l.b16 %v2161
        %v2678 = vunpack.c.l.b16 %v2162
        %v2679 = vunpack.c.l.b16 %v2163
        %v2680 = vunpack.c.l.b16 %v2164
        %v2681 = vunpack.c.l.b16 %v2165
        %v2682 = vunpack.c.l.b16 %v2166
        %v2683 = vunpack.c.l.b16 %v2167
        %v2684 = vunpack.c.l.b16 %v2168
        %v2685 = vunpack.c.l.b16 %v2169
        %v2686 = vunpack.c.l.b16 %v2170
        %v2687 = vunpack.c.l.b16 %v2171
        %v2688 = vunpack.c.l.b16 %v2172
        %v2689 = vunpack.c.l.b16 %v2173
        %v2690 = vunpack.c.l.b16 %v2174
        %v2691 = vunpack.c.l.b16 %v2175
        %v2692 = vunpack.c.l.b16 %v2176
        %v2693 = vunpack.c.l.b16 %v2177
        %v2694 = vunpack.c.l.b16 %v2178
        %v2695 = vunpack.c.l.b16 %v2179
        %v2696 = vunpack.c.l.b16 %v2180
        %v2697 = vunpack.c.l.b16 %v2181
        %v2698 = vunpack.c.l.b16 %v2182
        %v2699 = vunpack.c.l.b16 %v2183
        %v2700 = vunpack.c.l.b16 %v2184
        %v2701 = vunpack.c.l.b16 %v2185
        %v2702 = vunpack.c.l.b16 %v2186
        %v2703 = vunpack.c.l.b16 %v2187
        %v2704 = vunpack.c.l.b16 %v2188
        %v2705 = vunpack.c.l.b16 %v2189
        %v2706 = vunpack.c.l.b16 %v2190
        %v2707 = vunpack.c.l.b16 %v2191
        %v2708 = vunpack.c.l.b16 %v2192
        %v2709 = vunpack.c.l.b16 %v2193
        %v2710 = vunpack.c.l.b16 %v2194
        %v2711 = vunpack.c.l.b16 %v2195
        %v2712 = vunpack.c.l.b16 %v2196
        %v2713 = vpack.c.b16 %v2458, %v2457
        %v2714 = vpack.c.b16 %v2460, %v2459
        %v2715 = vpack.c.b16 %v2462, %v2461
        %v2716 = vpack.c.b16 %v2464, %v2463
        %v2717 = vpack.c.b16 %v2466, %v2465
        %v2718 = vpack.c.b16 %v2468, %v2467
        %v2719 = vpack.c.b16 %v2470, %v2469
        %v2720 = vpack.c.b16 %v2472, %v2471
        %v2721 = vpack.c.b16 %v2474, %v2473
        %v2722 = vpack.c.b16 %v2476, %v2475
        %v2723 = vpack.c.b16 %v2478, %v2477
        %v2724 = vpack.c.b16 %v2480, %v2479
        %v2725 = vpack.c.b16 %v2482, %v2481
        %v2726 = vpack.c.b16 %v2484, %v2483
        %v2727 = vpack.c.b16 %v2486, %v2485
        %v2728 = vpack.c.b16 %v2488, %v2487
        %v2729 = vpack.c.b16 %v2490, %v2489
        %v2730 = vpack.c.b16 %v2492, %v2491
        %v2731 = vpack.c.b16 %v2494, %v2493
        %v2732 = vpack.c.b16 %v2496, %v2495
        %v2733 = vpack.c.b16 %v2498, %v2497
        %v2734 = vpack.c.b16 %v2500, %v2499
        %v2735 = vpack.c.b16 %v2502, %v2501
        %v2736 = vpack.c.b16 %v2504, %v2503
        %v2737 = vpack.c.b16 %v2506, %v2505
        %v2738 = vpack.c.b16 %v2508, %v2507
        %v2739 = vpack.c.b16 %v2510, %v2509
        %v2740 = vpack.c.b16 %v2512, %v2511
        %v2741 = vpack.c.b16 %v2514, %v2513
        %v2742 = vpack.c.b16 %v2516, %v2515
        %v2743 = vpack.c.b16 %v2518, %v2517
        %v2744 = vpack.c.b16 %v2520, %v2519
        %v2745 = vpack.c.b16 %v2522, %v2521
        %v2746 = vpack.c.b16 %v2524, %v2523
        %v2747 = vpack.c.b16 %v2526, %v2525
        %v2748 = vpack.c.b16 %v2528, %v2527
        %v2749 = vpack.c.b16 %v2530, %v2529
        %v2750 = vpack.c.b16 %v2532, %v2531
        %v2751 = vpack.c.b16 %v2534, %v2533
        %v2752 = vpack.c.b16 %v2536, %v2535
        %v2753 = vpack.c.b16 %v2538, %v2537
        %v2754 = vpack.c.b16 %v2540, %v2539
        %v2755 = vpack.c.b16 %v2542, %v2541
        %v2756 = vpack.c.b16 %v2544, %v2543
        %v2757 = vpack.c.b16 %v2546, %v2545
        %v2758 = vpack.c.b16 %v2548, %v2547
        %v2759 = vpack.c.b16 %v2550, %v2549
        %v2760 = vpack.c.b16 %v2552, %v2551
        %v2761 = vpack.c.b16 %v2554, %v2553
        %v2762 = vpack.c.b16 %v2556, %v2555
        %v2763 = vpack.c.b16 %v2558, %v2557
        %v2764 = vpack.c.b16 %v2560, %v2559
        %v2765 = vpack.c.b16 %v2562, %v2561
        %v2766 = vpack.c.b16 %v2564, %v2563
        %v2767 = vpack.c.b16 %v2566, %v2565
        %v2768 = vpack.c.b16 %v2568, %v2567
        %v2769 = vpack.c.b16 %v2570, %v2569
        %v2770 = vpack.c.b16 %v2572, %v2571
        %v2771 = vpack.c.b16 %v2574, %v2573
        %v2772 = vpack.c.b16 %v2576, %v2575
        %v2773 = vpack.c.b16 %v2578, %v2577
        %v2774 = vpack.c.b16 %v2580, %v2579
        %v2775 = vpack.c.b16 %v2582, %v2581
        %v2776 = vpack.c.b16 %v2584, %v2583
        %v2777 = vpack.c.b16 %v2586, %v2585
        %v2778 = vpack.c.b16 %v2588, %v2587
        %v2779 = vpack.c.b16 %v2590, %v2589
        %v2780 = vpack.c.b16 %v2592, %v2591
        %v2781 = vpack.c.b16 %v2594, %v2593
        %v2782 = vpack.c.b16 %v2596, %v2595
        %v2783 = vpack.c.b16 %v2598, %v2597
        %v2784 = vpack.c.b16 %v2600, %v2599
        %v2785 = vpack.c.b16 %v2602, %v2601
        %v2786 = vpack.c.b16 %v2604, %v2603
        %v2787 = vpack.c.b16 %v2606, %v2605
        %v2788 = vpack.c.b16 %v2608, %v2607
        %v2789 = vpack.c.b16 %v2610, %v2609
        %v2790 = vpack.c.b16 %v2612, %v2611
        %v2791 = vpack.c.b16 %v2614, %v2613
        %v2792 = vpack.c.b16 %v2616, %v2615
        %v2793 = vpack.c.b16 %v2618, %v2617
        %v2794 = vpack.c.b16 %v2620, %v2619
        %v2795 = vpack.c.b16 %v2622, %v2621
        %v2796 = vpack.c.b16 %v2624, %v2623
        %v2797 = vpack.c.b16 %v2626, %v2625
        %v2798 = vpack.c.b16 %v2628, %v2627
        %v2799 = vpack.c.b16 %v2630, %v2629
        %v2800 = vpack.c.b16 %v2632, %v2631
        %v2801 = vpack.c.b16 %v2634, %v2633
        %v2802 = vpack.c.b16 %v2636, %v2635
        %v2803 = vpack.c.b16 %v2638, %v2637
        %v2804 = vpack.c.b16 %v2640, %v2639
        %v2805 = vpack.c.b16 %v2642, %v2641
        %v2806 = vpack.c.b16 %v2644, %v2643
        %v2807 = vpack.c.b16 %v2646, %v2645
        %v2808 = vpack.c.b16 %v2648, %v2647
        %v2809 = vpack.c.b16 %v2650, %v2649
        %v2810 = vpack.c.b16 %v2652, %v2651
        %v2811 = vpack.c.b16 %v2654, %v2653
        %v2812 = vpack.c.b16 %v2656, %v2655
        %v2813 = vpack.c.b16 %v2658, %v2657
        %v2814 = vpack.c.b16 %v2660, %v2659
        %v2815 = vpack.c.b16 %v2662, %v2661
        %v2816 = vpack.c.b16 %v2664, %v2663
        %v2817 = vpack.c.b16 %v2666, %v2665
        %v2818 = vpack.c.b16 %v2668, %v2667
        %v2819 = vpack.c.b16 %v2670, %v2669
        %v2820 = vpack.c.b16 %v2672, %v2671
        %v2821 = vpack.c.b16 %v2674, %v2673
        %v2822 = vpack.c.b16 %v2676, %v2675
        %v2823 = vpack.c.b16 %v2678, %v2677
        %v2824 = vpack.c.b16 %v2680, %v2679
        %v2825 = vpack.c.b16 %v2682, %v2681
        %v2826 = vpack.c.b16 %v2684, %v2683
        %v2827 = vpack.c.b16 %v2686, %v2685
        %v2828 = vpack.c.b16 %v2688, %v2687
        %v2829 = vpack.c.b16 %v2690, %v2689
        %v2830 = vpack.c.b16 %v2692, %v2691
        %v2831 = vpack.c.b16 %v2694, %v2693
        %v2832 = vpack.c.b16 %v2696, %v2695
        %v2833 = vpack.c.b16 %v2698, %v2697
        %v2834 = vpack.c.b16 %v2700, %v2699
        %v2835 = vpack.c.b16 %v2702, %v2701
        %v2836 = vpack.c.b16 %v2704, %v2703
        %v2837 = vpack.c.b16 %v2706, %v2705
        %v2838 = vpack.c.b16 %v2708, %v2707
        %v2839 = vpack.c.b16 %v2710, %v2709
        %v2840 = vpack.c.b16 %v2712, %v2711
        %2969 = vmatprep.subr.bf16.mxu0 0
        %2970 = vmatpush1.bf16.msra.mxu0 %v2720
        %2971 = vmatprep.subr.bf16.mxu0 0
        %2972 = vmatpush1.bf16.msra.mxu0 %v2719
        %2973 = vmatprep.subr.bf16.mxu0 0
        %2974 = vmatpush1.bf16.msra.mxu0 %v2718
        %2975 = vmatprep.subr.bf16.mxu0 0
        %2976 = vmatpush1.bf16.msra.mxu0 %v2717
        %2977 = vmatprep.subr.bf16.mxu0 0
        %2978 = vmatpush1.bf16.msra.mxu0 %v2716
        %2979 = vmatprep.subr.bf16.mxu0 0
        %2980 = vmatpush1.bf16.msra.mxu0 %v2715
        %2981 = vmatprep.subr.bf16.mxu0 0
        %2982 = vmatpush1.bf16.msra.mxu0 %v2714
        %2983 = vmatprep.subr.bf16.mxu0 0
        %2984 = vmatpush1.bf16.msra.mxu0 %v2713
        %2985 = vmatprep.subr.bf16.mxu0 0
        %2986 = vmatpush2.bf16.msra.mxu0 %v2728
        %2987 = vmatprep.subr.bf16.mxu0 0
        %2988 = vmatpush2.bf16.msra.mxu0 %v2727
        %2989 = vmatprep.subr.bf16.mxu0 0
        %2990 = vmatpush2.bf16.msra.mxu0 %v2726
        %2991 = vmatprep.subr.bf16.mxu0 0
        %2992 = vmatpush2.bf16.msra.mxu0 %v2725
        %2993 = vmatprep.subr.bf16.mxu0 0
        %2994 = vmatpush2.bf16.msra.mxu0 %v2724
        %2995 = vmatprep.subr.bf16.mxu0 0
        %2996 = vmatpush2.bf16.msra.mxu0 %v2723
        %2997 = vmatprep.subr.bf16.mxu0 0
        %2998 = vmatpush2.bf16.msra.mxu0 %v2722
        %2999 = vmatprep.subr.bf16.mxu0 0
        %3000 = vmatpush2.bf16.msra.mxu0 %v2721
        %3001 = vmatprep.mubr.bf16.mxu0 %v1926
        %3002 = vmatmul.mubr.bf16.gmra.mxu0 %v1925
        %v3003 = vpop.f32.mrf.mxu0
        %v3004 = vadd.f32 %v2200, %v3003
        %v3005 = vpop.f32.mrf.mxu0
        %v3006 = vpop.f32.mrf.mxu0
        %v3007 = vpop.f32.mrf.mxu0
        %3008 = vdwg.mxu0
        %3009 = vmatprep.subr.bf16.mxu0 0
        %3010 = vmatpush1.bf16.msra.mxu0 %v2736
        %3011 = vmatprep.subr.bf16.mxu0 0
        %3012 = vmatpush1.bf16.msra.mxu0 %v2735
        %3013 = vmatprep.subr.bf16.mxu0 0
        %3014 = vmatpush1.bf16.msra.mxu0 %v2734
        %3015 = vmatprep.subr.bf16.mxu0 0
        %3016 = vmatpush1.bf16.msra.mxu0 %v2733
        %3017 = vmatprep.subr.bf16.mxu0 0
        %3018 = vmatpush1.bf16.msra.mxu0 %v2732
        %3019 = vmatprep.subr.bf16.mxu0 0
        %3020 = vmatpush1.bf16.msra.mxu0 %v2731
        %3021 = vmatprep.subr.bf16.mxu0 0
        %3022 = vmatpush1.bf16.msra.mxu0 %v2730
        %3023 = vmatprep.subr.bf16.mxu0 0
        %3024 = vmatpush1.bf16.msra.mxu0 %v2729
        %3025 = vmatprep.subr.bf16.mxu0 0
        %3026 = vmatpush2.bf16.msra.mxu0 %v2744
        %3027 = vmatprep.subr.bf16.mxu0 0
        %3028 = vmatpush2.bf16.msra.mxu0 %v2743
        %3029 = vmatprep.subr.bf16.mxu0 0
        %3030 = vmatpush2.bf16.msra.mxu0 %v2742
        %3031 = vmatprep.subr.bf16.mxu0 0
        %3032 = vmatpush2.bf16.msra.mxu0 %v2741
        %3033 = vmatprep.subr.bf16.mxu0 0
        %3034 = vmatpush2.bf16.msra.mxu0 %v2740
        %3035 = vmatprep.subr.bf16.mxu0 0
        %3036 = vmatpush2.bf16.msra.mxu0 %v2739
        %3037 = vmatprep.subr.bf16.mxu0 0
        %3038 = vmatpush2.bf16.msra.mxu0 %v2738
        %3039 = vmatprep.subr.bf16.mxu0 0
        %3040 = vmatpush2.bf16.msra.mxu0 %v2737
        %3041 = vmatprep.mubr.bf16.mxu0 %v1928
        %3042 = vmatmul.mubr.bf16.gmra.mxu0 %v1927
        %v3043 = vpop.f32.mrf.mxu0
        %v3044 = vadd.f32 %v3004, %v3043
        %v3045 = vpop.f32.mrf.mxu0
        %v3046 = vpop.f32.mrf.mxu0
        %v3047 = vpop.f32.mrf.mxu0
        %3048 = vdwg.mxu0
        %3049 = vmatprep.subr.bf16.mxu0 0
        %3050 = vmatpush1.bf16.msra.mxu0 %v2752
        %3051 = vmatprep.subr.bf16.mxu0 0
        %3052 = vmatpush1.bf16.msra.mxu0 %v2751
        %3053 = vmatprep.subr.bf16.mxu0 0
        %3054 = vmatpush1.bf16.msra.mxu0 %v2750
        %3055 = vmatprep.subr.bf16.mxu0 0
        %3056 = vmatpush1.bf16.msra.mxu0 %v2749
        %3057 = vmatprep.subr.bf16.mxu0 0
        %3058 = vmatpush1.bf16.msra.mxu0 %v2748
        %3059 = vmatprep.subr.bf16.mxu0 0
        %3060 = vmatpush1.bf16.msra.mxu0 %v2747
        %3061 = vmatprep.subr.bf16.mxu0 0
        %3062 = vmatpush1.bf16.msra.mxu0 %v2746
        %3063 = vmatprep.subr.bf16.mxu0 0
        %3064 = vmatpush1.bf16.msra.mxu0 %v2745
        %3065 = vmatprep.subr.bf16.mxu0 0
        %3066 = vmatpush2.bf16.msra.mxu0 %v2760
        %3067 = vmatprep.subr.bf16.mxu0 0
        %3068 = vmatpush2.bf16.msra.mxu0 %v2759
        %3069 = vmatprep.subr.bf16.mxu0 0
        %3070 = vmatpush2.bf16.msra.mxu0 %v2758
        %3071 = vmatprep.subr.bf16.mxu0 0
        %3072 = vmatpush2.bf16.msra.mxu0 %v2757
        %3073 = vmatprep.subr.bf16.mxu0 0
        %3074 = vmatpush2.bf16.msra.mxu0 %v2756
        %3075 = vmatprep.subr.bf16.mxu0 0
        %3076 = vmatpush2.bf16.msra.mxu0 %v2755
        %3077 = vmatprep.subr.bf16.mxu0 0
        %3078 = vmatpush2.bf16.msra.mxu0 %v2754
        %3079 = vmatprep.subr.bf16.mxu0 0
        %3080 = vmatpush2.bf16.msra.mxu0 %v2753
        %3081 = vmatprep.mubr.bf16.mxu0 %v1930
        %3082 = vmatmul.mubr.bf16.gmra.mxu0 %v1929
        %v3083 = vpop.f32.mrf.mxu0
        %v3084 = vadd.f32 %v3044, %v3083
        %v3085 = vpop.f32.mrf.mxu0
        %v3086 = vpop.f32.mrf.mxu0
        %v3087 = vpop.f32.mrf.mxu0
        %3088 = vdwg.mxu0
        %3089 = vmatprep.subr.bf16.mxu0 0
        %3090 = vmatpush1.bf16.msra.mxu0 %v2768
        %3091 = vmatprep.subr.bf16.mxu0 0
        %3092 = vmatpush1.bf16.msra.mxu0 %v2767
        %3093 = vmatprep.subr.bf16.mxu0 0
        %3094 = vmatpush1.bf16.msra.mxu0 %v2766
        %3095 = vmatprep.subr.bf16.mxu0 0
        %3096 = vmatpush1.bf16.msra.mxu0 %v2765
        %3097 = vmatprep.subr.bf16.mxu0 0
        %3098 = vmatpush1.bf16.msra.mxu0 %v2764
        %3099 = vmatprep.subr.bf16.mxu0 0
        %3100 = vmatpush1.bf16.msra.mxu0 %v2763
        %3101 = vmatprep.subr.bf16.mxu0 0
        %3102 = vmatpush1.bf16.msra.mxu0 %v2762
        %3103 = vmatprep.subr.bf16.mxu0 0
        %3104 = vmatpush1.bf16.msra.mxu0 %v2761
        %3105 = vmatprep.subr.bf16.mxu0 0
        %3106 = vmatpush2.bf16.msra.mxu0 %v2776
        %3107 = vmatprep.subr.bf16.mxu0 0
        %3108 = vmatpush2.bf16.msra.mxu0 %v2775
        %3109 = vmatprep.subr.bf16.mxu0 0
        %3110 = vmatpush2.bf16.msra.mxu0 %v2774
        %3111 = vmatprep.subr.bf16.mxu0 0
        %3112 = vmatpush2.bf16.msra.mxu0 %v2773
        %3113 = vmatprep.subr.bf16.mxu0 0
        %3114 = vmatpush2.bf16.msra.mxu0 %v2772
        %3115 = vmatprep.subr.bf16.mxu0 0
        %3116 = vmatpush2.bf16.msra.mxu0 %v2771
        %3117 = vmatprep.subr.bf16.mxu0 0
        %3118 = vmatpush2.bf16.msra.mxu0 %v2770
        %3119 = vmatprep.subr.bf16.mxu0 0
        %3120 = vmatpush2.bf16.msra.mxu0 %v2769
        %3121 = vmatprep.mubr.bf16.mxu0 %v1932
        %3122 = vmatmul.mubr.bf16.gmra.mxu0 %v1931
        %v3123 = vpop.f32.mrf.mxu0
        %v3124 = vadd.f32 %v3084, %v3123
        %v3125 = vpop.f32.mrf.mxu0
        %v3126 = vpop.f32.mrf.mxu0
        %v3127 = vpop.f32.mrf.mxu0
        %3128 = vdwg.mxu0
        %3129 = vmatprep.subr.bf16.mxu0 0
        %3130 = vmatpush1.bf16.msra.mxu0 %v2784
        %3131 = vmatprep.subr.bf16.mxu0 0
        %3132 = vmatpush1.bf16.msra.mxu0 %v2783
        %3133 = vmatprep.subr.bf16.mxu0 0
        %3134 = vmatpush1.bf16.msra.mxu0 %v2782
        %3135 = vmatprep.subr.bf16.mxu0 0
        %3136 = vmatpush1.bf16.msra.mxu0 %v2781
        %3137 = vmatprep.subr.bf16.mxu0 0
        %3138 = vmatpush1.bf16.msra.mxu0 %v2780
        %3139 = vmatprep.subr.bf16.mxu0 0
        %3140 = vmatpush1.bf16.msra.mxu0 %v2779
        %3141 = vmatprep.subr.bf16.mxu0 0
        %3142 = vmatpush1.bf16.msra.mxu0 %v2778
        %3143 = vmatprep.subr.bf16.mxu0 0
        %3144 = vmatpush1.bf16.msra.mxu0 %v2777
        %3145 = vmatprep.subr.bf16.mxu0 0
        %3146 = vmatpush2.bf16.msra.mxu0 %v2792
        %3147 = vmatprep.subr.bf16.mxu0 0
        %3148 = vmatpush2.bf16.msra.mxu0 %v2791
        %3149 = vmatprep.subr.bf16.mxu0 0
        %3150 = vmatpush2.bf16.msra.mxu0 %v2790
        %3151 = vmatprep.subr.bf16.mxu0 0
        %3152 = vmatpush2.bf16.msra.mxu0 %v2789
        %3153 = vmatprep.subr.bf16.mxu0 0
        %3154 = vmatpush2.bf16.msra.mxu0 %v2788
        %3155 = vmatprep.subr.bf16.mxu0 0
        %3156 = vmatpush2.bf16.msra.mxu0 %v2787
        %3157 = vmatprep.subr.bf16.mxu0 0
        %3158 = vmatpush2.bf16.msra.mxu0 %v2786
        %3159 = vmatprep.subr.bf16.mxu0 0
        %3160 = vmatpush2.bf16.msra.mxu0 %v2785
        %3161 = vmatprep.mubr.bf16.mxu0 %v1934
        %3162 = vmatmul.mubr.bf16.gmra.mxu0 %v1933
        %v3163 = vpop.f32.mrf.mxu0
        %v3164 = vadd.f32 %v3124, %v3163
        %v3165 = vpop.f32.mrf.mxu0
        %v3166 = vpop.f32.mrf.mxu0
        %v3167 = vpop.f32.mrf.mxu0
        %3168 = vdwg.mxu0
        %3169 = vmatprep.subr.bf16.mxu0 0
        %3170 = vmatpush1.bf16.msra.mxu0 %v2800
        %3171 = vmatprep.subr.bf16.mxu0 0
        %3172 = vmatpush1.bf16.msra.mxu0 %v2799
        %3173 = vmatprep.subr.bf16.mxu0 0
        %3174 = vmatpush1.bf16.msra.mxu0 %v2798
        %3175 = vmatprep.subr.bf16.mxu0 0
        %3176 = vmatpush1.bf16.msra.mxu0 %v2797
        %3177 = vmatprep.subr.bf16.mxu0 0
        %3178 = vmatpush1.bf16.msra.mxu0 %v2796
        %3179 = vmatprep.subr.bf16.mxu0 0
        %3180 = vmatpush1.bf16.msra.mxu0 %v2795
        %3181 = vmatprep.subr.bf16.mxu0 0
        %3182 = vmatpush1.bf16.msra.mxu0 %v2794
        %3183 = vmatprep.subr.bf16.mxu0 0
        %3184 = vmatpush1.bf16.msra.mxu0 %v2793
        %3185 = vmatprep.subr.bf16.mxu0 0
        %3186 = vmatpush2.bf16.msra.mxu0 %v2808
        %3187 = vmatprep.subr.bf16.mxu0 0
        %3188 = vmatpush2.bf16.msra.mxu0 %v2807
        %3189 = vmatprep.subr.bf16.mxu0 0
        %3190 = vmatpush2.bf16.msra.mxu0 %v2806
        %3191 = vmatprep.subr.bf16.mxu0 0
        %3192 = vmatpush2.bf16.msra.mxu0 %v2805
        %3193 = vmatprep.subr.bf16.mxu0 0
        %3194 = vmatpush2.bf16.msra.mxu0 %v2804
        %3195 = vmatprep.subr.bf16.mxu0 0
        %3196 = vmatpush2.bf16.msra.mxu0 %v2803
        %3197 = vmatprep.subr.bf16.mxu0 0
        %3198 = vmatpush2.bf16.msra.mxu0 %v2802
        %3199 = vmatprep.subr.bf16.mxu0 0
        %3200 = vmatpush2.bf16.msra.mxu0 %v2801
        %3201 = vmatprep.mubr.bf16.mxu0 %v1936
        %3202 = vmatmul.mubr.bf16.gmra.mxu0 %v1935
        %v3203 = vpop.f32.mrf.mxu0
        %v3204 = vadd.f32 %v3164, %v3203
        %v3205 = vpop.f32.mrf.mxu0
        %v3206 = vpop.f32.mrf.mxu0
        %v3207 = vpop.f32.mrf.mxu0
        %3208 = vdwg.mxu0
        %3209 = vmatprep.subr.bf16.mxu0 0
        %3210 = vmatpush1.bf16.msra.mxu0 %v2816
        %3211 = vmatprep.subr.bf16.mxu0 0
        %3212 = vmatpush1.bf16.msra.mxu0 %v2815
        %3213 = vmatprep.subr.bf16.mxu0 0
        %3214 = vmatpush1.bf16.msra.mxu0 %v2814
        %3215 = vmatprep.subr.bf16.mxu0 0
        %3216 = vmatpush1.bf16.msra.mxu0 %v2813
        %3217 = vmatprep.subr.bf16.mxu0 0
        %3218 = vmatpush1.bf16.msra.mxu0 %v2812
        %3219 = vmatprep.subr.bf16.mxu0 0
        %3220 = vmatpush1.bf16.msra.mxu0 %v2811
        %3221 = vmatprep.subr.bf16.mxu0 0
        %3222 = vmatpush1.bf16.msra.mxu0 %v2810
        %3223 = vmatprep.subr.bf16.mxu0 0
        %3224 = vmatpush1.bf16.msra.mxu0 %v2809
        %3225 = vmatprep.subr.bf16.mxu0 0
        %3226 = vmatpush2.bf16.msra.mxu0 %v2824
        %3227 = vmatprep.subr.bf16.mxu0 0
        %3228 = vmatpush2.bf16.msra.mxu0 %v2823
        %3229 = vmatprep.subr.bf16.mxu0 0
        %3230 = vmatpush2.bf16.msra.mxu0 %v2822
        %3231 = vmatprep.subr.bf16.mxu0 0
        %3232 = vmatpush2.bf16.msra.mxu0 %v2821
        %3233 = vmatprep.subr.bf16.mxu0 0
        %3234 = vmatpush2.bf16.msra.mxu0 %v2820
        %3235 = vmatprep.subr.bf16.mxu0 0
        %3236 = vmatpush2.bf16.msra.mxu0 %v2819
        %3237 = vmatprep.subr.bf16.mxu0 0
        %3238 = vmatpush2.bf16.msra.mxu0 %v2818
        %3239 = vmatprep.subr.bf16.mxu0 0
        %3240 = vmatpush2.bf16.msra.mxu0 %v2817
        %3241 = vmatprep.mubr.bf16.mxu0 %v1938
        %3242 = vmatmul.mubr.bf16.gmra.mxu0 %v1937
        %v3243 = vpop.f32.mrf.mxu0
        %v3244 = vadd.f32 %v3204, %v3243
        %v3245 = vpop.f32.mrf.mxu0
        %v3246 = vpop.f32.mrf.mxu0
        %v3247 = vpop.f32.mrf.mxu0
        %3248 = vdwg.mxu0
        %3249 = vmatprep.subr.bf16.mxu0 0
        %3250 = vmatpush1.bf16.msra.mxu0 %v2832
        %3251 = vmatprep.subr.bf16.mxu0 0
        %3252 = vmatpush1.bf16.msra.mxu0 %v2831
        %3253 = vmatprep.subr.bf16.mxu0 0
        %3254 = vmatpush1.bf16.msra.mxu0 %v2830
        %3255 = vmatprep.subr.bf16.mxu0 0
        %3256 = vmatpush1.bf16.msra.mxu0 %v2829
        %3257 = vmatprep.subr.bf16.mxu0 0
        %3258 = vmatpush1.bf16.msra.mxu0 %v2828
        %3259 = vmatprep.subr.bf16.mxu0 0
        %3260 = vmatpush1.bf16.msra.mxu0 %v2827
        %3261 = vmatprep.subr.bf16.mxu0 0
        %3262 = vmatpush1.bf16.msra.mxu0 %v2826
        %3263 = vmatprep.subr.bf16.mxu0 0
        %3264 = vmatpush1.bf16.msra.mxu0 %v2825
        %3265 = vmatprep.subr.bf16.mxu0 0
        %3266 = vmatpush2.bf16.msra.mxu0 %v2840
        %3267 = vmatprep.subr.bf16.mxu0 0
        %3268 = vmatpush2.bf16.msra.mxu0 %v2839
        %3269 = vmatprep.subr.bf16.mxu0 0
        %3270 = vmatpush2.bf16.msra.mxu0 %v2838
        %3271 = vmatprep.subr.bf16.mxu0 0
        %3272 = vmatpush2.bf16.msra.mxu0 %v2837
        %3273 = vmatprep.subr.bf16.mxu0 0
        %3274 = vmatpush2.bf16.msra.mxu0 %v2836
        %3275 = vmatprep.subr.bf16.mxu0 0
        %3276 = vmatpush2.bf16.msra.mxu0 %v2835
        %3277 = vmatprep.subr.bf16.mxu0 0
        %3278 = vmatpush2.bf16.msra.mxu0 %v2834
        %3279 = vmatprep.subr.bf16.mxu0 0
        %3280 = vmatpush2.bf16.msra.mxu0 %v2833
        %3281 = vmatprep.mubr.bf16.mxu0 %v1940
        %3282 = vmatmul.mubr.bf16.gmra.mxu0 %v1939
        %v3283 = vpop.f32.mrf.mxu0
        %v3284 = vadd.f32 %v3244, %v3283
        %v3285 = vpop.f32.mrf.mxu0
        %v3286 = vpop.f32.mrf.mxu0
        %v3287 = vpop.f32.mrf.mxu0
        %3288 = vdwg.mxu0
        %v3289 = vadd.f32 %v1300, %v3284
        %v3290 = vsel %vm491, %v3289, 0.0
        %3291 = vadd.xlane.f32.xlu0 %v3290
        %v3292 = vpop.xlane.xlu0 %3291
        %v3293 = vmul.f32 %v3292, %v1280
        %v3294 = vsub.f32 %v3289, %v3293
        %v3295 = vmul.f32 %v3294, %v3294
        %v3296 = vsel %vm491, %v3295, 0.0
        %3297 = vadd.xlane.f32.xlu0 %v3296
        %v3298 = vpop.xlane.xlu0 %3297
        %v3299 = vmul.f32 %v3298, %v1280
        %v3300 = vadd.f32 %v3299, 1e-05
        %v3301 = vrsqrt.pop %v3300
        %v3302 = vmul.f32 %v3294, %v3301
        %v3303 = vlaneseq
        %v3304 = vshrl.u32 %v3303, 7
        %v3305 = vsub.s32 4, %v3304
        %v3306 = vrot.slane %v466, %v3305
        %v3307 = vmul.f32 %v3302, %v3306
        %v3308 = vlaneseq
        %v3309 = vshrl.u32 %v3308, 7
        %v3310 = vsub.s32 5, %v3309
        %v3311 = vrot.slane %v466, %v3310
        %v3312 = vadd.f32 %v3307, %v3311
        %s3313 = scalar_lea.vmem %s9, 8
        %v3314 = vld [vmem:[%s3313] sm:$0x3f]
        %v3315 = vpack.c.bf16 %v3312, %v3312
        %s3316 = scalar_lea.vmem %s3, 16
        %v3317 = vld [vmem:[%s3316] sm:$0xf]
        %v3318 = vld [vmem:[%s3316 + $0x4] sm:$0xf]
        %v3319 = vld [vmem:[%s3316 + $0x8] sm:$0xf]
        %v3320 = vld [vmem:[%s3316 + $0xc] sm:$0xf]
        %s3321 = scalar_lea.vmem %s4, 1
        %v3322 = vld [vmem:[%s3321] sm:$0x1]
        %v3324 = vlaneseq
        %v3325 = vshrl.u32 %v3324, 7
        %v3326 = vsub.s32 0, %v3325
        %v3327 = vrot.slane %v3322, %v3326
        %v3333 = vunpack.c.l.b16 %v3317
        %v3334 = vunpack.c.l.b16 %v3318
        %v3335 = vunpack.c.l.b16 %v3319
        %v3336 = vunpack.c.l.b16 %v3320
        %v3337 = vpack.c.b16 %v3334, %v3333
        %v3338 = vpack.c.b16 %v3336, %v3335
        %v3342 = vsel %vm491, %v3315, 0
        %3344 = vmatprep.subr.bf16.mxu0 0
        %3345 = vmatpush1.bf16.msra.mxu0 0
        %3346 = vmatprep.subr.bf16.mxu0 0
        %3347 = vmatpush1.bf16.msra.mxu0 0
        %3348 = vmatprep.subr.bf16.mxu0 0
        %3349 = vmatpush1.bf16.msra.mxu0 0
        %3350 = vmatprep.subr.bf16.mxu0 0
        %3351 = vmatpush1.bf16.msra.mxu0 0
        %3352 = vmatprep.subr.bf16.mxu0 0
        %3353 = vmatpush1.bf16.msra.mxu0 0
        %3354 = vmatprep.subr.bf16.mxu0 0
        %3355 = vmatpush1.bf16.msra.mxu0 0
        %3356 = vmatprep.subr.bf16.mxu0 0
        %3357 = vmatpush1.bf16.msra.mxu0 %v3338
        %3358 = vmatprep.subr.bf16.mxu0 0
        %3359 = vmatpush1.bf16.msra.mxu0 %v3337
        %3360 = vmatprep.subr.bf16.mxu0 0
        %3361 = vmatpush2.bf16.msra.mxu0 0
        %3362 = vmatprep.subr.bf16.mxu0 0
        %3363 = vmatpush2.bf16.msra.mxu0 0
        %3364 = vmatprep.subr.bf16.mxu0 0
        %3365 = vmatpush2.bf16.msra.mxu0 0
        %3366 = vmatprep.subr.bf16.mxu0 0
        %3367 = vmatpush2.bf16.msra.mxu0 0
        %3368 = vmatprep.subr.bf16.mxu0 0
        %3369 = vmatpush2.bf16.msra.mxu0 0
        %3370 = vmatprep.subr.bf16.mxu0 0
        %3371 = vmatpush2.bf16.msra.mxu0 0
        %3372 = vmatprep.subr.bf16.mxu0 0
        %3373 = vmatpush2.bf16.msra.mxu0 0
        %3374 = vmatprep.subr.bf16.mxu0 0
        %3375 = vmatpush2.bf16.msra.mxu0 0
        %3376 = vmatprep.mubr.bf16.mxu0 0
        %3377 = vmatmul.mubr.bf16.gmra.mxu0 %v3342
        %v3378 = vpop.f32.mrf.mxu0
        %v3379 = vadd.f32 %v3327, %v3378
        %v3380 = vpop.f32.mrf.mxu0
        %v3381 = vpop.f32.mrf.mxu0
        %v3382 = vpop.f32.mrf.mxu0
        %3383 = vdwg.mxu0
        %3385 = vrot.lane.b32.xlu0 %v3379, 96
        %v3386 = vpop.permute.xlu0 %3385
        %v3387 = vsel %vm538, %v3379, 0
        %v3389 = vsel %vm538, %v3386, 0
        %3391 = vmatprep.subr.mxu0 0.0
        %3392 = vmatpush1.xpose.msra.mxu0 0.0
        %3393 = vmatprep.subr.mxu0 0.0
        %3394 = vmatpush1.xpose.msra.mxu0 0.0
        %3395 = vmatprep.subr.mxu0 0.0
        %3396 = vmatpush1.xpose.msra.mxu0 0.0
        %3397 = vmatprep.subr.mxu0 0.0
        %3398 = vmatpush1.xpose.msra.mxu0 0.0
        %3399 = vmatprep.subr.mxu0 0.0
        %3400 = vmatpush1.xpose.msra.mxu0 0.0
        %3401 = vmatprep.subr.mxu0 0.0
        %3402 = vmatpush1.xpose.msra.mxu0 0.0
        %3403 = vmatprep.subr.mxu0 0.0
        %3404 = vmatpush1.xpose.msra.mxu0 0.0
        %3405 = vmatprep.subr.mxu0 0.0
        %3406 = vmatpush1.xpose.msra.mxu0 0.0
        %3407 = vmatprep.subr.mxu0 0.0
        %3408 = vmatpush1.xpose.msra.mxu0 0.0
        %3409 = vmatprep.subr.mxu0 0.0
        %3410 = vmatpush1.xpose.msra.mxu0 0.0
        %3411 = vmatprep.subr.mxu0 0.0
        %3412 = vmatpush1.xpose.msra.mxu0 0.0
        %3413 = vmatprep.subr.mxu0 0.0
        %3414 = vmatpush1.xpose.msra.mxu0 0.0
        %3415 = vmatprep.subr.mxu0 0.0
        %3416 = vmatpush1.xpose.msra.mxu0 0.0
        %3417 = vmatprep.subr.mxu0 0.0
        %3418 = vmatpush1.xpose.msra.mxu0 0.0
        %3419 = vmatprep.subr.mxu0 0.0
        %3420 = vmatpush1.xpose.msra.mxu0 0.0
        %3421 = vmatprep.subr.mxu0 0.0
        %3422 = vmatpush1.xpose.msra.mxu0 %v3389
        %3423 = vmatprep.subr.mxu0 0.0
        %3424 = vmatpush2.xpose.msra.mxu0 0.0
        %3425 = vmatprep.subr.mxu0 0.0
        %3426 = vmatpush2.xpose.msra.mxu0 0.0
        %3427 = vmatprep.subr.mxu0 0.0
        %3428 = vmatpush2.xpose.msra.mxu0 0.0
        %3429 = vmatprep.subr.mxu0 0.0
        %3430 = vmatpush2.xpose.msra.mxu0 0.0
        %3431 = vmatprep.subr.mxu0 0.0
        %3432 = vmatpush2.xpose.msra.mxu0 0.0
        %3433 = vmatprep.subr.mxu0 0.0
        %3434 = vmatpush2.xpose.msra.mxu0 0.0
        %3435 = vmatprep.subr.mxu0 0.0
        %3436 = vmatpush2.xpose.msra.mxu0 0.0
        %3437 = vmatprep.subr.mxu0 0.0
        %3438 = vmatpush2.xpose.msra.mxu0 0.0
        %3439 = vmatprep.subr.mxu0 0.0
        %3440 = vmatpush2.xpose.msra.mxu0 0.0
        %3441 = vmatprep.subr.mxu0 0.0
        %3442 = vmatpush2.xpose.msra.mxu0 0.0
        %3443 = vmatprep.subr.mxu0 0.0
        %3444 = vmatpush2.xpose.msra.mxu0 0.0
        %3445 = vmatprep.subr.mxu0 0.0
        %3446 = vmatpush2.xpose.msra.mxu0 0.0
        %3447 = vmatprep.subr.mxu0 0.0
        %3448 = vmatpush2.xpose.msra.mxu0 0.0
        %3449 = vmatprep.subr.mxu0 0.0
        %3450 = vmatpush2.xpose.msra.mxu0 0.0
        %3451 = vmatprep.subr.mxu0 0.0
        %3452 = vmatpush2.xpose.msra.mxu0 0.0
        %3453 = vmatprep.subr.mxu0 0.0
        %3454 = vmatpush2.xpose.msra.mxu0 0.0
        %3455 = vmatprep.mubr.f32.mxu0 0.0
        %3456 = vmatmul.mubr.f32.gmra.mxu0 %v3387
        %v3457 = vpop.f32.mrf.mxu0
        %v3458 = vadd.f32 0.0, %v3457
        %v3459 = vpop.f32.mrf.mxu0
        %3460 = vdwg.mxu0
        %v3461 = vsel %vm538, %v3458, -inf
        %3462 = vmax.xlane.f32.xlu0 %v3461
        %v3463 = vpop.xlane.xlu0 %3462
        %v3464 = vsub.f32 %v3458, %v3463
        %v3465 = vmul.f32 %v3464, 1.442695
        %v3466 = vpow.pop %v3465
        %v3467 = vsel %vm538, %v3466, 0.0
        %3468 = vadd.xlane.f32.xlu0 %v3467
        %v3469 = vpop.xlane.xlu0 %3468
        %v3470 = vrcp.pop %v3469
        %v3471 = vmul.f32 %v3466, %v3470
        %3472 = vrot.lane.b32.xlu0 %v3379, 64
        %v3473 = vpop.permute.xlu0 %3472
        %v3476 = vsel %vm538, %v3471, 0
        %3478 = vmatprep.subr.mxu0 0.0
        %3479 = vmatpush1.msra.mxu0 0.0
        %3480 = vmatprep.subr.mxu0 0.0
        %3481 = vmatpush1.msra.mxu0 0.0
        %3482 = vmatprep.subr.mxu0 0.0
        %3483 = vmatpush1.msra.mxu0 0.0
        %3484 = vmatprep.subr.mxu0 0.0
        %3485 = vmatpush1.msra.mxu0 0.0
        %3486 = vmatprep.subr.mxu0 0.0
        %3487 = vmatpush1.msra.mxu0 0.0
        %3488 = vmatprep.subr.mxu0 0.0
        %3489 = vmatpush1.msra.mxu0 0.0
        %3490 = vmatprep.subr.mxu0 0.0
        %3491 = vmatpush1.msra.mxu0 0.0
        %3492 = vmatprep.subr.mxu0 0.0
        %3493 = vmatpush1.msra.mxu0 0.0
        %3494 = vmatprep.subr.mxu0 0.0
        %3495 = vmatpush1.msra.mxu0 0.0
        %3496 = vmatprep.subr.mxu0 0.0
        %3497 = vmatpush1.msra.mxu0 0.0
        %3498 = vmatprep.subr.mxu0 0.0
        %3499 = vmatpush1.msra.mxu0 0.0
        %3500 = vmatprep.subr.mxu0 0.0
        %3501 = vmatpush1.msra.mxu0 0.0
        %3502 = vmatprep.subr.mxu0 0.0
        %3503 = vmatpush1.msra.mxu0 0.0
        %3504 = vmatprep.subr.mxu0 0.0
        %3505 = vmatpush1.msra.mxu0 0.0
        %3506 = vmatprep.subr.mxu0 0.0
        %3507 = vmatpush1.msra.mxu0 0.0
        %3508 = vmatprep.subr.mxu0 0.0
        %3509 = vmatpush1.msra.mxu0 %v3473
        %3510 = vmatprep.subr.mxu0 0.0
        %3511 = vmatpush2.msra.mxu0 0.0
        %3512 = vmatprep.subr.mxu0 0.0
        %3513 = vmatpush2.msra.mxu0 0.0
        %3514 = vmatprep.subr.mxu0 0.0
        %3515 = vmatpush2.msra.mxu0 0.0
        %3516 = vmatprep.subr.mxu0 0.0
        %3517 = vmatpush2.msra.mxu0 0.0
        %3518 = vmatprep.subr.mxu0 0.0
        %3519 = vmatpush2.msra.mxu0 0.0
        %3520 = vmatprep.subr.mxu0 0.0
        %3521 = vmatpush2.msra.mxu0 0.0
        %3522 = vmatprep.subr.mxu0 0.0
        %3523 = vmatpush2.msra.mxu0 0.0
        %3524 = vmatprep.subr.mxu0 0.0
        %3525 = vmatpush2.msra.mxu0 0.0
        %3526 = vmatprep.subr.mxu0 0.0
        %3527 = vmatpush2.msra.mxu0 0.0
        %3528 = vmatprep.subr.mxu0 0.0
        %3529 = vmatpush2.msra.mxu0 0.0
        %3530 = vmatprep.subr.mxu0 0.0
        %3531 = vmatpush2.msra.mxu0 0.0
        %3532 = vmatprep.subr.mxu0 0.0
        %3533 = vmatpush2.msra.mxu0 0.0
        %3534 = vmatprep.subr.mxu0 0.0
        %3535 = vmatpush2.msra.mxu0 0.0
        %3536 = vmatprep.subr.mxu0 0.0
        %3537 = vmatpush2.msra.mxu0 0.0
        %3538 = vmatprep.subr.mxu0 0.0
        %3539 = vmatpush2.msra.mxu0 0.0
        %3540 = vmatprep.subr.mxu0 0.0
        %3541 = vmatpush2.msra.mxu0 0.0
        %3542 = vmatprep.mubr.f32.mxu0 0.0
        %3543 = vmatmul.mubr.f32.gmra.mxu0 %v3476
        %v3544 = vpop.f32.mrf.mxu0
        %v3545 = vadd.f32 0.0, %v3544
        %v3546 = vpop.f32.mrf.mxu0
        %3547 = vdwg.mxu0
        %3548 = vrot.lane.b32.xlu0 %v3379, 120
        %v3549 = vpop.permute.xlu0 %3548
        %3550 = vrot.lane.b32.xlu0 %v3379, 88
        %v3551 = vpop.permute.xlu0 %3550
        %v3552 = vsel %vm538, %v3549, 0
        %v3554 = vsel %vm538, %v3551, 0
        %3556 = vmatprep.subr.mxu0 0.0
        %3557 = vmatpush1.xpose.msra.mxu0 0.0
        %3558 = vmatprep.subr.mxu0 0.0
        %3559 = vmatpush1.xpose.msra.mxu0 0.0
        %3560 = vmatprep.subr.mxu0 0.0
        %3561 = vmatpush1.xpose.msra.mxu0 0.0
        %3562 = vmatprep.subr.mxu0 0.0
        %3563 = vmatpush1.xpose.msra.mxu0 0.0
        %3564 = vmatprep.subr.mxu0 0.0
        %3565 = vmatpush1.xpose.msra.mxu0 0.0
        %3566 = vmatprep.subr.mxu0 0.0
        %3567 = vmatpush1.xpose.msra.mxu0 0.0
        %3568 = vmatprep.subr.mxu0 0.0
        %3569 = vmatpush1.xpose.msra.mxu0 0.0
        %3570 = vmatprep.subr.mxu0 0.0
        %3571 = vmatpush1.xpose.msra.mxu0 0.0
        %3572 = vmatprep.subr.mxu0 0.0
        %3573 = vmatpush1.xpose.msra.mxu0 0.0
        %3574 = vmatprep.subr.mxu0 0.0
        %3575 = vmatpush1.xpose.msra.mxu0 0.0
        %3576 = vmatprep.subr.mxu0 0.0
        %3577 = vmatpush1.xpose.msra.mxu0 0.0
        %3578 = vmatprep.subr.mxu0 0.0
        %3579 = vmatpush1.xpose.msra.mxu0 0.0
        %3580 = vmatprep.subr.mxu0 0.0
        %3581 = vmatpush1.xpose.msra.mxu0 0.0
        %3582 = vmatprep.subr.mxu0 0.0
        %3583 = vmatpush1.xpose.msra.mxu0 0.0
        %3584 = vmatprep.subr.mxu0 0.0
        %3585 = vmatpush1.xpose.msra.mxu0 0.0
        %3586 = vmatprep.subr.mxu0 0.0
        %3587 = vmatpush1.xpose.msra.mxu0 %v3554
        %3588 = vmatprep.subr.mxu0 0.0
        %3589 = vmatpush2.xpose.msra.mxu0 0.0
        %3590 = vmatprep.subr.mxu0 0.0
        %3591 = vmatpush2.xpose.msra.mxu0 0.0
        %3592 = vmatprep.subr.mxu0 0.0
        %3593 = vmatpush2.xpose.msra.mxu0 0.0
        %3594 = vmatprep.subr.mxu0 0.0
        %3595 = vmatpush2.xpose.msra.mxu0 0.0
        %3596 = vmatprep.subr.mxu0 0.0
        %3597 = vmatpush2.xpose.msra.mxu0 0.0
        %3598 = vmatprep.subr.mxu0 0.0
        %3599 = vmatpush2.xpose.msra.mxu0 0.0
        %3600 = vmatprep.subr.mxu0 0.0
        %3601 = vmatpush2.xpose.msra.mxu0 0.0
        %3602 = vmatprep.subr.mxu0 0.0
        %3603 = vmatpush2.xpose.msra.mxu0 0.0
        %3604 = vmatprep.subr.mxu0 0.0
        %3605 = vmatpush2.xpose.msra.mxu0 0.0
        %3606 = vmatprep.subr.mxu0 0.0
        %3607 = vmatpush2.xpose.msra.mxu0 0.0
        %3608 = vmatprep.subr.mxu0 0.0
        %3609 = vmatpush2.xpose.msra.mxu0 0.0
        %3610 = vmatprep.subr.mxu0 0.0
        %3611 = vmatpush2.xpose.msra.mxu0 0.0
        %3612 = vmatprep.subr.mxu0 0.0
        %3613 = vmatpush2.xpose.msra.mxu0 0.0
        %3614 = vmatprep.subr.mxu0 0.0
        %3615 = vmatpush2.xpose.msra.mxu0 0.0
        %3616 = vmatprep.subr.mxu0 0.0
        %3617 = vmatpush2.xpose.msra.mxu0 0.0
        %3618 = vmatprep.subr.mxu0 0.0
        %3619 = vmatpush2.xpose.msra.mxu0 0.0
        %3620 = vmatprep.mubr.f32.mxu0 0.0
        %3621 = vmatmul.mubr.f32.gmra.mxu0 %v3552
        %v3622 = vpop.f32.mrf.mxu0
        %v3623 = vadd.f32 0.0, %v3622
        %v3624 = vpop.f32.mrf.mxu0
        %3625 = vdwg.mxu0
        %v3626 = vsel %vm538, %v3623, -inf
        %3627 = vmax.xlane.f32.xlu0 %v3626
        %v3628 = vpop.xlane.xlu0 %3627
        %v3629 = vsub.f32 %v3623, %v3628
        %v3630 = vmul.f32 %v3629, 1.442695
        %v3631 = vpow.pop %v3630
        %v3632 = vsel %vm538, %v3631, 0.0
        %3633 = vadd.xlane.f32.xlu0 %v3632
        %v3634 = vpop.xlane.xlu0 %3633
        %v3635 = vrcp.pop %v3634
        %v3636 = vmul.f32 %v3631, %v3635
        %3637 = vrot.lane.b32.xlu0 %v3379, 56
        %v3638 = vpop.permute.xlu0 %3637
        %v3641 = vsel %vm538, %v3636, 0
        %3643 = vmatprep.subr.mxu0 0.0
        %3644 = vmatpush1.msra.mxu0 0.0
        %3645 = vmatprep.subr.mxu0 0.0
        %3646 = vmatpush1.msra.mxu0 0.0
        %3647 = vmatprep.subr.mxu0 0.0
        %3648 = vmatpush1.msra.mxu0 0.0
        %3649 = vmatprep.subr.mxu0 0.0
        %3650 = vmatpush1.msra.mxu0 0.0
        %3651 = vmatprep.subr.mxu0 0.0
        %3652 = vmatpush1.msra.mxu0 0.0
        %3653 = vmatprep.subr.mxu0 0.0
        %3654 = vmatpush1.msra.mxu0 0.0
        %3655 = vmatprep.subr.mxu0 0.0
        %3656 = vmatpush1.msra.mxu0 0.0
        %3657 = vmatprep.subr.mxu0 0.0
        %3658 = vmatpush1.msra.mxu0 0.0
        %3659 = vmatprep.subr.mxu0 0.0
        %3660 = vmatpush1.msra.mxu0 0.0
        %3661 = vmatprep.subr.mxu0 0.0
        %3662 = vmatpush1.msra.mxu0 0.0
        %3663 = vmatprep.subr.mxu0 0.0
        %3664 = vmatpush1.msra.mxu0 0.0
        %3665 = vmatprep.subr.mxu0 0.0
        %3666 = vmatpush1.msra.mxu0 0.0
        %3667 = vmatprep.subr.mxu0 0.0
        %3668 = vmatpush1.msra.mxu0 0.0
        %3669 = vmatprep.subr.mxu0 0.0
        %3670 = vmatpush1.msra.mxu0 0.0
        %3671 = vmatprep.subr.mxu0 0.0
        %3672 = vmatpush1.msra.mxu0 0.0
        %3673 = vmatprep.subr.mxu0 0.0
        %3674 = vmatpush1.msra.mxu0 %v3638
        %3675 = vmatprep.subr.mxu0 0.0
        %3676 = vmatpush2.msra.mxu0 0.0
        %3677 = vmatprep.subr.mxu0 0.0
        %3678 = vmatpush2.msra.mxu0 0.0
        %3679 = vmatprep.subr.mxu0 0.0
        %3680 = vmatpush2.msra.mxu0 0.0
        %3681 = vmatprep.subr.mxu0 0.0
        %3682 = vmatpush2.msra.mxu0 0.0
        %3683 = vmatprep.subr.mxu0 0.0
        %3684 = vmatpush2.msra.mxu0 0.0
        %3685 = vmatprep.subr.mxu0 0.0
        %3686 = vmatpush2.msra.mxu0 0.0
        %3687 = vmatprep.subr.mxu0 0.0
        %3688 = vmatpush2.msra.mxu0 0.0
        %3689 = vmatprep.subr.mxu0 0.0
        %3690 = vmatpush2.msra.mxu0 0.0
        %3691 = vmatprep.subr.mxu0 0.0
        %3692 = vmatpush2.msra.mxu0 0.0
        %3693 = vmatprep.subr.mxu0 0.0
        %3694 = vmatpush2.msra.mxu0 0.0
        %3695 = vmatprep.subr.mxu0 0.0
        %3696 = vmatpush2.msra.mxu0 0.0
        %3697 = vmatprep.subr.mxu0 0.0
        %3698 = vmatpush2.msra.mxu0 0.0
        %3699 = vmatprep.subr.mxu0 0.0
        %3700 = vmatpush2.msra.mxu0 0.0
        %3701 = vmatprep.subr.mxu0 0.0
        %3702 = vmatpush2.msra.mxu0 0.0
        %3703 = vmatprep.subr.mxu0 0.0
        %3704 = vmatpush2.msra.mxu0 0.0
        %3705 = vmatprep.subr.mxu0 0.0
        %3706 = vmatpush2.msra.mxu0 0.0
        %3707 = vmatprep.mubr.f32.mxu0 0.0
        %3708 = vmatmul.mubr.f32.gmra.mxu0 %v3641
        %v3709 = vpop.f32.mrf.mxu0
        %v3710 = vadd.f32 0.0, %v3709
        %v3711 = vpop.f32.mrf.mxu0
        %3712 = vdwg.mxu0
        %3713 = vrot.lane.b32.xlu0 %v3379, 112
        %v3714 = vpop.permute.xlu0 %3713
        %3715 = vrot.lane.b32.xlu0 %v3379, 80
        %v3716 = vpop.permute.xlu0 %3715
        %v3717 = vsel %vm538, %v3714, 0
        %v3719 = vsel %vm538, %v3716, 0
        %3721 = vmatprep.subr.mxu0 0.0
        %3722 = vmatpush1.xpose.msra.mxu0 0.0
        %3723 = vmatprep.subr.mxu0 0.0
        %3724 = vmatpush1.xpose.msra.mxu0 0.0
        %3725 = vmatprep.subr.mxu0 0.0
        %3726 = vmatpush1.xpose.msra.mxu0 0.0
        %3727 = vmatprep.subr.mxu0 0.0
        %3728 = vmatpush1.xpose.msra.mxu0 0.0
        %3729 = vmatprep.subr.mxu0 0.0
        %3730 = vmatpush1.xpose.msra.mxu0 0.0
        %3731 = vmatprep.subr.mxu0 0.0
        %3732 = vmatpush1.xpose.msra.mxu0 0.0
        %3733 = vmatprep.subr.mxu0 0.0
        %3734 = vmatpush1.xpose.msra.mxu0 0.0
        %3735 = vmatprep.subr.mxu0 0.0
        %3736 = vmatpush1.xpose.msra.mxu0 0.0
        %3737 = vmatprep.subr.mxu0 0.0
        %3738 = vmatpush1.xpose.msra.mxu0 0.0
        %3739 = vmatprep.subr.mxu0 0.0
        %3740 = vmatpush1.xpose.msra.mxu0 0.0
        %3741 = vmatprep.subr.mxu0 0.0
        %3742 = vmatpush1.xpose.msra.mxu0 0.0
        %3743 = vmatprep.subr.mxu0 0.0
        %3744 = vmatpush1.xpose.msra.mxu0 0.0
        %3745 = vmatprep.subr.mxu0 0.0
        %3746 = vmatpush1.xpose.msra.mxu0 0.0
        %3747 = vmatprep.subr.mxu0 0.0
        %3748 = vmatpush1.xpose.msra.mxu0 0.0
        %3749 = vmatprep.subr.mxu0 0.0
        %3750 = vmatpush1.xpose.msra.mxu0 0.0
        %3751 = vmatprep.subr.mxu0 0.0
        %3752 = vmatpush1.xpose.msra.mxu0 %v3719
        %3753 = vmatprep.subr.mxu0 0.0
        %3754 = vmatpush2.xpose.msra.mxu0 0.0
        %3755 = vmatprep.subr.mxu0 0.0
        %3756 = vmatpush2.xpose.msra.mxu0 0.0
        %3757 = vmatprep.subr.mxu0 0.0
        %3758 = vmatpush2.xpose.msra.mxu0 0.0
        %3759 = vmatprep.subr.mxu0 0.0
        %3760 = vmatpush2.xpose.msra.mxu0 0.0
        %3761 = vmatprep.subr.mxu0 0.0
        %3762 = vmatpush2.xpose.msra.mxu0 0.0
        %3763 = vmatprep.subr.mxu0 0.0
        %3764 = vmatpush2.xpose.msra.mxu0 0.0
        %3765 = vmatprep.subr.mxu0 0.0
        %3766 = vmatpush2.xpose.msra.mxu0 0.0
        %3767 = vmatprep.subr.mxu0 0.0
        %3768 = vmatpush2.xpose.msra.mxu0 0.0
        %3769 = vmatprep.subr.mxu0 0.0
        %3770 = vmatpush2.xpose.msra.mxu0 0.0
        %3771 = vmatprep.subr.mxu0 0.0
        %3772 = vmatpush2.xpose.msra.mxu0 0.0
        %3773 = vmatprep.subr.mxu0 0.0
        %3774 = vmatpush2.xpose.msra.mxu0 0.0
        %3775 = vmatprep.subr.mxu0 0.0
        %3776 = vmatpush2.xpose.msra.mxu0 0.0
        %3777 = vmatprep.subr.mxu0 0.0
        %3778 = vmatpush2.xpose.msra.mxu0 0.0
        %3779 = vmatprep.subr.mxu0 0.0
        %3780 = vmatpush2.xpose.msra.mxu0 0.0
        %3781 = vmatprep.subr.mxu0 0.0
        %3782 = vmatpush2.xpose.msra.mxu0 0.0
        %3783 = vmatprep.subr.mxu0 0.0
        %3784 = vmatpush2.xpose.msra.mxu0 0.0
        %3785 = vmatprep.mubr.f32.mxu0 0.0
        %3786 = vmatmul.mubr.f32.gmra.mxu0 %v3717
        %v3787 = vpop.f32.mrf.mxu0
        %v3788 = vadd.f32 0.0, %v3787
        %v3789 = vpop.f32.mrf.mxu0
        %3790 = vdwg.mxu0
        %v3791 = vsel %vm538, %v3788, -inf
        %3792 = vmax.xlane.f32.xlu0 %v3791
        %v3793 = vpop.xlane.xlu0 %3792
        %v3794 = vsub.f32 %v3788, %v3793
        %v3795 = vmul.f32 %v3794, 1.442695
        %v3796 = vpow.pop %v3795
        %v3797 = vsel %vm538, %v3796, 0.0
        %3798 = vadd.xlane.f32.xlu0 %v3797
        %v3799 = vpop.xlane.xlu0 %3798
        %v3800 = vrcp.pop %v3799
        %v3801 = vmul.f32 %v3796, %v3800
        %3802 = vrot.lane.b32.xlu0 %v3379, 48
        %v3803 = vpop.permute.xlu0 %3802
        %v3806 = vsel %vm538, %v3801, 0
        %3808 = vmatprep.subr.mxu0 0.0
        %3809 = vmatpush1.msra.mxu0 0.0
        %3810 = vmatprep.subr.mxu0 0.0
        %3811 = vmatpush1.msra.mxu0 0.0
        %3812 = vmatprep.subr.mxu0 0.0
        %3813 = vmatpush1.msra.mxu0 0.0
        %3814 = vmatprep.subr.mxu0 0.0
        %3815 = vmatpush1.msra.mxu0 0.0
        %3816 = vmatprep.subr.mxu0 0.0
        %3817 = vmatpush1.msra.mxu0 0.0
        %3818 = vmatprep.subr.mxu0 0.0
        %3819 = vmatpush1.msra.mxu0 0.0
        %3820 = vmatprep.subr.mxu0 0.0
        %3821 = vmatpush1.msra.mxu0 0.0
        %3822 = vmatprep.subr.mxu0 0.0
        %3823 = vmatpush1.msra.mxu0 0.0
        %3824 = vmatprep.subr.mxu0 0.0
        %3825 = vmatpush1.msra.mxu0 0.0
        %3826 = vmatprep.subr.mxu0 0.0
        %3827 = vmatpush1.msra.mxu0 0.0
        %3828 = vmatprep.subr.mxu0 0.0
        %3829 = vmatpush1.msra.mxu0 0.0
        %3830 = vmatprep.subr.mxu0 0.0
        %3831 = vmatpush1.msra.mxu0 0.0
        %3832 = vmatprep.subr.mxu0 0.0
        %3833 = vmatpush1.msra.mxu0 0.0
        %3834 = vmatprep.subr.mxu0 0.0
        %3835 = vmatpush1.msra.mxu0 0.0
        %3836 = vmatprep.subr.mxu0 0.0
        %3837 = vmatpush1.msra.mxu0 0.0
        %3838 = vmatprep.subr.mxu0 0.0
        %3839 = vmatpush1.msra.mxu0 %v3803
        %3840 = vmatprep.subr.mxu0 0.0
        %3841 = vmatpush2.msra.mxu0 0.0
        %3842 = vmatprep.subr.mxu0 0.0
        %3843 = vmatpush2.msra.mxu0 0.0
        %3844 = vmatprep.subr.mxu0 0.0
        %3845 = vmatpush2.msra.mxu0 0.0
        %3846 = vmatprep.subr.mxu0 0.0
        %3847 = vmatpush2.msra.mxu0 0.0
        %3848 = vmatprep.subr.mxu0 0.0
        %3849 = vmatpush2.msra.mxu0 0.0
        %3850 = vmatprep.subr.mxu0 0.0
        %3851 = vmatpush2.msra.mxu0 0.0
        %3852 = vmatprep.subr.mxu0 0.0
        %3853 = vmatpush2.msra.mxu0 0.0
        %3854 = vmatprep.subr.mxu0 0.0
        %3855 = vmatpush2.msra.mxu0 0.0
        %3856 = vmatprep.subr.mxu0 0.0
        %3857 = vmatpush2.msra.mxu0 0.0
        %3858 = vmatprep.subr.mxu0 0.0
        %3859 = vmatpush2.msra.mxu0 0.0
        %3860 = vmatprep.subr.mxu0 0.0
        %3861 = vmatpush2.msra.mxu0 0.0
        %3862 = vmatprep.subr.mxu0 0.0
        %3863 = vmatpush2.msra.mxu0 0.0
        %3864 = vmatprep.subr.mxu0 0.0
        %3865 = vmatpush2.msra.mxu0 0.0
        %3866 = vmatprep.subr.mxu0 0.0
        %3867 = vmatpush2.msra.mxu0 0.0
        %3868 = vmatprep.subr.mxu0 0.0
        %3869 = vmatpush2.msra.mxu0 0.0
        %3870 = vmatprep.subr.mxu0 0.0
        %3871 = vmatpush2.msra.mxu0 0.0
        %3872 = vmatprep.mubr.f32.mxu0 0.0
        %3873 = vmatmul.mubr.f32.gmra.mxu0 %v3806
        %v3874 = vpop.f32.mrf.mxu0
        %v3875 = vadd.f32 0.0, %v3874
        %v3876 = vpop.f32.mrf.mxu0
        %3877 = vdwg.mxu0
        %3878 = vrot.lane.b32.xlu0 %v3379, 104
        %v3879 = vpop.permute.xlu0 %3878
        %3880 = vrot.lane.b32.xlu0 %v3379, 72
        %v3881 = vpop.permute.xlu0 %3880
        %v3882 = vsel %vm538, %v3879, 0
        %v3884 = vsel %vm538, %v3881, 0
        %3886 = vmatprep.subr.mxu0 0.0
        %3887 = vmatpush1.xpose.msra.mxu0 0.0
        %3888 = vmatprep.subr.mxu0 0.0
        %3889 = vmatpush1.xpose.msra.mxu0 0.0
        %3890 = vmatprep.subr.mxu0 0.0
        %3891 = vmatpush1.xpose.msra.mxu0 0.0
        %3892 = vmatprep.subr.mxu0 0.0
        %3893 = vmatpush1.xpose.msra.mxu0 0.0
        %3894 = vmatprep.subr.mxu0 0.0
        %3895 = vmatpush1.xpose.msra.mxu0 0.0
        %3896 = vmatprep.subr.mxu0 0.0
        %3897 = vmatpush1.xpose.msra.mxu0 0.0
        %3898 = vmatprep.subr.mxu0 0.0
        %3899 = vmatpush1.xpose.msra.mxu0 0.0
        %3900 = vmatprep.subr.mxu0 0.0
        %3901 = vmatpush1.xpose.msra.mxu0 0.0
        %3902 = vmatprep.subr.mxu0 0.0
        %3903 = vmatpush1.xpose.msra.mxu0 0.0
        %3904 = vmatprep.subr.mxu0 0.0
        %3905 = vmatpush1.xpose.msra.mxu0 0.0
        %3906 = vmatprep.subr.mxu0 0.0
        %3907 = vmatpush1.xpose.msra.mxu0 0.0
        %3908 = vmatprep.subr.mxu0 0.0
        %3909 = vmatpush1.xpose.msra.mxu0 0.0
        %3910 = vmatprep.subr.mxu0 0.0
        %3911 = vmatpush1.xpose.msra.mxu0 0.0
        %3912 = vmatprep.subr.mxu0 0.0
        %3913 = vmatpush1.xpose.msra.mxu0 0.0
        %3914 = vmatprep.subr.mxu0 0.0
        %3915 = vmatpush1.xpose.msra.mxu0 0.0
        %3916 = vmatprep.subr.mxu0 0.0
        %3917 = vmatpush1.xpose.msra.mxu0 %v3884
        %3918 = vmatprep.subr.mxu0 0.0
        %3919 = vmatpush2.xpose.msra.mxu0 0.0
        %3920 = vmatprep.subr.mxu0 0.0
        %3921 = vmatpush2.xpose.msra.mxu0 0.0
        %3922 = vmatprep.subr.mxu0 0.0
        %3923 = vmatpush2.xpose.msra.mxu0 0.0
        %3924 = vmatprep.subr.mxu0 0.0
        %3925 = vmatpush2.xpose.msra.mxu0 0.0
        %3926 = vmatprep.subr.mxu0 0.0
        %3927 = vmatpush2.xpose.msra.mxu0 0.0
        %3928 = vmatprep.subr.mxu0 0.0
        %3929 = vmatpush2.xpose.msra.mxu0 0.0
        %3930 = vmatprep.subr.mxu0 0.0
        %3931 = vmatpush2.xpose.msra.mxu0 0.0
        %3932 = vmatprep.subr.mxu0 0.0
        %3933 = vmatpush2.xpose.msra.mxu0 0.0
        %3934 = vmatprep.subr.mxu0 0.0
        %3935 = vmatpush2.xpose.msra.mxu0 0.0
        %3936 = vmatprep.subr.mxu0 0.0
        %3937 = vmatpush2.xpose.msra.mxu0 0.0
        %3938 = vmatprep.subr.mxu0 0.0
        %3939 = vmatpush2.xpose.msra.mxu0 0.0
        %3940 = vmatprep.subr.mxu0 0.0
        %3941 = vmatpush2.xpose.msra.mxu0 0.0
        %3942 = vmatprep.subr.mxu0 0.0
        %3943 = vmatpush2.xpose.msra.mxu0 0.0
        %3944 = vmatprep.subr.mxu0 0.0
        %3945 = vmatpush2.xpose.msra.mxu0 0.0
        %3946 = vmatprep.subr.mxu0 0.0
        %3947 = vmatpush2.xpose.msra.mxu0 0.0
        %3948 = vmatprep.subr.mxu0 0.0
        %3949 = vmatpush2.xpose.msra.mxu0 0.0
        %3950 = vmatprep.mubr.f32.mxu0 0.0
        %3951 = vmatmul.mubr.f32.gmra.mxu0 %v3882
        %v3952 = vpop.f32.mrf.mxu0
        %v3953 = vadd.f32 0.0, %v3952
        %v3954 = vpop.f32.mrf.mxu0
        %3955 = vdwg.mxu0
        %v3956 = vsel %vm538, %v3953, -inf
        %3957 = vmax.xlane.f32.xlu0 %v3956
        %v3958 = vpop.xlane.xlu0 %3957
        %v3959 = vsub.f32 %v3953, %v3958
        %v3960 = vmul.f32 %v3959, 1.442695
        %v3961 = vpow.pop %v3960
        %v3962 = vsel %vm538, %v3961, 0.0
        %3963 = vadd.xlane.f32.xlu0 %v3962
        %v3964 = vpop.xlane.xlu0 %3963
        %v3965 = vrcp.pop %v3964
        %v3966 = vmul.f32 %v3961, %v3965
        %3967 = vrot.lane.b32.xlu0 %v3379, 40
        %v3968 = vpop.permute.xlu0 %3967
        %v3971 = vsel %vm538, %v3966, 0
        %3973 = vmatprep.subr.mxu0 0.0
        %3974 = vmatpush1.msra.mxu0 0.0
        %3975 = vmatprep.subr.mxu0 0.0
        %3976 = vmatpush1.msra.mxu0 0.0
        %3977 = vmatprep.subr.mxu0 0.0
        %3978 = vmatpush1.msra.mxu0 0.0
        %3979 = vmatprep.subr.mxu0 0.0
        %3980 = vmatpush1.msra.mxu0 0.0
        %3981 = vmatprep.subr.mxu0 0.0
        %3982 = vmatpush1.msra.mxu0 0.0
        %3983 = vmatprep.subr.mxu0 0.0
        %3984 = vmatpush1.msra.mxu0 0.0
        %3985 = vmatprep.subr.mxu0 0.0
        %3986 = vmatpush1.msra.mxu0 0.0
        %3987 = vmatprep.subr.mxu0 0.0
        %3988 = vmatpush1.msra.mxu0 0.0
        %3989 = vmatprep.subr.mxu0 0.0
        %3990 = vmatpush1.msra.mxu0 0.0
        %3991 = vmatprep.subr.mxu0 0.0
        %3992 = vmatpush1.msra.mxu0 0.0
        %3993 = vmatprep.subr.mxu0 0.0
        %3994 = vmatpush1.msra.mxu0 0.0
        %3995 = vmatprep.subr.mxu0 0.0
        %3996 = vmatpush1.msra.mxu0 0.0
        %3997 = vmatprep.subr.mxu0 0.0
        %3998 = vmatpush1.msra.mxu0 0.0
        %3999 = vmatprep.subr.mxu0 0.0
        %4000 = vmatpush1.msra.mxu0 0.0
        %4001 = vmatprep.subr.mxu0 0.0
        %4002 = vmatpush1.msra.mxu0 0.0
        %4003 = vmatprep.subr.mxu0 0.0
        %4004 = vmatpush1.msra.mxu0 %v3968
        %4005 = vmatprep.subr.mxu0 0.0
        %4006 = vmatpush2.msra.mxu0 0.0
        %4007 = vmatprep.subr.mxu0 0.0
        %4008 = vmatpush2.msra.mxu0 0.0
        %4009 = vmatprep.subr.mxu0 0.0
        %4010 = vmatpush2.msra.mxu0 0.0
        %4011 = vmatprep.subr.mxu0 0.0
        %4012 = vmatpush2.msra.mxu0 0.0
        %4013 = vmatprep.subr.mxu0 0.0
        %4014 = vmatpush2.msra.mxu0 0.0
        %4015 = vmatprep.subr.mxu0 0.0
        %4016 = vmatpush2.msra.mxu0 0.0
        %4017 = vmatprep.subr.mxu0 0.0
        %4018 = vmatpush2.msra.mxu0 0.0
        %4019 = vmatprep.subr.mxu0 0.0
        %4020 = vmatpush2.msra.mxu0 0.0
        %4021 = vmatprep.subr.mxu0 0.0
        %4022 = vmatpush2.msra.mxu0 0.0
        %4023 = vmatprep.subr.mxu0 0.0
        %4024 = vmatpush2.msra.mxu0 0.0
        %4025 = vmatprep.subr.mxu0 0.0
        %4026 = vmatpush2.msra.mxu0 0.0
        %4027 = vmatprep.subr.mxu0 0.0
        %4028 = vmatpush2.msra.mxu0 0.0
        %4029 = vmatprep.subr.mxu0 0.0
        %4030 = vmatpush2.msra.mxu0 0.0
        %4031 = vmatprep.subr.mxu0 0.0
        %4032 = vmatpush2.msra.mxu0 0.0
        %4033 = vmatprep.subr.mxu0 0.0
        %4034 = vmatpush2.msra.mxu0 0.0
        %4035 = vmatprep.subr.mxu0 0.0
        %4036 = vmatpush2.msra.mxu0 0.0
        %4037 = vmatprep.mubr.f32.mxu0 0.0
        %4038 = vmatmul.mubr.f32.gmra.mxu0 %v3971
        %v4039 = vpop.f32.mrf.mxu0
        %v4040 = vadd.f32 0.0, %v4039
        %v4041 = vpop.f32.mrf.mxu0
        %4042 = vdwg.mxu0
        %4044 = vrot.lane.b32.xlu0 %v3710, 8
        %v4045 = vpop.permute.xlu0 %4044
        %4048 = vrot.lane.b32.xlu0 %v3875, 16
        %v4049 = vpop.permute.xlu0 %4048
        %4052 = vrot.lane.b32.xlu0 %v4040, 24
        %v4053 = vpop.permute.xlu0 %4052
        %v4055 = vsel %vm538, %v3545, %v4045
        %v4056 = vsel %vm1208, %v4055, %v4049
        %v4057 = vsel %vm1210, %v4056, %v4053
        %v4058 = vpack.c.bf16 %v4057, %v4057
        %s4059 = scalar_lea.vmem %s5, 16
        %v4060 = vld [vmem:[%s4059] sm:$0xf]
        %v4061 = vld [vmem:[%s4059 + $0x4] sm:$0xf]
        %v4062 = vld [vmem:[%s4059 + $0x8] sm:$0xf]
        %v4063 = vld [vmem:[%s4059 + $0xc] sm:$0xf]
        %v4064 = vlaneseq
        %v4065 = vshrl.u32 %v4064, 7
        %v4066 = vsub.s32 0, %v4065
        %v4067 = vrot.slane %v3314, %v4066
        %v4072 = vunpack.c.l.b16 %v4060
        %v4073 = vunpack.c.l.b16 %v4061
        %v4074 = vunpack.c.l.b16 %v4062
        %v4075 = vunpack.c.l.b16 %v4063
        %v4076 = vpack.c.b16 %v4073, %v4072
        %v4077 = vpack.c.b16 %v4075, %v4074
        %v4081 = vsel %vm491, %v4058, 0
        %4083 = vmatprep.subr.bf16.mxu0 0
        %4084 = vmatpush1.bf16.msra.mxu0 0
        %4085 = vmatprep.subr.bf16.mxu0 0
        %4086 = vmatpush1.bf16.msra.mxu0 0
        %4087 = vmatprep.subr.bf16.mxu0 0
        %4088 = vmatpush1.bf16.msra.mxu0 0
        %4089 = vmatprep.subr.bf16.mxu0 0
        %4090 = vmatpush1.bf16.msra.mxu0 0
        %4091 = vmatprep.subr.bf16.mxu0 0
        %4092 = vmatpush1.bf16.msra.mxu0 0
        %4093 = vmatprep.subr.bf16.mxu0 0
        %4094 = vmatpush1.bf16.msra.mxu0 0
        %4095 = vmatprep.subr.bf16.mxu0 0
        %4096 = vmatpush1.bf16.msra.mxu0 %v4077
        %4097 = vmatprep.subr.bf16.mxu0 0
        %4098 = vmatpush1.bf16.msra.mxu0 %v4076
        %4099 = vmatprep.subr.bf16.mxu0 0
        %4100 = vmatpush2.bf16.msra.mxu0 0
        %4101 = vmatprep.subr.bf16.mxu0 0
        %4102 = vmatpush2.bf16.msra.mxu0 0
        %4103 = vmatprep.subr.bf16.mxu0 0
        %4104 = vmatpush2.bf16.msra.mxu0 0
        %4105 = vmatprep.subr.bf16.mxu0 0
        %4106 = vmatpush2.bf16.msra.mxu0 0
        %4107 = vmatprep.subr.bf16.mxu0 0
        %4108 = vmatpush2.bf16.msra.mxu0 0
        %4109 = vmatprep.subr.bf16.mxu0 0
        %4110 = vmatpush2.bf16.msra.mxu0 0
        %4111 = vmatprep.subr.bf16.mxu0 0
        %4112 = vmatpush2.bf16.msra.mxu0 0
        %4113 = vmatprep.subr.bf16.mxu0 0
        %4114 = vmatpush2.bf16.msra.mxu0 0
        %4115 = vmatprep.mubr.bf16.mxu0 0
        %4116 = vmatmul.mubr.bf16.gmra.mxu0 %v4081
        %v4117 = vpop.f32.mrf.mxu0
        %v4118 = vadd.f32 %v4067, %v4117
        %v4119 = vpop.f32.mrf.mxu0
        %v4120 = vpop.f32.mrf.mxu0
        %v4121 = vpop.f32.mrf.mxu0
        %4122 = vdwg.mxu0
        %v4123 = vadd.f32 %v3312, %v4118
        %v4124 = vsel %vm491, %v4123, 0.0
        %4125 = vadd.xlane.f32.xlu0 %v4124
        %v4126 = vpop.xlane.xlu0 %4125
        %v4127 = vmul.f32 %v4126, %v1280
        %v4128 = vsub.f32 %v4123, %v4127
        %v4129 = vmul.f32 %v4128, %v4128
        %v4130 = vsel %vm491, %v4129, 0.0
        %4131 = vadd.xlane.f32.xlu0 %v4130
        %v4132 = vpop.xlane.xlu0 %4131
        %v4133 = vmul.f32 %v4132, %v1280
        %v4134 = vadd.f32 %v4133, 1e-05
        %v4135 = vrsqrt.pop %v4134
        %v4136 = vmul.f32 %v4128, %v4135
        %v4137 = vlaneseq
        %v4138 = vshrl.u32 %v4137, 7
        %v4139 = vsub.s32 1, %v4138
        %v4140 = vrot.slane %v3314, %v4139
        %v4141 = vmul.f32 %v4136, %v4140
        %v4142 = vlaneseq
        %v4143 = vshrl.u32 %v4142, 7
        %v4144 = vsub.s32 2, %v4143
        %v4145 = vrot.slane %v3314, %v4144
        %v4146 = vadd.f32 %v4141, %v4145
        %v4147 = vpack.c.bf16 %v4146, %v4146
        %s4148 = scalar_lea.vmem %s6, 256
        %v4149 = vld [vmem:[%s4148] sm:$0xff]
        %v4150 = vld [vmem:[%s4148 + $0x8] sm:$0xff]
        %v4151 = vld [vmem:[%s4148 + $0x10] sm:$0xff]
        %v4152 = vld [vmem:[%s4148 + $0x18] sm:$0xff]
        %v4153 = vld [vmem:[%s4148 + $0x20] sm:$0xff]
        %v4154 = vld [vmem:[%s4148 + $0x28] sm:$0xff]
        %v4155 = vld [vmem:[%s4148 + $0x30] sm:$0xff]
        %v4156 = vld [vmem:[%s4148 + $0x38] sm:$0xff]
        %v4157 = vld [vmem:[%s4148 + $0x40] sm:$0xff]
        %v4158 = vld [vmem:[%s4148 + $0x48] sm:$0xff]
        %v4159 = vld [vmem:[%s4148 + $0x50] sm:$0xff]
        %v4160 = vld [vmem:[%s4148 + $0x58] sm:$0xff]
        %v4161 = vld [vmem:[%s4148 + $0x60] sm:$0xff]
        %v4162 = vld [vmem:[%s4148 + $0x68] sm:$0xff]
        %v4163 = vld [vmem:[%s4148 + $0x70] sm:$0xff]
        %v4164 = vld [vmem:[%s4148 + $0x78] sm:$0xff]
        %v4165 = vld [vmem:[%s4148 + $0x80] sm:$0xff]
        %v4166 = vld [vmem:[%s4148 + $0x88] sm:$0xff]
        %v4167 = vld [vmem:[%s4148 + $0x90] sm:$0xff]
        %v4168 = vld [vmem:[%s4148 + $0x98] sm:$0xff]
        %v4169 = vld [vmem:[%s4148 + $0xa0] sm:$0xff]
        %v4170 = vld [vmem:[%s4148 + $0xa8] sm:$0xff]
        %v4171 = vld [vmem:[%s4148 + $0xb0] sm:$0xff]
        %v4172 = vld [vmem:[%s4148 + $0xb8] sm:$0xff]
        %v4173 = vld [vmem:[%s4148 + $0xc0] sm:$0xff]
        %v4174 = vld [vmem:[%s4148 + $0xc8] sm:$0xff]
        %v4175 = vld [vmem:[%s4148 + $0xd0] sm:$0xff]
        %v4176 = vld [vmem:[%s4148 + $0xd8] sm:$0xff]
        %v4177 = vld [vmem:[%s4148 + $0xe0] sm:$0xff]
        %v4178 = vld [vmem:[%s4148 + $0xe8] sm:$0xff]
        %v4179 = vld [vmem:[%s4148 + $0xf0] sm:$0xff]
        %v4180 = vld [vmem:[%s4148 + $0xf8] sm:$0xff]
        %s4181 = scalar_lea.vmem %s7, 16
        %v4182 = vld [vmem:[%s4181] sm:$0xff]
        %v4183 = vld [vmem:[%s4181 + $0x8] sm:$0xff]
        %v4186 = vlaneseq
        %v4187 = vshrl.u32 %v4186, 7
        %v4188 = vsub.s32 0, %v4187
        %v4189 = vrot.slane %v4182, %v4188
        %v4190 = vlaneseq
        %v4191 = vshrl.u32 %v4190, 7
        %v4192 = vsub.s32 1, %v4191
        %v4193 = vrot.slane %v4182, %v4192
        %v4194 = vlaneseq
        %v4195 = vshrl.u32 %v4194, 7
        %v4196 = vsub.s32 2, %v4195
        %v4197 = vrot.slane %v4182, %v4196
        %v4198 = vlaneseq
        %v4199 = vshrl.u32 %v4198, 7
        %v4200 = vsub.s32 3, %v4199
        %v4201 = vrot.slane %v4182, %v4200
        %v4202 = vlaneseq
        %v4203 = vshrl.u32 %v4202, 7
        %v4204 = vsub.s32 4, %v4203
        %v4205 = vrot.slane %v4182, %v4204
        %v4206 = vlaneseq
        %v4207 = vshrl.u32 %v4206, 7
        %v4208 = vsub.s32 5, %v4207
        %v4209 = vrot.slane %v4182, %v4208
        %v4210 = vlaneseq
        %v4211 = vshrl.u32 %v4210, 7
        %v4212 = vsub.s32 6, %v4211
        %v4213 = vrot.slane %v4182, %v4212
        %v4214 = vlaneseq
        %v4215 = vshrl.u32 %v4214, 7
        %v4216 = vsub.s32 7, %v4215
        %v4217 = vrot.slane %v4182, %v4216
        %v4218 = vlaneseq
        %v4219 = vshrl.u32 %v4218, 7
        %v4220 = vsub.s32 0, %v4219
        %v4221 = vrot.slane %v4183, %v4220
        %v4222 = vlaneseq
        %v4223 = vshrl.u32 %v4222, 7
        %v4224 = vsub.s32 1, %v4223
        %v4225 = vrot.slane %v4183, %v4224
        %v4226 = vlaneseq
        %v4227 = vshrl.u32 %v4226, 7
        %v4228 = vsub.s32 2, %v4227
        %v4229 = vrot.slane %v4183, %v4228
        %v4230 = vlaneseq
        %v4231 = vshrl.u32 %v4230, 7
        %v4232 = vsub.s32 3, %v4231
        %v4233 = vrot.slane %v4183, %v4232
        %v4234 = vlaneseq
        %v4235 = vshrl.u32 %v4234, 7
        %v4236 = vsub.s32 4, %v4235
        %v4237 = vrot.slane %v4183, %v4236
        %v4238 = vlaneseq
        %v4239 = vshrl.u32 %v4238, 7
        %v4240 = vsub.s32 5, %v4239
        %v4241 = vrot.slane %v4183, %v4240
        %v4242 = vlaneseq
        %v4243 = vshrl.u32 %v4242, 7
        %v4244 = vsub.s32 6, %v4243
        %v4245 = vrot.slane %v4183, %v4244
        %v4246 = vlaneseq
        %v4247 = vshrl.u32 %v4246, 7
        %v4248 = vsub.s32 7, %v4247
        %v4249 = vrot.slane %v4183, %v4248
        %v4298 = vunpack.c.l.b16 %v4149
        %v4299 = vunpack.c.h.b16 %v4149
        %v4300 = vunpack.c.l.b16 %v4150
        %v4301 = vunpack.c.h.b16 %v4150
        %v4302 = vunpack.c.l.b16 %v4151
        %v4303 = vunpack.c.h.b16 %v4151
        %v4304 = vunpack.c.l.b16 %v4152
        %v4305 = vunpack.c.h.b16 %v4152
        %v4306 = vunpack.c.l.b16 %v4153
        %v4307 = vunpack.c.h.b16 %v4153
        %v4308 = vunpack.c.l.b16 %v4154
        %v4309 = vunpack.c.h.b16 %v4154
        %v4310 = vunpack.c.l.b16 %v4155
        %v4311 = vunpack.c.h.b16 %v4155
        %v4312 = vunpack.c.l.b16 %v4156
        %v4313 = vunpack.c.h.b16 %v4156
        %v4314 = vunpack.c.l.b16 %v4157
        %v4315 = vunpack.c.h.b16 %v4157
        %v4316 = vunpack.c.l.b16 %v4158
        %v4317 = vunpack.c.h.b16 %v4158
        %v4318 = vunpack.c.l.b16 %v4159
        %v4319 = vunpack.c.h.b16 %v4159
        %v4320 = vunpack.c.l.b16 %v4160
        %v4321 = vunpack.c.h.b16 %v4160
        %v4322 = vunpack.c.l.b16 %v4161
        %v4323 = vunpack.c.h.b16 %v4161
        %v4324 = vunpack.c.l.b16 %v4162
        %v4325 = vunpack.c.h.b16 %v4162
        %v4326 = vunpack.c.l.b16 %v4163
        %v4327 = vunpack.c.h.b16 %v4163
        %v4328 = vunpack.c.l.b16 %v4164
        %v4329 = vunpack.c.h.b16 %v4164
        %v4330 = vunpack.c.l.b16 %v4165
        %v4331 = vunpack.c.h.b16 %v4165
        %v4332 = vunpack.c.l.b16 %v4166
        %v4333 = vunpack.c.h.b16 %v4166
        %v4334 = vunpack.c.l.b16 %v4167
        %v4335 = vunpack.c.h.b16 %v4167
        %v4336 = vunpack.c.l.b16 %v4168
        %v4337 = vunpack.c.h.b16 %v4168
        %v4338 = vunpack.c.l.b16 %v4169
        %v4339 = vunpack.c.h.b16 %v4169
        %v4340 = vunpack.c.l.b16 %v4170
        %v4341 = vunpack.c.h.b16 %v4170
        %v4342 = vunpack.c.l.b16 %v4171
        %v4343 = vunpack.c.h.b16 %v4171
        %v4344 = vunpack.c.l.b16 %v4172
        %v4345 = vunpack.c.h.b16 %v4172
        %v4346 = vunpack.c.l.b16 %v4173
        %v4347 = vunpack.c.h.b16 %v4173
        %v4348 = vunpack.c.l.b16 %v4174
        %v4349 = vunpack.c.h.b16 %v4174
        %v4350 = vunpack.c.l.b16 %v4175
        %v4351 = vunpack.c.h.b16 %v4175
        %v4352 = vunpack.c.l.b16 %v4176
        %v4353 = vunpack.c.h.b16 %v4176
        %v4354 = vunpack.c.l.b16 %v4177
        %v4355 = vunpack.c.h.b16 %v4177
        %v4356 = vunpack.c.l.b16 %v4178
        %v4357 = vunpack.c.h.b16 %v4178
        %v4358 = vunpack.c.l.b16 %v4179
        %v4359 = vunpack.c.h.b16 %v4179
        %v4360 = vunpack.c.l.b16 %v4180
        %v4361 = vunpack.c.h.b16 %v4180
        %v4362 = vpack.c.b16 %v4314, %v4298
        %v4363 = vpack.c.b16 %v4315, %v4299
        %v4364 = vpack.c.b16 %v4316, %v4300
        %v4365 = vpack.c.b16 %v4317, %v4301
        %v4366 = vpack.c.b16 %v4318, %v4302
        %v4367 = vpack.c.b16 %v4319, %v4303
        %v4368 = vpack.c.b16 %v4320, %v4304
        %v4369 = vpack.c.b16 %v4321, %v4305
        %v4370 = vpack.c.b16 %v4322, %v4306
        %v4371 = vpack.c.b16 %v4323, %v4307
        %v4372 = vpack.c.b16 %v4324, %v4308
        %v4373 = vpack.c.b16 %v4325, %v4309
        %v4374 = vpack.c.b16 %v4326, %v4310
        %v4375 = vpack.c.b16 %v4327, %v4311
        %v4376 = vpack.c.b16 %v4328, %v4312
        %v4377 = vpack.c.b16 %v4329, %v4313
        %v4378 = vpack.c.b16 %v4346, %v4330
        %v4379 = vpack.c.b16 %v4347, %v4331
        %v4380 = vpack.c.b16 %v4348, %v4332
        %v4381 = vpack.c.b16 %v4349, %v4333
        %v4382 = vpack.c.b16 %v4350, %v4334
        %v4383 = vpack.c.b16 %v4351, %v4335
        %v4384 = vpack.c.b16 %v4352, %v4336
        %v4385 = vpack.c.b16 %v4353, %v4337
        %v4386 = vpack.c.b16 %v4354, %v4338
        %v4387 = vpack.c.b16 %v4355, %v4339
        %v4388 = vpack.c.b16 %v4356, %v4340
        %v4389 = vpack.c.b16 %v4357, %v4341
        %v4390 = vpack.c.b16 %v4358, %v4342
        %v4391 = vpack.c.b16 %v4359, %v4343
        %v4392 = vpack.c.b16 %v4360, %v4344
        %v4393 = vpack.c.b16 %v4361, %v4345
        %v4427 = vsel %vm491, %v4147, 0
        %4429 = vmatprep.subr.bf16.mxu0 0
        %4430 = vmatpush1.bf16.msra.mxu0 0
        %4431 = vmatprep.subr.bf16.mxu0 0
        %4432 = vmatpush1.bf16.msra.mxu0 0
        %4433 = vmatprep.subr.bf16.mxu0 0
        %4434 = vmatpush1.bf16.msra.mxu0 0
        %4435 = vmatprep.subr.bf16.mxu0 0
        %4436 = vmatpush1.bf16.msra.mxu0 0
        %4437 = vmatprep.subr.bf16.mxu0 0
        %4438 = vmatpush1.bf16.msra.mxu0 0
        %4439 = vmatprep.subr.bf16.mxu0 0
        %4440 = vmatpush1.bf16.msra.mxu0 0
        %4441 = vmatprep.subr.bf16.mxu0 %v4379
        %4442 = vmatpush1.bf16.msra.mxu0 %v4378
        %4443 = vmatprep.subr.bf16.mxu0 %v4363
        %4444 = vmatpush1.bf16.msra.mxu0 %v4362
        %4445 = vmatprep.subr.bf16.mxu0 0
        %4446 = vmatpush2.bf16.msra.mxu0 0
        %4447 = vmatprep.subr.bf16.mxu0 0
        %4448 = vmatpush2.bf16.msra.mxu0 0
        %4449 = vmatprep.subr.bf16.mxu0 0
        %4450 = vmatpush2.bf16.msra.mxu0 0
        %4451 = vmatprep.subr.bf16.mxu0 0
        %4452 = vmatpush2.bf16.msra.mxu0 0
        %4453 = vmatprep.subr.bf16.mxu0 0
        %4454 = vmatpush2.bf16.msra.mxu0 0
        %4455 = vmatprep.subr.bf16.mxu0 0
        %4456 = vmatpush2.bf16.msra.mxu0 0
        %4457 = vmatprep.subr.bf16.mxu0 0
        %4458 = vmatpush2.bf16.msra.mxu0 0
        %4459 = vmatprep.subr.bf16.mxu0 0
        %4460 = vmatpush2.bf16.msra.mxu0 0
        %4461 = vmatprep.mubr.bf16.mxu0 0
        %4462 = vmatmul.mubr.bf16.gmra.mxu0 %v4427
        %v4463 = vpop.f32.mrf.mxu0
        %v4464 = vadd.f32 %v4189, %v4463
        %v4465 = vpop.f32.mrf.mxu0
        %v4466 = vadd.f32 %v4193, %v4465
        %v4467 = vpop.f32.mrf.mxu0
        %v4468 = vpop.f32.mrf.mxu0
        %4469 = vdwg.mxu0
        %4470 = vmatprep.subr.bf16.mxu0 0
        %4471 = vmatpush1.bf16.msra.mxu0 0
        %4472 = vmatprep.subr.bf16.mxu0 0
        %4473 = vmatpush1.bf16.msra.mxu0 0
        %4474 = vmatprep.subr.bf16.mxu0 0
        %4475 = vmatpush1.bf16.msra.mxu0 0
        %4476 = vmatprep.subr.bf16.mxu0 0
        %4477 = vmatpush1.bf16.msra.mxu0 0
        %4478 = vmatprep.subr.bf16.mxu0 0
        %4479 = vmatpush1.bf16.msra.mxu0 0
        %4480 = vmatprep.subr.bf16.mxu0 0
        %4481 = vmatpush1.bf16.msra.mxu0 0
        %4482 = vmatprep.subr.bf16.mxu0 %v4381
        %4483 = vmatpush1.bf16.msra.mxu0 %v4380
        %4484 = vmatprep.subr.bf16.mxu0 %v4365
        %4485 = vmatpush1.bf16.msra.mxu0 %v4364
        %4486 = vmatprep.subr.bf16.mxu0 0
        %4487 = vmatpush2.bf16.msra.mxu0 0
        %4488 = vmatprep.subr.bf16.mxu0 0
        %4489 = vmatpush2.bf16.msra.mxu0 0
        %4490 = vmatprep.subr.bf16.mxu0 0
        %4491 = vmatpush2.bf16.msra.mxu0 0
        %4492 = vmatprep.subr.bf16.mxu0 0
        %4493 = vmatpush2.bf16.msra.mxu0 0
        %4494 = vmatprep.subr.bf16.mxu0 0
        %4495 = vmatpush2.bf16.msra.mxu0 0
        %4496 = vmatprep.subr.bf16.mxu0 0
        %4497 = vmatpush2.bf16.msra.mxu0 0
        %4498 = vmatprep.subr.bf16.mxu0 0
        %4499 = vmatpush2.bf16.msra.mxu0 0
        %4500 = vmatprep.subr.bf16.mxu0 0
        %4501 = vmatpush2.bf16.msra.mxu0 0
        %4502 = vmatprep.mubr.bf16.mxu0 0
        %4503 = vmatmul.mubr.bf16.gmra.mxu0 %v4427
        %v4504 = vpop.f32.mrf.mxu0
        %v4505 = vadd.f32 %v4197, %v4504
        %v4506 = vpop.f32.mrf.mxu0
        %v4507 = vadd.f32 %v4201, %v4506
        %v4508 = vpop.f32.mrf.mxu0
        %v4509 = vpop.f32.mrf.mxu0
        %4510 = vdwg.mxu0
        %4511 = vmatprep.subr.bf16.mxu0 0
        %4512 = vmatpush1.bf16.msra.mxu0 0
        %4513 = vmatprep.subr.bf16.mxu0 0
        %4514 = vmatpush1.bf16.msra.mxu0 0
        %4515 = vmatprep.subr.bf16.mxu0 0
        %4516 = vmatpush1.bf16.msra.mxu0 0
        %4517 = vmatprep.subr.bf16.mxu0 0
        %4518 = vmatpush1.bf16.msra.mxu0 0
        %4519 = vmatprep.subr.bf16.mxu0 0
        %4520 = vmatpush1.bf16.msra.mxu0 0
        %4521 = vmatprep.subr.bf16.mxu0 0
        %4522 = vmatpush1.bf16.msra.mxu0 0
        %4523 = vmatprep.subr.bf16.mxu0 %v4383
        %4524 = vmatpush1.bf16.msra.mxu0 %v4382
        %4525 = vmatprep.subr.bf16.mxu0 %v4367
        %4526 = vmatpush1.bf16.msra.mxu0 %v4366
        %4527 = vmatprep.subr.bf16.mxu0 0
        %4528 = vmatpush2.bf16.msra.mxu0 0
        %4529 = vmatprep.subr.bf16.mxu0 0
        %4530 = vmatpush2.bf16.msra.mxu0 0
        %4531 = vmatprep.subr.bf16.mxu0 0
        %4532 = vmatpush2.bf16.msra.mxu0 0
        %4533 = vmatprep.subr.bf16.mxu0 0
        %4534 = vmatpush2.bf16.msra.mxu0 0
        %4535 = vmatprep.subr.bf16.mxu0 0
        %4536 = vmatpush2.bf16.msra.mxu0 0
        %4537 = vmatprep.subr.bf16.mxu0 0
        %4538 = vmatpush2.bf16.msra.mxu0 0
        %4539 = vmatprep.subr.bf16.mxu0 0
        %4540 = vmatpush2.bf16.msra.mxu0 0
        %4541 = vmatprep.subr.bf16.mxu0 0
        %4542 = vmatpush2.bf16.msra.mxu0 0
        %4543 = vmatprep.mubr.bf16.mxu0 0
        %4544 = vmatmul.mubr.bf16.gmra.mxu0 %v4427
        %v4545 = vpop.f32.mrf.mxu0
        %v4546 = vadd.f32 %v4205, %v4545
        %v4547 = vpop.f32.mrf.mxu0
        %v4548 = vadd.f32 %v4209, %v4547
        %v4549 = vpop.f32.mrf.mxu0
        %v4550 = vpop.f32.mrf.mxu0
        %4551 = vdwg.mxu0
        %4552 = vmatprep.subr.bf16.mxu0 0
        %4553 = vmatpush1.bf16.msra.mxu0 0
        %4554 = vmatprep.subr.bf16.mxu0 0
        %4555 = vmatpush1.bf16.msra.mxu0 0
        %4556 = vmatprep.subr.bf16.mxu0 0
        %4557 = vmatpush1.bf16.msra.mxu0 0
        %4558 = vmatprep.subr.bf16.mxu0 0
        %4559 = vmatpush1.bf16.msra.mxu0 0
        %4560 = vmatprep.subr.bf16.mxu0 0
        %4561 = vmatpush1.bf16.msra.mxu0 0
        %4562 = vmatprep.subr.bf16.mxu0 0
        %4563 = vmatpush1.bf16.msra.mxu0 0
        %4564 = vmatprep.subr.bf16.mxu0 %v4385
        %4565 = vmatpush1.bf16.msra.mxu0 %v4384
        %4566 = vmatprep.subr.bf16.mxu0 %v4369
        %4567 = vmatpush1.bf16.msra.mxu0 %v4368
        %4568 = vmatprep.subr.bf16.mxu0 0
        %4569 = vmatpush2.bf16.msra.mxu0 0
        %4570 = vmatprep.subr.bf16.mxu0 0
        %4571 = vmatpush2.bf16.msra.mxu0 0
        %4572 = vmatprep.subr.bf16.mxu0 0
        %4573 = vmatpush2.bf16.msra.mxu0 0
        %4574 = vmatprep.subr.bf16.mxu0 0
        %4575 = vmatpush2.bf16.msra.mxu0 0
        %4576 = vmatprep.subr.bf16.mxu0 0
        %4577 = vmatpush2.bf16.msra.mxu0 0
        %4578 = vmatprep.subr.bf16.mxu0 0
        %4579 = vmatpush2.bf16.msra.mxu0 0
        %4580 = vmatprep.subr.bf16.mxu0 0
        %4581 = vmatpush2.bf16.msra.mxu0 0
        %4582 = vmatprep.subr.bf16.mxu0 0
        %4583 = vmatpush2.bf16.msra.mxu0 0
        %4584 = vmatprep.mubr.bf16.mxu0 0
        %4585 = vmatmul.mubr.bf16.gmra.mxu0 %v4427
        %v4586 = vpop.f32.mrf.mxu0
        %v4587 = vadd.f32 %v4213, %v4586
        %v4588 = vpop.f32.mrf.mxu0
        %v4589 = vadd.f32 %v4217, %v4588
        %v4590 = vpop.f32.mrf.mxu0
        %v4591 = vpop.f32.mrf.mxu0
        %4592 = vdwg.mxu0
        %4593 = vmatprep.subr.bf16.mxu0 0
        %4594 = vmatpush1.bf16.msra.mxu0 0
        %4595 = vmatprep.subr.bf16.mxu0 0
        %4596 = vmatpush1.bf16.msra.mxu0 0
        %4597 = vmatprep.subr.bf16.mxu0 0
        %4598 = vmatpush1.bf16.msra.mxu0 0
        %4599 = vmatprep.subr.bf16.mxu0 0
        %4600 = vmatpush1.bf16.msra.mxu0 0
        %4601 = vmatprep.subr.bf16.mxu0 0
        %4602 = vmatpush1.bf16.msra.mxu0 0
        %4603 = vmatprep.subr.bf16.mxu0 0
        %4604 = vmatpush1.bf16.msra.mxu0 0
        %4605 = vmatprep.subr.bf16.mxu0 %v4387
        %4606 = vmatpush1.bf16.msra.mxu0 %v4386
        %4607 = vmatprep.subr.bf16.mxu0 %v4371
        %4608 = vmatpush1.bf16.msra.mxu0 %v4370
        %4609 = vmatprep.subr.bf16.mxu0 0
        %4610 = vmatpush2.bf16.msra.mxu0 0
        %4611 = vmatprep.subr.bf16.mxu0 0
        %4612 = vmatpush2.bf16.msra.mxu0 0
        %4613 = vmatprep.subr.bf16.mxu0 0
        %4614 = vmatpush2.bf16.msra.mxu0 0
        %4615 = vmatprep.subr.bf16.mxu0 0
        %4616 = vmatpush2.bf16.msra.mxu0 0
        %4617 = vmatprep.subr.bf16.mxu0 0
        %4618 = vmatpush2.bf16.msra.mxu0 0
        %4619 = vmatprep.subr.bf16.mxu0 0
        %4620 = vmatpush2.bf16.msra.mxu0 0
        %4621 = vmatprep.subr.bf16.mxu0 0
        %4622 = vmatpush2.bf16.msra.mxu0 0
        %4623 = vmatprep.subr.bf16.mxu0 0
        %4624 = vmatpush2.bf16.msra.mxu0 0
        %4625 = vmatprep.mubr.bf16.mxu0 0
        %4626 = vmatmul.mubr.bf16.gmra.mxu0 %v4427
        %v4627 = vpop.f32.mrf.mxu0
        %v4628 = vadd.f32 %v4221, %v4627
        %v4629 = vpop.f32.mrf.mxu0
        %v4630 = vadd.f32 %v4225, %v4629
        %v4631 = vpop.f32.mrf.mxu0
        %v4632 = vpop.f32.mrf.mxu0
        %4633 = vdwg.mxu0
        %4634 = vmatprep.subr.bf16.mxu0 0
        %4635 = vmatpush1.bf16.msra.mxu0 0
        %4636 = vmatprep.subr.bf16.mxu0 0
        %4637 = vmatpush1.bf16.msra.mxu0 0
        %4638 = vmatprep.subr.bf16.mxu0 0
        %4639 = vmatpush1.bf16.msra.mxu0 0
        %4640 = vmatprep.subr.bf16.mxu0 0
        %4641 = vmatpush1.bf16.msra.mxu0 0
        %4642 = vmatprep.subr.bf16.mxu0 0
        %4643 = vmatpush1.bf16.msra.mxu0 0
        %4644 = vmatprep.subr.bf16.mxu0 0
        %4645 = vmatpush1.bf16.msra.mxu0 0
        %4646 = vmatprep.subr.bf16.mxu0 %v4389
        %4647 = vmatpush1.bf16.msra.mxu0 %v4388
        %4648 = vmatprep.subr.bf16.mxu0 %v4373
        %4649 = vmatpush1.bf16.msra.mxu0 %v4372
        %4650 = vmatprep.subr.bf16.mxu0 0
        %4651 = vmatpush2.bf16.msra.mxu0 0
        %4652 = vmatprep.subr.bf16.mxu0 0
        %4653 = vmatpush2.bf16.msra.mxu0 0
        %4654 = vmatprep.subr.bf16.mxu0 0
        %4655 = vmatpush2.bf16.msra.mxu0 0
        %4656 = vmatprep.subr.bf16.mxu0 0
        %4657 = vmatpush2.bf16.msra.mxu0 0
        %4658 = vmatprep.subr.bf16.mxu0 0
        %4659 = vmatpush2.bf16.msra.mxu0 0
        %4660 = vmatprep.subr.bf16.mxu0 0
        %4661 = vmatpush2.bf16.msra.mxu0 0
        %4662 = vmatprep.subr.bf16.mxu0 0
        %4663 = vmatpush2.bf16.msra.mxu0 0
        %4664 = vmatprep.subr.bf16.mxu0 0
        %4665 = vmatpush2.bf16.msra.mxu0 0
        %4666 = vmatprep.mubr.bf16.mxu0 0
        %4667 = vmatmul.mubr.bf16.gmra.mxu0 %v4427
        %v4668 = vpop.f32.mrf.mxu0
        %v4669 = vadd.f32 %v4229, %v4668
        %v4670 = vpop.f32.mrf.mxu0
        %v4671 = vadd.f32 %v4233, %v4670
        %v4672 = vpop.f32.mrf.mxu0
        %v4673 = vpop.f32.mrf.mxu0
        %4674 = vdwg.mxu0
        %4675 = vmatprep.subr.bf16.mxu0 0
        %4676 = vmatpush1.bf16.msra.mxu0 0
        %4677 = vmatprep.subr.bf16.mxu0 0
        %4678 = vmatpush1.bf16.msra.mxu0 0
        %4679 = vmatprep.subr.bf16.mxu0 0
        %4680 = vmatpush1.bf16.msra.mxu0 0
        %4681 = vmatprep.subr.bf16.mxu0 0
        %4682 = vmatpush1.bf16.msra.mxu0 0
        %4683 = vmatprep.subr.bf16.mxu0 0
        %4684 = vmatpush1.bf16.msra.mxu0 0
        %4685 = vmatprep.subr.bf16.mxu0 0
        %4686 = vmatpush1.bf16.msra.mxu0 0
        %4687 = vmatprep.subr.bf16.mxu0 %v4391
        %4688 = vmatpush1.bf16.msra.mxu0 %v4390
        %4689 = vmatprep.subr.bf16.mxu0 %v4375
        %4690 = vmatpush1.bf16.msra.mxu0 %v4374
        %4691 = vmatprep.subr.bf16.mxu0 0
        %4692 = vmatpush2.bf16.msra.mxu0 0
        %4693 = vmatprep.subr.bf16.mxu0 0
        %4694 = vmatpush2.bf16.msra.mxu0 0
        %4695 = vmatprep.subr.bf16.mxu0 0
        %4696 = vmatpush2.bf16.msra.mxu0 0
        %4697 = vmatprep.subr.bf16.mxu0 0
        %4698 = vmatpush2.bf16.msra.mxu0 0
        %4699 = vmatprep.subr.bf16.mxu0 0
        %4700 = vmatpush2.bf16.msra.mxu0 0
        %4701 = vmatprep.subr.bf16.mxu0 0
        %4702 = vmatpush2.bf16.msra.mxu0 0
        %4703 = vmatprep.subr.bf16.mxu0 0
        %4704 = vmatpush2.bf16.msra.mxu0 0
        %4705 = vmatprep.subr.bf16.mxu0 0
        %4706 = vmatpush2.bf16.msra.mxu0 0
        %4707 = vmatprep.mubr.bf16.mxu0 0
        %4708 = vmatmul.mubr.bf16.gmra.mxu0 %v4427
        %v4709 = vpop.f32.mrf.mxu0
        %v4710 = vadd.f32 %v4237, %v4709
        %v4711 = vpop.f32.mrf.mxu0
        %v4712 = vadd.f32 %v4241, %v4711
        %v4713 = vpop.f32.mrf.mxu0
        %v4714 = vpop.f32.mrf.mxu0
        %4715 = vdwg.mxu0
        %4716 = vmatprep.subr.bf16.mxu0 0
        %4717 = vmatpush1.bf16.msra.mxu0 0
        %4718 = vmatprep.subr.bf16.mxu0 0
        %4719 = vmatpush1.bf16.msra.mxu0 0
        %4720 = vmatprep.subr.bf16.mxu0 0
        %4721 = vmatpush1.bf16.msra.mxu0 0
        %4722 = vmatprep.subr.bf16.mxu0 0
        %4723 = vmatpush1.bf16.msra.mxu0 0
        %4724 = vmatprep.subr.bf16.mxu0 0
        %4725 = vmatpush1.bf16.msra.mxu0 0
        %4726 = vmatprep.subr.bf16.mxu0 0
        %4727 = vmatpush1.bf16.msra.mxu0 0
        %4728 = vmatprep.subr.bf16.mxu0 %v4393
        %4729 = vmatpush1.bf16.msra.mxu0 %v4392
        %4730 = vmatprep.subr.bf16.mxu0 %v4377
        %4731 = vmatpush1.bf16.msra.mxu0 %v4376
        %4732 = vmatprep.subr.bf16.mxu0 0
        %4733 = vmatpush2.bf16.msra.mxu0 0
        %4734 = vmatprep.subr.bf16.mxu0 0
        %4735 = vmatpush2.bf16.msra.mxu0 0
        %4736 = vmatprep.subr.bf16.mxu0 0
        %4737 = vmatpush2.bf16.msra.mxu0 0
        %4738 = vmatprep.subr.bf16.mxu0 0
        %4739 = vmatpush2.bf16.msra.mxu0 0
        %4740 = vmatprep.subr.bf16.mxu0 0
        %4741 = vmatpush2.bf16.msra.mxu0 0
        %4742 = vmatprep.subr.bf16.mxu0 0
        %4743 = vmatpush2.bf16.msra.mxu0 0
        %4744 = vmatprep.subr.bf16.mxu0 0
        %4745 = vmatpush2.bf16.msra.mxu0 0
        %4746 = vmatprep.subr.bf16.mxu0 0
        %4747 = vmatpush2.bf16.msra.mxu0 0
        %4748 = vmatprep.mubr.bf16.mxu0 0
        %4749 = vmatmul.mubr.bf16.gmra.mxu0 %v4427
        %v4750 = vpop.f32.mrf.mxu0
        %v4751 = vadd.f32 %v4245, %v4750
        %v4752 = vpop.f32.mrf.mxu0
        %v4753 = vadd.f32 %v4249, %v4752
        %v4754 = vpop.f32.mrf.mxu0
        %v4755 = vpop.f32.mrf.mxu0
        %4756 = vdwg.mxu0
        %v4757 = vmax.f32 %v4464, 0.0
        %v4758 = vmax.f32 %v4466, 0.0
        %v4759 = vmax.f32 %v4505, 0.0
        %v4760 = vmax.f32 %v4507, 0.0
        %v4761 = vmax.f32 %v4546, 0.0
        %v4762 = vmax.f32 %v4548, 0.0
        %v4763 = vmax.f32 %v4587, 0.0
        %v4764 = vmax.f32 %v4589, 0.0
        %v4765 = vmax.f32 %v4628, 0.0
        %v4766 = vmax.f32 %v4630, 0.0
        %v4767 = vmax.f32 %v4669, 0.0
        %v4768 = vmax.f32 %v4671, 0.0
        %v4769 = vmax.f32 %v4710, 0.0
        %v4770 = vmax.f32 %v4712, 0.0
        %v4771 = vmax.f32 %v4751, 0.0
        %v4772 = vmax.f32 %v4753, 0.0
        %v4773 = vpack.c.bf16 %v4757, %v4757
        %v4774 = vpack.c.bf16 %v4758, %v4758
        %v4775 = vpack.c.bf16 %v4759, %v4759
        %v4776 = vpack.c.bf16 %v4760, %v4760
        %v4777 = vpack.c.bf16 %v4761, %v4761
        %v4778 = vpack.c.bf16 %v4762, %v4762
        %v4779 = vpack.c.bf16 %v4763, %v4763
        %v4780 = vpack.c.bf16 %v4764, %v4764
        %v4781 = vpack.c.bf16 %v4765, %v4765
        %v4782 = vpack.c.bf16 %v4766, %v4766
        %v4783 = vpack.c.bf16 %v4767, %v4767
        %v4784 = vpack.c.bf16 %v4768, %v4768
        %v4785 = vpack.c.bf16 %v4769, %v4769
        %v4786 = vpack.c.bf16 %v4770, %v4770
        %v4787 = vpack.c.bf16 %v4771, %v4771
        %v4788 = vpack.c.bf16 %v4772, %v4772
        %s4789 = scalar_lea.vmem %s8, 1024
        %v4790 = vld [vmem:[%s4789] sm:$0xf]
        %v4791 = vld [vmem:[%s4789 + $0x4] sm:$0xf]
        %v4792 = vld [vmem:[%s4789 + $0x8] sm:$0xf]
        %v4793 = vld [vmem:[%s4789 + $0xc] sm:$0xf]
        %v4794 = vld [vmem:[%s4789 + $0x10] sm:$0xf]
        %v4795 = vld [vmem:[%s4789 + $0x14] sm:$0xf]
        %v4796 = vld [vmem:[%s4789 + $0x18] sm:$0xf]
        %v4797 = vld [vmem:[%s4789 + $0x1c] sm:$0xf]
        %v4798 = vld [vmem:[%s4789 + $0x20] sm:$0xf]
        %v4799 = vld [vmem:[%s4789 + $0x24] sm:$0xf]
        %v4800 = vld [vmem:[%s4789 + $0x28] sm:$0xf]
        %v4801 = vld [vmem:[%s4789 + $0x2c] sm:$0xf]
        %v4802 = vld [vmem:[%s4789 + $0x30] sm:$0xf]
        %v4803 = vld [vmem:[%s4789 + $0x34] sm:$0xf]
        %v4804 = vld [vmem:[%s4789 + $0x38] sm:$0xf]
        %v4805 = vld [vmem:[%s4789 + $0x3c] sm:$0xf]
        %v4806 = vld [vmem:[%s4789 + $0x40] sm:$0xf]
        %v4807 = vld [vmem:[%s4789 + $0x44] sm:$0xf]
        %v4808 = vld [vmem:[%s4789 + $0x48] sm:$0xf]
        %v4809 = vld [vmem:[%s4789 + $0x4c] sm:$0xf]
        %v4810 = vld [vmem:[%s4789 + $0x50] sm:$0xf]
        %v4811 = vld [vmem:[%s4789 + $0x54] sm:$0xf]
        %v4812 = vld [vmem:[%s4789 + $0x58] sm:$0xf]
        %v4813 = vld [vmem:[%s4789 + $0x5c] sm:$0xf]
        %v4814 = vld [vmem:[%s4789 + $0x60] sm:$0xf]
        %v4815 = vld [vmem:[%s4789 + $0x64] sm:$0xf]
        %v4816 = vld [vmem:[%s4789 + $0x68] sm:$0xf]
        %v4817 = vld [vmem:[%s4789 + $0x6c] sm:$0xf]
        %v4818 = vld [vmem:[%s4789 + $0x70] sm:$0xf]
        %v4819 = vld [vmem:[%s4789 + $0x74] sm:$0xf]
        %v4820 = vld [vmem:[%s4789 + $0x78] sm:$0xf]
        %v4821 = vld [vmem:[%s4789 + $0x7c] sm:$0xf]
        %v4822 = vld [vmem:[%s4789 + $0x80] sm:$0xf]
        %v4823 = vld [vmem:[%s4789 + $0x84] sm:$0xf]
        %v4824 = vld [vmem:[%s4789 + $0x88] sm:$0xf]
        %v4825 = vld [vmem:[%s4789 + $0x8c] sm:$0xf]
        %v4826 = vld [vmem:[%s4789 + $0x90] sm:$0xf]
        %v4827 = vld [vmem:[%s4789 + $0x94] sm:$0xf]
        %v4828 = vld [vmem:[%s4789 + $0x98] sm:$0xf]
        %v4829 = vld [vmem:[%s4789 + $0x9c] sm:$0xf]
        %v4830 = vld [vmem:[%s4789 + $0xa0] sm:$0xf]
        %v4831 = vld [vmem:[%s4789 + $0xa4] sm:$0xf]
        %v4832 = vld [vmem:[%s4789 + $0xa8] sm:$0xf]
        %v4833 = vld [vmem:[%s4789 + $0xac] sm:$0xf]
        %v4834 = vld [vmem:[%s4789 + $0xb0] sm:$0xf]
        %v4835 = vld [vmem:[%s4789 + $0xb4] sm:$0xf]
        %v4836 = vld [vmem:[%s4789 + $0xb8] sm:$0xf]
        %v4837 = vld [vmem:[%s4789 + $0xbc] sm:$0xf]
        %v4838 = vld [vmem:[%s4789 + $0xc0] sm:$0xf]
        %v4839 = vld [vmem:[%s4789 + $0xc4] sm:$0xf]
        %v4840 = vld [vmem:[%s4789 + $0xc8] sm:$0xf]
        %v4841 = vld [vmem:[%s4789 + $0xcc] sm:$0xf]
        %v4842 = vld [vmem:[%s4789 + $0xd0] sm:$0xf]
        %v4843 = vld [vmem:[%s4789 + $0xd4] sm:$0xf]
        %v4844 = vld [vmem:[%s4789 + $0xd8] sm:$0xf]
        %v4845 = vld [vmem:[%s4789 + $0xdc] sm:$0xf]
        %v4846 = vld [vmem:[%s4789 + $0xe0] sm:$0xf]
        %v4847 = vld [vmem:[%s4789 + $0xe4] sm:$0xf]
        %v4848 = vld [vmem:[%s4789 + $0xe8] sm:$0xf]
        %v4849 = vld [vmem:[%s4789 + $0xec] sm:$0xf]
        %v4850 = vld [vmem:[%s4789 + $0xf0] sm:$0xf]
        %v4851 = vld [vmem:[%s4789 + $0xf4] sm:$0xf]
        %v4852 = vld [vmem:[%s4789 + $0xf8] sm:$0xf]
        %v4853 = vld [vmem:[%s4789 + $0xfc] sm:$0xf]
        %v4854 = vld [vmem:[%s4789 + $0x100] sm:$0xf]
        %v4855 = vld [vmem:[%s4789 + $0x104] sm:$0xf]
        %v4856 = vld [vmem:[%s4789 + $0x108] sm:$0xf]
        %v4857 = vld [vmem:[%s4789 + $0x10c] sm:$0xf]
        %v4858 = vld [vmem:[%s4789 + $0x110] sm:$0xf]
        %v4859 = vld [vmem:[%s4789 + $0x114] sm:$0xf]
        %v4860 = vld [vmem:[%s4789 + $0x118] sm:$0xf]
        %v4861 = vld [vmem:[%s4789 + $0x11c] sm:$0xf]
        %v4862 = vld [vmem:[%s4789 + $0x120] sm:$0xf]
        %v4863 = vld [vmem:[%s4789 + $0x124] sm:$0xf]
        %v4864 = vld [vmem:[%s4789 + $0x128] sm:$0xf]
        %v4865 = vld [vmem:[%s4789 + $0x12c] sm:$0xf]
        %v4866 = vld [vmem:[%s4789 + $0x130] sm:$0xf]
        %v4867 = vld [vmem:[%s4789 + $0x134] sm:$0xf]
        %v4868 = vld [vmem:[%s4789 + $0x138] sm:$0xf]
        %v4869 = vld [vmem:[%s4789 + $0x13c] sm:$0xf]
        %v4870 = vld [vmem:[%s4789 + $0x140] sm:$0xf]
        %v4871 = vld [vmem:[%s4789 + $0x144] sm:$0xf]
        %v4872 = vld [vmem:[%s4789 + $0x148] sm:$0xf]
        %v4873 = vld [vmem:[%s4789 + $0x14c] sm:$0xf]
        %v4874 = vld [vmem:[%s4789 + $0x150] sm:$0xf]
        %v4875 = vld [vmem:[%s4789 + $0x154] sm:$0xf]
        %v4876 = vld [vmem:[%s4789 + $0x158] sm:$0xf]
        %v4877 = vld [vmem:[%s4789 + $0x15c] sm:$0xf]
        %v4878 = vld [vmem:[%s4789 + $0x160] sm:$0xf]
        %v4879 = vld [vmem:[%s4789 + $0x164] sm:$0xf]
        %v4880 = vld [vmem:[%s4789 + $0x168] sm:$0xf]
        %v4881 = vld [vmem:[%s4789 + $0x16c] sm:$0xf]
        %v4882 = vld [vmem:[%s4789 + $0x170] sm:$0xf]
        %v4883 = vld [vmem:[%s4789 + $0x174] sm:$0xf]
        %v4884 = vld [vmem:[%s4789 + $0x178] sm:$0xf]
        %v4885 = vld [vmem:[%s4789 + $0x17c] sm:$0xf]
        %v4886 = vld [vmem:[%s4789 + $0x180] sm:$0xf]
        %v4887 = vld [vmem:[%s4789 + $0x184] sm:$0xf]
        %v4888 = vld [vmem:[%s4789 + $0x188] sm:$0xf]
        %v4889 = vld [vmem:[%s4789 + $0x18c] sm:$0xf]
        %v4890 = vld [vmem:[%s4789 + $0x190] sm:$0xf]
        %v4891 = vld [vmem:[%s4789 + $0x194] sm:$0xf]
        %v4892 = vld [vmem:[%s4789 + $0x198] sm:$0xf]
        %v4893 = vld [vmem:[%s4789 + $0x19c] sm:$0xf]
        %v4894 = vld [vmem:[%s4789 + $0x1a0] sm:$0xf]
        %v4895 = vld [vmem:[%s4789 + $0x1a4] sm:$0xf]
        %v4896 = vld [vmem:[%s4789 + $0x1a8] sm:$0xf]
        %v4897 = vld [vmem:[%s4789 + $0x1ac] sm:$0xf]
        %v4898 = vld [vmem:[%s4789 + $0x1b0] sm:$0xf]
        %v4899 = vld [vmem:[%s4789 + $0x1b4] sm:$0xf]
        %v4900 = vld [vmem:[%s4789 + $0x1b8] sm:$0xf]
        %v4901 = vld [vmem:[%s4789 + $0x1bc] sm:$0xf]
        %v4902 = vld [vmem:[%s4789 + $0x1c0] sm:$0xf]
        %v4903 = vld [vmem:[%s4789 + $0x1c4] sm:$0xf]
        %v4904 = vld [vmem:[%s4789 + $0x1c8] sm:$0xf]
        %v4905 = vld [vmem:[%s4789 + $0x1cc] sm:$0xf]
        %v4906 = vld [vmem:[%s4789 + $0x1d0] sm:$0xf]
        %v4907 = vld [vmem:[%s4789 + $0x1d4] sm:$0xf]
        %v4908 = vld [vmem:[%s4789 + $0x1d8] sm:$0xf]
        %v4909 = vld [vmem:[%s4789 + $0x1dc] sm:$0xf]
        %v4910 = vld [vmem:[%s4789 + $0x1e0] sm:$0xf]
        %v4911 = vld [vmem:[%s4789 + $0x1e4] sm:$0xf]
        %v4912 = vld [vmem:[%s4789 + $0x1e8] sm:$0xf]
        %v4913 = vld [vmem:[%s4789 + $0x1ec] sm:$0xf]
        %v4914 = vld [vmem:[%s4789 + $0x1f0] sm:$0xf]
        %v4915 = vld [vmem:[%s4789 + $0x1f4] sm:$0xf]
        %v4916 = vld [vmem:[%s4789 + $0x1f8] sm:$0xf]
        %v4917 = vld [vmem:[%s4789 + $0x1fc] sm:$0xf]
        %v4918 = vld [vmem:[%s4789 + $0x200] sm:$0xf]
        %v4919 = vld [vmem:[%s4789 + $0x204] sm:$0xf]
        %v4920 = vld [vmem:[%s4789 + $0x208] sm:$0xf]
        %v4921 = vld [vmem:[%s4789 + $0x20c] sm:$0xf]
        %v4922 = vld [vmem:[%s4789 + $0x210] sm:$0xf]
        %v4923 = vld [vmem:[%s4789 + $0x214] sm:$0xf]
        %v4924 = vld [vmem:[%s4789 + $0x218] sm:$0xf]
        %v4925 = vld [vmem:[%s4789 + $0x21c] sm:$0xf]
        %v4926 = vld [vmem:[%s4789 + $0x220] sm:$0xf]
        %v4927 = vld [vmem:[%s4789 + $0x224] sm:$0xf]
        %v4928 = vld [vmem:[%s4789 + $0x228] sm:$0xf]
        %v4929 = vld [vmem:[%s4789 + $0x22c] sm:$0xf]
        %v4930 = vld [vmem:[%s4789 + $0x230] sm:$0xf]
        %v4931 = vld [vmem:[%s4789 + $0x234] sm:$0xf]
        %v4932 = vld [vmem:[%s4789 + $0x238] sm:$0xf]
        %v4933 = vld [vmem:[%s4789 + $0x23c] sm:$0xf]
        %v4934 = vld [vmem:[%s4789 + $0x240] sm:$0xf]
        %v4935 = vld [vmem:[%s4789 + $0x244] sm:$0xf]
        %v4936 = vld [vmem:[%s4789 + $0x248] sm:$0xf]
        %v4937 = vld [vmem:[%s4789 + $0x24c] sm:$0xf]
        %v4938 = vld [vmem:[%s4789 + $0x250] sm:$0xf]
        %v4939 = vld [vmem:[%s4789 + $0x254] sm:$0xf]
        %v4940 = vld [vmem:[%s4789 + $0x258] sm:$0xf]
        %v4941 = vld [vmem:[%s4789 + $0x25c] sm:$0xf]
        %v4942 = vld [vmem:[%s4789 + $0x260] sm:$0xf]
        %v4943 = vld [vmem:[%s4789 + $0x264] sm:$0xf]
        %v4944 = vld [vmem:[%s4789 + $0x268] sm:$0xf]
        %v4945 = vld [vmem:[%s4789 + $0x26c] sm:$0xf]
        %v4946 = vld [vmem:[%s4789 + $0x270] sm:$0xf]
        %v4947 = vld [vmem:[%s4789 + $0x274] sm:$0xf]
        %v4948 = vld [vmem:[%s4789 + $0x278] sm:$0xf]
        %v4949 = vld [vmem:[%s4789 + $0x27c] sm:$0xf]
        %v4950 = vld [vmem:[%s4789 + $0x280] sm:$0xf]
        %v4951 = vld [vmem:[%s4789 + $0x284] sm:$0xf]
        %v4952 = vld [vmem:[%s4789 + $0x288] sm:$0xf]
        %v4953 = vld [vmem:[%s4789 + $0x28c] sm:$0xf]
        %v4954 = vld [vmem:[%s4789 + $0x290] sm:$0xf]
        %v4955 = vld [vmem:[%s4789 + $0x294] sm:$0xf]
        %v4956 = vld [vmem:[%s4789 + $0x298] sm:$0xf]
        %v4957 = vld [vmem:[%s4789 + $0x29c] sm:$0xf]
        %v4958 = vld [vmem:[%s4789 + $0x2a0] sm:$0xf]
        %v4959 = vld [vmem:[%s4789 + $0x2a4] sm:$0xf]
        %v4960 = vld [vmem:[%s4789 + $0x2a8] sm:$0xf]
        %v4961 = vld [vmem:[%s4789 + $0x2ac] sm:$0xf]
        %v4962 = vld [vmem:[%s4789 + $0x2b0] sm:$0xf]
        %v4963 = vld [vmem:[%s4789 + $0x2b4] sm:$0xf]
        %v4964 = vld [vmem:[%s4789 + $0x2b8] sm:$0xf]
        %v4965 = vld [vmem:[%s4789 + $0x2bc] sm:$0xf]
        %v4966 = vld [vmem:[%s4789 + $0x2c0] sm:$0xf]
        %v4967 = vld [vmem:[%s4789 + $0x2c4] sm:$0xf]
        %v4968 = vld [vmem:[%s4789 + $0x2c8] sm:$0xf]
        %v4969 = vld [vmem:[%s4789 + $0x2cc] sm:$0xf]
        %v4970 = vld [vmem:[%s4789 + $0x2d0] sm:$0xf]
        %v4971 = vld [vmem:[%s4789 + $0x2d4] sm:$0xf]
        %v4972 = vld [vmem:[%s4789 + $0x2d8] sm:$0xf]
        %v4973 = vld [vmem:[%s4789 + $0x2dc] sm:$0xf]
        %v4974 = vld [vmem:[%s4789 + $0x2e0] sm:$0xf]
        %v4975 = vld [vmem:[%s4789 + $0x2e4] sm:$0xf]
        %v4976 = vld [vmem:[%s4789 + $0x2e8] sm:$0xf]
        %v4977 = vld [vmem:[%s4789 + $0x2ec] sm:$0xf]
        %v4978 = vld [vmem:[%s4789 + $0x2f0] sm:$0xf]
        %v4979 = vld [vmem:[%s4789 + $0x2f4] sm:$0xf]
        %v4980 = vld [vmem:[%s4789 + $0x2f8] sm:$0xf]
        %v4981 = vld [vmem:[%s4789 + $0x2fc] sm:$0xf]
        %v4982 = vld [vmem:[%s4789 + $0x300] sm:$0xf]
        %v4983 = vld [vmem:[%s4789 + $0x304] sm:$0xf]
        %v4984 = vld [vmem:[%s4789 + $0x308] sm:$0xf]
        %v4985 = vld [vmem:[%s4789 + $0x30c] sm:$0xf]
        %v4986 = vld [vmem:[%s4789 + $0x310] sm:$0xf]
        %v4987 = vld [vmem:[%s4789 + $0x314] sm:$0xf]
        %v4988 = vld [vmem:[%s4789 + $0x318] sm:$0xf]
        %v4989 = vld [vmem:[%s4789 + $0x31c] sm:$0xf]
        %v4990 = vld [vmem:[%s4789 + $0x320] sm:$0xf]
        %v4991 = vld [vmem:[%s4789 + $0x324] sm:$0xf]
        %v4992 = vld [vmem:[%s4789 + $0x328] sm:$0xf]
        %v4993 = vld [vmem:[%s4789 + $0x32c] sm:$0xf]
        %v4994 = vld [vmem:[%s4789 + $0x330] sm:$0xf]
        %v4995 = vld [vmem:[%s4789 + $0x334] sm:$0xf]
        %v4996 = vld [vmem:[%s4789 + $0x338] sm:$0xf]
        %v4997 = vld [vmem:[%s4789 + $0x33c] sm:$0xf]
        %v4998 = vld [vmem:[%s4789 + $0x340] sm:$0xf]
        %v4999 = vld [vmem:[%s4789 + $0x344] sm:$0xf]
        %v5000 = vld [vmem:[%s4789 + $0x348] sm:$0xf]
        %v5001 = vld [vmem:[%s4789 + $0x34c] sm:$0xf]
        %v5002 = vld [vmem:[%s4789 + $0x350] sm:$0xf]
        %v5003 = vld [vmem:[%s4789 + $0x354] sm:$0xf]
        %v5004 = vld [vmem:[%s4789 + $0x358] sm:$0xf]
        %v5005 = vld [vmem:[%s4789 + $0x35c] sm:$0xf]
        %v5006 = vld [vmem:[%s4789 + $0x360] sm:$0xf]
        %v5007 = vld [vmem:[%s4789 + $0x364] sm:$0xf]
        %v5008 = vld [vmem:[%s4789 + $0x368] sm:$0xf]
        %v5009 = vld [vmem:[%s4789 + $0x36c] sm:$0xf]
        %v5010 = vld [vmem:[%s4789 + $0x370] sm:$0xf]
        %v5011 = vld [vmem:[%s4789 + $0x374] sm:$0xf]
        %v5012 = vld [vmem:[%s4789 + $0x378] sm:$0xf]
        %v5013 = vld [vmem:[%s4789 + $0x37c] sm:$0xf]
        %v5014 = vld [vmem:[%s4789 + $0x380] sm:$0xf]
        %v5015 = vld [vmem:[%s4789 + $0x384] sm:$0xf]
        %v5016 = vld [vmem:[%s4789 + $0x388] sm:$0xf]
        %v5017 = vld [vmem:[%s4789 + $0x38c] sm:$0xf]
        %v5018 = vld [vmem:[%s4789 + $0x390] sm:$0xf]
        %v5019 = vld [vmem:[%s4789 + $0x394] sm:$0xf]
        %v5020 = vld [vmem:[%s4789 + $0x398] sm:$0xf]
        %v5021 = vld [vmem:[%s4789 + $0x39c] sm:$0xf]
        %v5022 = vld [vmem:[%s4789 + $0x3a0] sm:$0xf]
        %v5023 = vld [vmem:[%s4789 + $0x3a4] sm:$0xf]
        %v5024 = vld [vmem:[%s4789 + $0x3a8] sm:$0xf]
        %v5025 = vld [vmem:[%s4789 + $0x3ac] sm:$0xf]
        %v5026 = vld [vmem:[%s4789 + $0x3b0] sm:$0xf]
        %v5027 = vld [vmem:[%s4789 + $0x3b4] sm:$0xf]
        %v5028 = vld [vmem:[%s4789 + $0x3b8] sm:$0xf]
        %v5029 = vld [vmem:[%s4789 + $0x3bc] sm:$0xf]
        %v5030 = vld [vmem:[%s4789 + $0x3c0] sm:$0xf]
        %v5031 = vld [vmem:[%s4789 + $0x3c4] sm:$0xf]
        %v5032 = vld [vmem:[%s4789 + $0x3c8] sm:$0xf]
        %v5033 = vld [vmem:[%s4789 + $0x3cc] sm:$0xf]
        %v5034 = vld [vmem:[%s4789 + $0x3d0] sm:$0xf]
        %v5035 = vld [vmem:[%s4789 + $0x3d4] sm:$0xf]
        %v5036 = vld [vmem:[%s4789 + $0x3d8] sm:$0xf]
        %v5037 = vld [vmem:[%s4789 + $0x3dc] sm:$0xf]
        %v5038 = vld [vmem:[%s4789 + $0x3e0] sm:$0xf]
        %v5039 = vld [vmem:[%s4789 + $0x3e4] sm:$0xf]
        %v5040 = vld [vmem:[%s4789 + $0x3e8] sm:$0xf]
        %v5041 = vld [vmem:[%s4789 + $0x3ec] sm:$0xf]
        %v5042 = vld [vmem:[%s4789 + $0x3f0] sm:$0xf]
        %v5043 = vld [vmem:[%s4789 + $0x3f4] sm:$0xf]
        %v5044 = vld [vmem:[%s4789 + $0x3f8] sm:$0xf]
        %v5045 = vld [vmem:[%s4789 + $0x3fc] sm:$0xf]
        %v5046 = vlaneseq
        %v5047 = vshrl.u32 %v5046, 7
        %v5048 = vsub.s32 3, %v5047
        %v5049 = vrot.slane %v3314, %v5048
        %v5306 = vunpack.c.l.b16 %v4790
        %v5307 = vunpack.c.l.b16 %v4791
        %v5308 = vunpack.c.l.b16 %v4792
        %v5309 = vunpack.c.l.b16 %v4793
        %v5310 = vunpack.c.l.b16 %v4794
        %v5311 = vunpack.c.l.b16 %v4795
        %v5312 = vunpack.c.l.b16 %v4796
        %v5313 = vunpack.c.l.b16 %v4797
        %v5314 = vunpack.c.l.b16 %v4798
        %v5315 = vunpack.c.l.b16 %v4799
        %v5316 = vunpack.c.l.b16 %v4800
        %v5317 = vunpack.c.l.b16 %v4801
        %v5318 = vunpack.c.l.b16 %v4802
        %v5319 = vunpack.c.l.b16 %v4803
        %v5320 = vunpack.c.l.b16 %v4804
        %v5321 = vunpack.c.l.b16 %v4805
        %v5322 = vunpack.c.l.b16 %v4806
        %v5323 = vunpack.c.l.b16 %v4807
        %v5324 = vunpack.c.l.b16 %v4808
        %v5325 = vunpack.c.l.b16 %v4809
        %v5326 = vunpack.c.l.b16 %v4810
        %v5327 = vunpack.c.l.b16 %v4811
        %v5328 = vunpack.c.l.b16 %v4812
        %v5329 = vunpack.c.l.b16 %v4813
        %v5330 = vunpack.c.l.b16 %v4814
        %v5331 = vunpack.c.l.b16 %v4815
        %v5332 = vunpack.c.l.b16 %v4816
        %v5333 = vunpack.c.l.b16 %v4817
        %v5334 = vunpack.c.l.b16 %v4818
        %v5335 = vunpack.c.l.b16 %v4819
        %v5336 = vunpack.c.l.b16 %v4820
        %v5337 = vunpack.c.l.b16 %v4821
        %v5338 = vunpack.c.l.b16 %v4822
        %v5339 = vunpack.c.l.b16 %v4823
        %v5340 = vunpack.c.l.b16 %v4824
        %v5341 = vunpack.c.l.b16 %v4825
        %v5342 = vunpack.c.l.b16 %v4826
        %v5343 = vunpack.c.l.b16 %v4827
        %v5344 = vunpack.c.l.b16 %v4828
        %v5345 = vunpack.c.l.b16 %v4829
        %v5346 = vunpack.c.l.b16 %v4830
        %v5347 = vunpack.c.l.b16 %v4831
        %v5348 = vunpack.c.l.b16 %v4832
        %v5349 = vunpack.c.l.b16 %v4833
        %v5350 = vunpack.c.l.b16 %v4834
        %v5351 = vunpack.c.l.b16 %v4835
        %v5352 = vunpack.c.l.b16 %v4836
        %v5353 = vunpack.c.l.b16 %v4837
        %v5354 = vunpack.c.l.b16 %v4838
        %v5355 = vunpack.c.l.b16 %v4839
        %v5356 = vunpack.c.l.b16 %v4840
        %v5357 = vunpack.c.l.b16 %v4841
        %v5358 = vunpack.c.l.b16 %v4842
        %v5359 = vunpack.c.l.b16 %v4843
        %v5360 = vunpack.c.l.b16 %v4844
        %v5361 = vunpack.c.l.b16 %v4845
        %v5362 = vunpack.c.l.b16 %v4846
        %v5363 = vunpack.c.l.b16 %v4847
        %v5364 = vunpack.c.l.b16 %v4848
        %v5365 = vunpack.c.l.b16 %v4849
        %v5366 = vunpack.c.l.b16 %v4850
        %v5367 = vunpack.c.l.b16 %v4851
        %v5368 = vunpack.c.l.b16 %v4852
        %v5369 = vunpack.c.l.b16 %v4853
        %v5370 = vunpack.c.l.b16 %v4854
        %v5371 = vunpack.c.l.b16 %v4855
        %v5372 = vunpack.c.l.b16 %v4856
        %v5373 = vunpack.c.l.b16 %v4857
        %v5374 = vunpack.c.l.b16 %v4858
        %v5375 = vunpack.c.l.b16 %v4859
        %v5376 = vunpack.c.l.b16 %v4860
        %v5377 = vunpack.c.l.b16 %v4861
        %v5378 = vunpack.c.l.b16 %v4862
        %v5379 = vunpack.c.l.b16 %v4863
        %v5380 = vunpack.c.l.b16 %v4864
        %v5381 = vunpack.c.l.b16 %v4865
        %v5382 = vunpack.c.l.b16 %v4866
        %v5383 = vunpack.c.l.b16 %v4867
        %v5384 = vunpack.c.l.b16 %v4868
        %v5385 = vunpack.c.l.b16 %v4869
        %v5386 = vunpack.c.l.b16 %v4870
        %v5387 = vunpack.c.l.b16 %v4871
        %v5388 = vunpack.c.l.b16 %v4872
        %v5389 = vunpack.c.l.b16 %v4873
        %v5390 = vunpack.c.l.b16 %v4874
        %v5391 = vunpack.c.l.b16 %v4875
        %v5392 = vunpack.c.l.b16 %v4876
        %v5393 = vunpack.c.l.b16 %v4877
        %v5394 = vunpack.c.l.b16 %v4878
        %v5395 = vunpack.c.l.b16 %v4879
        %v5396 = vunpack.c.l.b16 %v4880
        %v5397 = vunpack.c.l.b16 %v4881
        %v5398 = vunpack.c.l.b16 %v4882
        %v5399 = vunpack.c.l.b16 %v4883
        %v5400 = vunpack.c.l.b16 %v4884
        %v5401 = vunpack.c.l.b16 %v4885
        %v5402 = vunpack.c.l.b16 %v4886
        %v5403 = vunpack.c.l.b16 %v4887
        %v5404 = vunpack.c.l.b16 %v4888
        %v5405 = vunpack.c.l.b16 %v4889
        %v5406 = vunpack.c.l.b16 %v4890
        %v5407 = vunpack.c.l.b16 %v4891
        %v5408 = vunpack.c.l.b16 %v4892
        %v5409 = vunpack.c.l.b16 %v4893
        %v5410 = vunpack.c.l.b16 %v4894
        %v5411 = vunpack.c.l.b16 %v4895
        %v5412 = vunpack.c.l.b16 %v4896
        %v5413 = vunpack.c.l.b16 %v4897
        %v5414 = vunpack.c.l.b16 %v4898
        %v5415 = vunpack.c.l.b16 %v4899
        %v5416 = vunpack.c.l.b16 %v4900
        %v5417 = vunpack.c.l.b16 %v4901
        %v5418 = vunpack.c.l.b16 %v4902
        %v5419 = vunpack.c.l.b16 %v4903
        %v5420 = vunpack.c.l.b16 %v4904
        %v5421 = vunpack.c.l.b16 %v4905
        %v5422 = vunpack.c.l.b16 %v4906
        %v5423 = vunpack.c.l.b16 %v4907
        %v5424 = vunpack.c.l.b16 %v4908
        %v5425 = vunpack.c.l.b16 %v4909
        %v5426 = vunpack.c.l.b16 %v4910
        %v5427 = vunpack.c.l.b16 %v4911
        %v5428 = vunpack.c.l.b16 %v4912
        %v5429 = vunpack.c.l.b16 %v4913
        %v5430 = vunpack.c.l.b16 %v4914
        %v5431 = vunpack.c.l.b16 %v4915
        %v5432 = vunpack.c.l.b16 %v4916
        %v5433 = vunpack.c.l.b16 %v4917
        %v5434 = vunpack.c.l.b16 %v4918
        %v5435 = vunpack.c.l.b16 %v4919
        %v5436 = vunpack.c.l.b16 %v4920
        %v5437 = vunpack.c.l.b16 %v4921
        %v5438 = vunpack.c.l.b16 %v4922
        %v5439 = vunpack.c.l.b16 %v4923
        %v5440 = vunpack.c.l.b16 %v4924
        %v5441 = vunpack.c.l.b16 %v4925
        %v5442 = vunpack.c.l.b16 %v4926
        %v5443 = vunpack.c.l.b16 %v4927
        %v5444 = vunpack.c.l.b16 %v4928
        %v5445 = vunpack.c.l.b16 %v4929
        %v5446 = vunpack.c.l.b16 %v4930
        %v5447 = vunpack.c.l.b16 %v4931
        %v5448 = vunpack.c.l.b16 %v4932
        %v5449 = vunpack.c.l.b16 %v4933
        %v5450 = vunpack.c.l.b16 %v4934
        %v5451 = vunpack.c.l.b16 %v4935
        %v5452 = vunpack.c.l.b16 %v4936
        %v5453 = vunpack.c.l.b16 %v4937
        %v5454 = vunpack.c.l.b16 %v4938
        %v5455 = vunpack.c.l.b16 %v4939
        %v5456 = vunpack.c.l.b16 %v4940
        %v5457 = vunpack.c.l.b16 %v4941
        %v5458 = vunpack.c.l.b16 %v4942
        %v5459 = vunpack.c.l.b16 %v4943
        %v5460 = vunpack.c.l.b16 %v4944
        %v5461 = vunpack.c.l.b16 %v4945
        %v5462 = vunpack.c.l.b16 %v4946
        %v5463 = vunpack.c.l.b16 %v4947
        %v5464 = vunpack.c.l.b16 %v4948
        %v5465 = vunpack.c.l.b16 %v4949
        %v5466 = vunpack.c.l.b16 %v4950
        %v5467 = vunpack.c.l.b16 %v4951
        %v5468 = vunpack.c.l.b16 %v4952
        %v5469 = vunpack.c.l.b16 %v4953
        %v5470 = vunpack.c.l.b16 %v4954
        %v5471 = vunpack.c.l.b16 %v4955
        %v5472 = vunpack.c.l.b16 %v4956
        %v5473 = vunpack.c.l.b16 %v4957
        %v5474 = vunpack.c.l.b16 %v4958
        %v5475 = vunpack.c.l.b16 %v4959
        %v5476 = vunpack.c.l.b16 %v4960
        %v5477 = vunpack.c.l.b16 %v4961
        %v5478 = vunpack.c.l.b16 %v4962
        %v5479 = vunpack.c.l.b16 %v4963
        %v5480 = vunpack.c.l.b16 %v4964
        %v5481 = vunpack.c.l.b16 %v4965
        %v5482 = vunpack.c.l.b16 %v4966
        %v5483 = vunpack.c.l.b16 %v4967
        %v5484 = vunpack.c.l.b16 %v4968
        %v5485 = vunpack.c.l.b16 %v4969
        %v5486 = vunpack.c.l.b16 %v4970
        %v5487 = vunpack.c.l.b16 %v4971
        %v5488 = vunpack.c.l.b16 %v4972
        %v5489 = vunpack.c.l.b16 %v4973
        %v5490 = vunpack.c.l.b16 %v4974
        %v5491 = vunpack.c.l.b16 %v4975
        %v5492 = vunpack.c.l.b16 %v4976
        %v5493 = vunpack.c.l.b16 %v4977
        %v5494 = vunpack.c.l.b16 %v4978
        %v5495 = vunpack.c.l.b16 %v4979
        %v5496 = vunpack.c.l.b16 %v4980
        %v5497 = vunpack.c.l.b16 %v4981
        %v5498 = vunpack.c.l.b16 %v4982
        %v5499 = vunpack.c.l.b16 %v4983
        %v5500 = vunpack.c.l.b16 %v4984
        %v5501 = vunpack.c.l.b16 %v4985
        %v5502 = vunpack.c.l.b16 %v4986
        %v5503 = vunpack.c.l.b16 %v4987
        %v5504 = vunpack.c.l.b16 %v4988
        %v5505 = vunpack.c.l.b16 %v4989
        %v5506 = vunpack.c.l.b16 %v4990
        %v5507 = vunpack.c.l.b16 %v4991
        %v5508 = vunpack.c.l.b16 %v4992
        %v5509 = vunpack.c.l.b16 %v4993
        %v5510 = vunpack.c.l.b16 %v4994
        %v5511 = vunpack.c.l.b16 %v4995
        %v5512 = vunpack.c.l.b16 %v4996
        %v5513 = vunpack.c.l.b16 %v4997
        %v5514 = vunpack.c.l.b16 %v4998
        %v5515 = vunpack.c.l.b16 %v4999
        %v5516 = vunpack.c.l.b16 %v5000
        %v5517 = vunpack.c.l.b16 %v5001
        %v5518 = vunpack.c.l.b16 %v5002
        %v5519 = vunpack.c.l.b16 %v5003
        %v5520 = vunpack.c.l.b16 %v5004
        %v5521 = vunpack.c.l.b16 %v5005
        %v5522 = vunpack.c.l.b16 %v5006
        %v5523 = vunpack.c.l.b16 %v5007
        %v5524 = vunpack.c.l.b16 %v5008
        %v5525 = vunpack.c.l.b16 %v5009
        %v5526 = vunpack.c.l.b16 %v5010
        %v5527 = vunpack.c.l.b16 %v5011
        %v5528 = vunpack.c.l.b16 %v5012
        %v5529 = vunpack.c.l.b16 %v5013
        %v5530 = vunpack.c.l.b16 %v5014
        %v5531 = vunpack.c.l.b16 %v5015
        %v5532 = vunpack.c.l.b16 %v5016
        %v5533 = vunpack.c.l.b16 %v5017
        %v5534 = vunpack.c.l.b16 %v5018
        %v5535 = vunpack.c.l.b16 %v5019
        %v5536 = vunpack.c.l.b16 %v5020
        %v5537 = vunpack.c.l.b16 %v5021
        %v5538 = vunpack.c.l.b16 %v5022
        %v5539 = vunpack.c.l.b16 %v5023
        %v5540 = vunpack.c.l.b16 %v5024
        %v5541 = vunpack.c.l.b16 %v5025
        %v5542 = vunpack.c.l.b16 %v5026
        %v5543 = vunpack.c.l.b16 %v5027
        %v5544 = vunpack.c.l.b16 %v5028
        %v5545 = vunpack.c.l.b16 %v5029
        %v5546 = vunpack.c.l.b16 %v5030
        %v5547 = vunpack.c.l.b16 %v5031
        %v5548 = vunpack.c.l.b16 %v5032
        %v5549 = vunpack.c.l.b16 %v5033
        %v5550 = vunpack.c.l.b16 %v5034
        %v5551 = vunpack.c.l.b16 %v5035
        %v5552 = vunpack.c.l.b16 %v5036
        %v5553 = vunpack.c.l.b16 %v5037
        %v5554 = vunpack.c.l.b16 %v5038
        %v5555 = vunpack.c.l.b16 %v5039
        %v5556 = vunpack.c.l.b16 %v5040
        %v5557 = vunpack.c.l.b16 %v5041
        %v5558 = vunpack.c.l.b16 %v5042
        %v5559 = vunpack.c.l.b16 %v5043
        %v5560 = vunpack.c.l.b16 %v5044
        %v5561 = vunpack.c.l.b16 %v5045
        %v5562 = vpack.c.b16 %v5307, %v5306
        %v5563 = vpack.c.b16 %v5309, %v5308
        %v5564 = vpack.c.b16 %v5311, %v5310
        %v5565 = vpack.c.b16 %v5313, %v5312
        %v5566 = vpack.c.b16 %v5315, %v5314
        %v5567 = vpack.c.b16 %v5317, %v5316
        %v5568 = vpack.c.b16 %v5319, %v5318
        %v5569 = vpack.c.b16 %v5321, %v5320
        %v5570 = vpack.c.b16 %v5323, %v5322
        %v5571 = vpack.c.b16 %v5325, %v5324
        %v5572 = vpack.c.b16 %v5327, %v5326
        %v5573 = vpack.c.b16 %v5329, %v5328
        %v5574 = vpack.c.b16 %v5331, %v5330
        %v5575 = vpack.c.b16 %v5333, %v5332
        %v5576 = vpack.c.b16 %v5335, %v5334
        %v5577 = vpack.c.b16 %v5337, %v5336
        %v5578 = vpack.c.b16 %v5339, %v5338
        %v5579 = vpack.c.b16 %v5341, %v5340
        %v5580 = vpack.c.b16 %v5343, %v5342
        %v5581 = vpack.c.b16 %v5345, %v5344
        %v5582 = vpack.c.b16 %v5347, %v5346
        %v5583 = vpack.c.b16 %v5349, %v5348
        %v5584 = vpack.c.b16 %v5351, %v5350
        %v5585 = vpack.c.b16 %v5353, %v5352
        %v5586 = vpack.c.b16 %v5355, %v5354
        %v5587 = vpack.c.b16 %v5357, %v5356
        %v5588 = vpack.c.b16 %v5359, %v5358
        %v5589 = vpack.c.b16 %v5361, %v5360
        %v5590 = vpack.c.b16 %v5363, %v5362
        %v5591 = vpack.c.b16 %v5365, %v5364
        %v5592 = vpack.c.b16 %v5367, %v5366
        %v5593 = vpack.c.b16 %v5369, %v5368
        %v5594 = vpack.c.b16 %v5371, %v5370
        %v5595 = vpack.c.b16 %v5373, %v5372
        %v5596 = vpack.c.b16 %v5375, %v5374
        %v5597 = vpack.c.b16 %v5377, %v5376
        %v5598 = vpack.c.b16 %v5379, %v5378
        %v5599 = vpack.c.b16 %v5381, %v5380
        %v5600 = vpack.c.b16 %v5383, %v5382
        %v5601 = vpack.c.b16 %v5385, %v5384
        %v5602 = vpack.c.b16 %v5387, %v5386
        %v5603 = vpack.c.b16 %v5389, %v5388
        %v5604 = vpack.c.b16 %v5391, %v5390
        %v5605 = vpack.c.b16 %v5393, %v5392
        %v5606 = vpack.c.b16 %v5395, %v5394
        %v5607 = vpack.c.b16 %v5397, %v5396
        %v5608 = vpack.c.b16 %v5399, %v5398
        %v5609 = vpack.c.b16 %v5401, %v5400
        %v5610 = vpack.c.b16 %v5403, %v5402
        %v5611 = vpack.c.b16 %v5405, %v5404
        %v5612 = vpack.c.b16 %v5407, %v5406
        %v5613 = vpack.c.b16 %v5409, %v5408
        %v5614 = vpack.c.b16 %v5411, %v5410
        %v5615 = vpack.c.b16 %v5413, %v5412
        %v5616 = vpack.c.b16 %v5415, %v5414
        %v5617 = vpack.c.b16 %v5417, %v5416
        %v5618 = vpack.c.b16 %v5419, %v5418
        %v5619 = vpack.c.b16 %v5421, %v5420
        %v5620 = vpack.c.b16 %v5423, %v5422
        %v5621 = vpack.c.b16 %v5425, %v5424
        %v5622 = vpack.c.b16 %v5427, %v5426
        %v5623 = vpack.c.b16 %v5429, %v5428
        %v5624 = vpack.c.b16 %v5431, %v5430
        %v5625 = vpack.c.b16 %v5433, %v5432
        %v5626 = vpack.c.b16 %v5435, %v5434
        %v5627 = vpack.c.b16 %v5437, %v5436
        %v5628 = vpack.c.b16 %v5439, %v5438
        %v5629 = vpack.c.b16 %v5441, %v5440
        %v5630 = vpack.c.b16 %v5443, %v5442
        %v5631 = vpack.c.b16 %v5445, %v5444
        %v5632 = vpack.c.b16 %v5447, %v5446
        %v5633 = vpack.c.b16 %v5449, %v5448
        %v5634 = vpack.c.b16 %v5451, %v5450
        %v5635 = vpack.c.b16 %v5453, %v5452
        %v5636 = vpack.c.b16 %v5455, %v5454
        %v5637 = vpack.c.b16 %v5457, %v5456
        %v5638 = vpack.c.b16 %v5459, %v5458
        %v5639 = vpack.c.b16 %v5461, %v5460
        %v5640 = vpack.c.b16 %v5463, %v5462
        %v5641 = vpack.c.b16 %v5465, %v5464
        %v5642 = vpack.c.b16 %v5467, %v5466
        %v5643 = vpack.c.b16 %v5469, %v5468
        %v5644 = vpack.c.b16 %v5471, %v5470
        %v5645 = vpack.c.b16 %v5473, %v5472
        %v5646 = vpack.c.b16 %v5475, %v5474
        %v5647 = vpack.c.b16 %v5477, %v5476
        %v5648 = vpack.c.b16 %v5479, %v5478
        %v5649 = vpack.c.b16 %v5481, %v5480
        %v5650 = vpack.c.b16 %v5483, %v5482
        %v5651 = vpack.c.b16 %v5485, %v5484
        %v5652 = vpack.c.b16 %v5487, %v5486
        %v5653 = vpack.c.b16 %v5489, %v5488
        %v5654 = vpack.c.b16 %v5491, %v5490
        %v5655 = vpack.c.b16 %v5493, %v5492
        %v5656 = vpack.c.b16 %v5495, %v5494
        %v5657 = vpack.c.b16 %v5497, %v5496
        %v5658 = vpack.c.b16 %v5499, %v5498
        %v5659 = vpack.c.b16 %v5501, %v5500
        %v5660 = vpack.c.b16 %v5503, %v5502
        %v5661 = vpack.c.b16 %v5505, %v5504
        %v5662 = vpack.c.b16 %v5507, %v5506
        %v5663 = vpack.c.b16 %v5509, %v5508
        %v5664 = vpack.c.b16 %v5511, %v5510
        %v5665 = vpack.c.b16 %v5513, %v5512
        %v5666 = vpack.c.b16 %v5515, %v5514
        %v5667 = vpack.c.b16 %v5517, %v5516
        %v5668 = vpack.c.b16 %v5519, %v5518
        %v5669 = vpack.c.b16 %v5521, %v5520
        %v5670 = vpack.c.b16 %v5523, %v5522
        %v5671 = vpack.c.b16 %v5525, %v5524
        %v5672 = vpack.c.b16 %v5527, %v5526
        %v5673 = vpack.c.b16 %v5529, %v5528
        %v5674 = vpack.c.b16 %v5531, %v5530
        %v5675 = vpack.c.b16 %v5533, %v5532
        %v5676 = vpack.c.b16 %v5535, %v5534
        %v5677 = vpack.c.b16 %v5537, %v5536
        %v5678 = vpack.c.b16 %v5539, %v5538
        %v5679 = vpack.c.b16 %v5541, %v5540
        %v5680 = vpack.c.b16 %v5543, %v5542
        %v5681 = vpack.c.b16 %v5545, %v5544
        %v5682 = vpack.c.b16 %v5547, %v5546
        %v5683 = vpack.c.b16 %v5549, %v5548
        %v5684 = vpack.c.b16 %v5551, %v5550
        %v5685 = vpack.c.b16 %v5553, %v5552
        %v5686 = vpack.c.b16 %v5555, %v5554
        %v5687 = vpack.c.b16 %v5557, %v5556
        %v5688 = vpack.c.b16 %v5559, %v5558
        %v5689 = vpack.c.b16 %v5561, %v5560
        %5818 = vmatprep.subr.bf16.mxu0 0
        %5819 = vmatpush1.bf16.msra.mxu0 %v5569
        %5820 = vmatprep.subr.bf16.mxu0 0
        %5821 = vmatpush1.bf16.msra.mxu0 %v5568
        %5822 = vmatprep.subr.bf16.mxu0 0
        %5823 = vmatpush1.bf16.msra.mxu0 %v5567
        %5824 = vmatprep.subr.bf16.mxu0 0
        %5825 = vmatpush1.bf16.msra.mxu0 %v5566
        %5826 = vmatprep.subr.bf16.mxu0 0
        %5827 = vmatpush1.bf16.msra.mxu0 %v5565
        %5828 = vmatprep.subr.bf16.mxu0 0
        %5829 = vmatpush1.bf16.msra.mxu0 %v5564
        %5830 = vmatprep.subr.bf16.mxu0 0
        %5831 = vmatpush1.bf16.msra.mxu0 %v5563
        %5832 = vmatprep.subr.bf16.mxu0 0
        %5833 = vmatpush1.bf16.msra.mxu0 %v5562
        %5834 = vmatprep.subr.bf16.mxu0 0
        %5835 = vmatpush2.bf16.msra.mxu0 %v5577
        %5836 = vmatprep.subr.bf16.mxu0 0
        %5837 = vmatpush2.bf16.msra.mxu0 %v5576
        %5838 = vmatprep.subr.bf16.mxu0 0
        %5839 = vmatpush2.bf16.msra.mxu0 %v5575
        %5840 = vmatprep.subr.bf16.mxu0 0
        %5841 = vmatpush2.bf16.msra.mxu0 %v5574
        %5842 = vmatprep.subr.bf16.mxu0 0
        %5843 = vmatpush2.bf16.msra.mxu0 %v5573
        %5844 = vmatprep.subr.bf16.mxu0 0
        %5845 = vmatpush2.bf16.msra.mxu0 %v5572
        %5846 = vmatprep.subr.bf16.mxu0 0
        %5847 = vmatpush2.bf16.msra.mxu0 %v5571
        %5848 = vmatprep.subr.bf16.mxu0 0
        %5849 = vmatpush2.bf16.msra.mxu0 %v5570
        %5850 = vmatprep.mubr.bf16.mxu0 %v4774
        %5851 = vmatmul.mubr.bf16.gmra.mxu0 %v4773
        %v5852 = vpop.f32.mrf.mxu0
        %v5853 = vadd.f32 %v5049, %v5852
        %v5854 = vpop.f32.mrf.mxu0
        %v5855 = vpop.f32.mrf.mxu0
        %v5856 = vpop.f32.mrf.mxu0
        %5857 = vdwg.mxu0
        %5858 = vmatprep.subr.bf16.mxu0 0
        %5859 = vmatpush1.bf16.msra.mxu0 %v5585
        %5860 = vmatprep.subr.bf16.mxu0 0
        %5861 = vmatpush1.bf16.msra.mxu0 %v5584
        %5862 = vmatprep.subr.bf16.mxu0 0
        %5863 = vmatpush1.bf16.msra.mxu0 %v5583
        %5864 = vmatprep.subr.bf16.mxu0 0
        %5865 = vmatpush1.bf16.msra.mxu0 %v5582
        %5866 = vmatprep.subr.bf16.mxu0 0
        %5867 = vmatpush1.bf16.msra.mxu0 %v5581
        %5868 = vmatprep.subr.bf16.mxu0 0
        %5869 = vmatpush1.bf16.msra.mxu0 %v5580
        %5870 = vmatprep.subr.bf16.mxu0 0
        %5871 = vmatpush1.bf16.msra.mxu0 %v5579
        %5872 = vmatprep.subr.bf16.mxu0 0
        %5873 = vmatpush1.bf16.msra.mxu0 %v5578
        %5874 = vmatprep.subr.bf16.mxu0 0
        %5875 = vmatpush2.bf16.msra.mxu0 %v5593
        %5876 = vmatprep.subr.bf16.mxu0 0
        %5877 = vmatpush2.bf16.msra.mxu0 %v5592
        %5878 = vmatprep.subr.bf16.mxu0 0
        %5879 = vmatpush2.bf16.msra.mxu0 %v5591
        %5880 = vmatprep.subr.bf16.mxu0 0
        %5881 = vmatpush2.bf16.msra.mxu0 %v5590
        %5882 = vmatprep.subr.bf16.mxu0 0
        %5883 = vmatpush2.bf16.msra.mxu0 %v5589
        %5884 = vmatprep.subr.bf16.mxu0 0
        %5885 = vmatpush2.bf16.msra.mxu0 %v5588
        %5886 = vmatprep.subr.bf16.mxu0 0
        %5887 = vmatpush2.bf16.msra.mxu0 %v5587
        %5888 = vmatprep.subr.bf16.mxu0 0
        %5889 = vmatpush2.bf16.msra.mxu0 %v5586
        %5890 = vmatprep.mubr.bf16.mxu0 %v4776
        %5891 = vmatmul.mubr.bf16.gmra.mxu0 %v4775
        %v5892 = vpop.f32.mrf.mxu0
        %v5893 = vadd.f32 %v5853, %v5892
        %v5894 = vpop.f32.mrf.mxu0
        %v5895 = vpop.f32.mrf.mxu0
        %v5896 = vpop.f32.mrf.mxu0
        %5897 = vdwg.mxu0
        %5898 = vmatprep.subr.bf16.mxu0 0
        %5899 = vmatpush1.bf16.msra.mxu0 %v5601
        %5900 = vmatprep.subr.bf16.mxu0 0
        %5901 = vmatpush1.bf16.msra.mxu0 %v5600
        %5902 = vmatprep.subr.bf16.mxu0 0
        %5903 = vmatpush1.bf16.msra.mxu0 %v5599
        %5904 = vmatprep.subr.bf16.mxu0 0
        %5905 = vmatpush1.bf16.msra.mxu0 %v5598
        %5906 = vmatprep.subr.bf16.mxu0 0
        %5907 = vmatpush1.bf16.msra.mxu0 %v5597
        %5908 = vmatprep.subr.bf16.mxu0 0
        %5909 = vmatpush1.bf16.msra.mxu0 %v5596
        %5910 = vmatprep.subr.bf16.mxu0 0
        %5911 = vmatpush1.bf16.msra.mxu0 %v5595
        %5912 = vmatprep.subr.bf16.mxu0 0
        %5913 = vmatpush1.bf16.msra.mxu0 %v5594
        %5914 = vmatprep.subr.bf16.mxu0 0
        %5915 = vmatpush2.bf16.msra.mxu0 %v5609
        %5916 = vmatprep.subr.bf16.mxu0 0
        %5917 = vmatpush2.bf16.msra.mxu0 %v5608
        %5918 = vmatprep.subr.bf16.mxu0 0
        %5919 = vmatpush2.bf16.msra.mxu0 %v5607
        %5920 = vmatprep.subr.bf16.mxu0 0
        %5921 = vmatpush2.bf16.msra.mxu0 %v5606
        %5922 = vmatprep.subr.bf16.mxu0 0
        %5923 = vmatpush2.bf16.msra.mxu0 %v5605
        %5924 = vmatprep.subr.bf16.mxu0 0
        %5925 = vmatpush2.bf16.msra.mxu0 %v5604
        %5926 = vmatprep.subr.bf16.mxu0 0
        %5927 = vmatpush2.bf16.msra.mxu0 %v5603
        %5928 = vmatprep.subr.bf16.mxu0 0
        %5929 = vmatpush2.bf16.msra.mxu0 %v5602
        %5930 = vmatprep.mubr.bf16.mxu0 %v4778
        %5931 = vmatmul.mubr.bf16.gmra.mxu0 %v4777
        %v5932 = vpop.f32.mrf.mxu0
        %v5933 = vadd.f32 %v5893, %v5932
        %v5934 = vpop.f32.mrf.mxu0
        %v5935 = vpop.f32.mrf.mxu0
        %v5936 = vpop.f32.mrf.mxu0
        %5937 = vdwg.mxu0
        %5938 = vmatprep.subr.bf16.mxu0 0
        %5939 = vmatpush1.bf16.msra.mxu0 %v5617
        %5940 = vmatprep.subr.bf16.mxu0 0
        %5941 = vmatpush1.bf16.msra.mxu0 %v5616
        %5942 = vmatprep.subr.bf16.mxu0 0
        %5943 = vmatpush1.bf16.msra.mxu0 %v5615
        %5944 = vmatprep.subr.bf16.mxu0 0
        %5945 = vmatpush1.bf16.msra.mxu0 %v5614
        %5946 = vmatprep.subr.bf16.mxu0 0
        %5947 = vmatpush1.bf16.msra.mxu0 %v5613
        %5948 = vmatprep.subr.bf16.mxu0 0
        %5949 = vmatpush1.bf16.msra.mxu0 %v5612
        %5950 = vmatprep.subr.bf16.mxu0 0
        %5951 = vmatpush1.bf16.msra.mxu0 %v5611
        %5952 = vmatprep.subr.bf16.mxu0 0
        %5953 = vmatpush1.bf16.msra.mxu0 %v5610
        %5954 = vmatprep.subr.bf16.mxu0 0
        %5955 = vmatpush2.bf16.msra.mxu0 %v5625
        %5956 = vmatprep.subr.bf16.mxu0 0
        %5957 = vmatpush2.bf16.msra.mxu0 %v5624
        %5958 = vmatprep.subr.bf16.mxu0 0
        %5959 = vmatpush2.bf16.msra.mxu0 %v5623
        %5960 = vmatprep.subr.bf16.mxu0 0
        %5961 = vmatpush2.bf16.msra.mxu0 %v5622
        %5962 = vmatprep.subr.bf16.mxu0 0
        %5963 = vmatpush2.bf16.msra.mxu0 %v5621
        %5964 = vmatprep.subr.bf16.mxu0 0
        %5965 = vmatpush2.bf16.msra.mxu0 %v5620
        %5966 = vmatprep.subr.bf16.mxu0 0
        %5967 = vmatpush2.bf16.msra.mxu0 %v5619
        %5968 = vmatprep.subr.bf16.mxu0 0
        %5969 = vmatpush2.bf16.msra.mxu0 %v5618
        %5970 = vmatprep.mubr.bf16.mxu0 %v4780
        %5971 = vmatmul.mubr.bf16.gmra.mxu0 %v4779
        %v5972 = vpop.f32.mrf.mxu0
        %v5973 = vadd.f32 %v5933, %v5972
        %v5974 = vpop.f32.mrf.mxu0
        %v5975 = vpop.f32.mrf.mxu0
        %v5976 = vpop.f32.mrf.mxu0
        %5977 = vdwg.mxu0
        %5978 = vmatprep.subr.bf16.mxu0 0
        %5979 = vmatpush1.bf16.msra.mxu0 %v5633
        %5980 = vmatprep.subr.bf16.mxu0 0
        %5981 = vmatpush1.bf16.msra.mxu0 %v5632
        %5982 = vmatprep.subr.bf16.mxu0 0
        %5983 = vmatpush1.bf16.msra.mxu0 %v5631
        %5984 = vmatprep.subr.bf16.mxu0 0
        %5985 = vmatpush1.bf16.msra.mxu0 %v5630
        %5986 = vmatprep.subr.bf16.mxu0 0
        %5987 = vmatpush1.bf16.msra.mxu0 %v5629
        %5988 = vmatprep.subr.bf16.mxu0 0
        %5989 = vmatpush1.bf16.msra.mxu0 %v5628
        %5990 = vmatprep.subr.bf16.mxu0 0
        %5991 = vmatpush1.bf16.msra.mxu0 %v5627
        %5992 = vmatprep.subr.bf16.mxu0 0
        %5993 = vmatpush1.bf16.msra.mxu0 %v5626
        %5994 = vmatprep.subr.bf16.mxu0 0
        %5995 = vmatpush2.bf16.msra.mxu0 %v5641
        %5996 = vmatprep.subr.bf16.mxu0 0
        %5997 = vmatpush2.bf16.msra.mxu0 %v5640
        %5998 = vmatprep.subr.bf16.mxu0 0
        %5999 = vmatpush2.bf16.msra.mxu0 %v5639
        %6000 = vmatprep.subr.bf16.mxu0 0
        %6001 = vmatpush2.bf16.msra.mxu0 %v5638
        %6002 = vmatprep.subr.bf16.mxu0 0
        %6003 = vmatpush2.bf16.msra.mxu0 %v5637
        %6004 = vmatprep.subr.bf16.mxu0 0
        %6005 = vmatpush2.bf16.msra.mxu0 %v5636
        %6006 = vmatprep.subr.bf16.mxu0 0
        %6007 = vmatpush2.bf16.msra.mxu0 %v5635
        %6008 = vmatprep.subr.bf16.mxu0 0
        %6009 = vmatpush2.bf16.msra.mxu0 %v5634
        %6010 = vmatprep.mubr.bf16.mxu0 %v4782
        %6011 = vmatmul.mubr.bf16.gmra.mxu0 %v4781
        %v6012 = vpop.f32.mrf.mxu0
        %v6013 = vadd.f32 %v5973, %v6012
        %v6014 = vpop.f32.mrf.mxu0
        %v6015 = vpop.f32.mrf.mxu0
        %v6016 = vpop.f32.mrf.mxu0
        %6017 = vdwg.mxu0
        %6018 = vmatprep.subr.bf16.mxu0 0
        %6019 = vmatpush1.bf16.msra.mxu0 %v5649
        %6020 = vmatprep.subr.bf16.mxu0 0
        %6021 = vmatpush1.bf16.msra.mxu0 %v5648
        %6022 = vmatprep.subr.bf16.mxu0 0
        %6023 = vmatpush1.bf16.msra.mxu0 %v5647
        %6024 = vmatprep.subr.bf16.mxu0 0
        %6025 = vmatpush1.bf16.msra.mxu0 %v5646
        %6026 = vmatprep.subr.bf16.mxu0 0
        %6027 = vmatpush1.bf16.msra.mxu0 %v5645
        %6028 = vmatprep.subr.bf16.mxu0 0
        %6029 = vmatpush1.bf16.msra.mxu0 %v5644
        %6030 = vmatprep.subr.bf16.mxu0 0
        %6031 = vmatpush1.bf16.msra.mxu0 %v5643
        %6032 = vmatprep.subr.bf16.mxu0 0
        %6033 = vmatpush1.bf16.msra.mxu0 %v5642
        %6034 = vmatprep.subr.bf16.mxu0 0
        %6035 = vmatpush2.bf16.msra.mxu0 %v5657
        %6036 = vmatprep.subr.bf16.mxu0 0
        %6037 = vmatpush2.bf16.msra.mxu0 %v5656
        %6038 = vmatprep.subr.bf16.mxu0 0
        %6039 = vmatpush2.bf16.msra.mxu0 %v5655
        %6040 = vmatprep.subr.bf16.mxu0 0
        %6041 = vmatpush2.bf16.msra.mxu0 %v5654
        %6042 = vmatprep.subr.bf16.mxu0 0
        %6043 = vmatpush2.bf16.msra.mxu0 %v5653
        %6044 = vmatprep.subr.bf16.mxu0 0
        %6045 = vmatpush2.bf16.msra.mxu0 %v5652
        %6046 = vmatprep.subr.bf16.mxu0 0
        %6047 = vmatpush2.bf16.msra.mxu0 %v5651
        %6048 = vmatprep.subr.bf16.mxu0 0
        %6049 = vmatpush2.bf16.msra.mxu0 %v5650
        %6050 = vmatprep.mubr.bf16.mxu0 %v4784
        %6051 = vmatmul.mubr.bf16.gmra.mxu0 %v4783
        %v6052 = vpop.f32.mrf.mxu0
        %v6053 = vadd.f32 %v6013, %v6052
        %v6054 = vpop.f32.mrf.mxu0
        %v6055 = vpop.f32.mrf.mxu0
        %v6056 = vpop.f32.mrf.mxu0
        %6057 = vdwg.mxu0
        %6058 = vmatprep.subr.bf16.mxu0 0
        %6059 = vmatpush1.bf16.msra.mxu0 %v5665
        %6060 = vmatprep.subr.bf16.mxu0 0
        %6061 = vmatpush1.bf16.msra.mxu0 %v5664
        %6062 = vmatprep.subr.bf16.mxu0 0
        %6063 = vmatpush1.bf16.msra.mxu0 %v5663
        %6064 = vmatprep.subr.bf16.mxu0 0
        %6065 = vmatpush1.bf16.msra.mxu0 %v5662
        %6066 = vmatprep.subr.bf16.mxu0 0
        %6067 = vmatpush1.bf16.msra.mxu0 %v5661
        %6068 = vmatprep.subr.bf16.mxu0 0
        %6069 = vmatpush1.bf16.msra.mxu0 %v5660
        %6070 = vmatprep.subr.bf16.mxu0 0
        %6071 = vmatpush1.bf16.msra.mxu0 %v5659
        %6072 = vmatprep.subr.bf16.mxu0 0
        %6073 = vmatpush1.bf16.msra.mxu0 %v5658
        %6074 = vmatprep.subr.bf16.mxu0 0
        %6075 = vmatpush2.bf16.msra.mxu0 %v5673
        %6076 = vmatprep.subr.bf16.mxu0 0
        %6077 = vmatpush2.bf16.msra.mxu0 %v5672
        %6078 = vmatprep.subr.bf16.mxu0 0
        %6079 = vmatpush2.bf16.msra.mxu0 %v5671
        %6080 = vmatprep.subr.bf16.mxu0 0
        %6081 = vmatpush2.bf16.msra.mxu0 %v5670
        %6082 = vmatprep.subr.bf16.mxu0 0
        %6083 = vmatpush2.bf16.msra.mxu0 %v5669
        %6084 = vmatprep.subr.bf16.mxu0 0
        %6085 = vmatpush2.bf16.msra.mxu0 %v5668
        %6086 = vmatprep.subr.bf16.mxu0 0
        %6087 = vmatpush2.bf16.msra.mxu0 %v5667
        %6088 = vmatprep.subr.bf16.mxu0 0
        %6089 = vmatpush2.bf16.msra.mxu0 %v5666
        %6090 = vmatprep.mubr.bf16.mxu0 %v4786
        %6091 = vmatmul.mubr.bf16.gmra.mxu0 %v4785
        %v6092 = vpop.f32.mrf.mxu0
        %v6093 = vadd.f32 %v6053, %v6092
        %v6094 = vpop.f32.mrf.mxu0
        %v6095 = vpop.f32.mrf.mxu0
        %v6096 = vpop.f32.mrf.mxu0
        %6097 = vdwg.mxu0
        %6098 = vmatprep.subr.bf16.mxu0 0
        %6099 = vmatpush1.bf16.msra.mxu0 %v5681
        %6100 = vmatprep.subr.bf16.mxu0 0
        %6101 = vmatpush1.bf16.msra.mxu0 %v5680
        %6102 = vmatprep.subr.bf16.mxu0 0
        %6103 = vmatpush1.bf16.msra.mxu0 %v5679
        %6104 = vmatprep.subr.bf16.mxu0 0
        %6105 = vmatpush1.bf16.msra.mxu0 %v5678
        %6106 = vmatprep.subr.bf16.mxu0 0
        %6107 = vmatpush1.bf16.msra.mxu0 %v5677
        %6108 = vmatprep.subr.bf16.mxu0 0
        %6109 = vmatpush1.bf16.msra.mxu0 %v5676
        %6110 = vmatprep.subr.bf16.mxu0 0
        %6111 = vmatpush1.bf16.msra.mxu0 %v5675
        %6112 = vmatprep.subr.bf16.mxu0 0
        %6113 = vmatpush1.bf16.msra.mxu0 %v5674
        %6114 = vmatprep.subr.bf16.mxu0 0
        %6115 = vmatpush2.bf16.msra.mxu0 %v5689
        %6116 = vmatprep.subr.bf16.mxu0 0
        %6117 = vmatpush2.bf16.msra.mxu0 %v5688
        %6118 = vmatprep.subr.bf16.mxu0 0
        %6119 = vmatpush2.bf16.msra.mxu0 %v5687
        %6120 = vmatprep.subr.bf16.mxu0 0
        %6121 = vmatpush2.bf16.msra.mxu0 %v5686
        %6122 = vmatprep.subr.bf16.mxu0 0
        %6123 = vmatpush2.bf16.msra.mxu0 %v5685
        %6124 = vmatprep.subr.bf16.mxu0 0
        %6125 = vmatpush2.bf16.msra.mxu0 %v5684
        %6126 = vmatprep.subr.bf16.mxu0 0
        %6127 = vmatpush2.bf16.msra.mxu0 %v5683
        %6128 = vmatprep.subr.bf16.mxu0 0
        %6129 = vmatpush2.bf16.msra.mxu0 %v5682
        %6130 = vmatprep.mubr.bf16.mxu0 %v4788
        %6131 = vmatmul.mubr.bf16.gmra.mxu0 %v4787
        %v6132 = vpop.f32.mrf.mxu0
        %v6133 = vadd.f32 %v6093, %v6132
        %v6134 = vpop.f32.mrf.mxu0
        %v6135 = vpop.f32.mrf.mxu0
        %v6136 = vpop.f32.mrf.mxu0
        %6137 = vdwg.mxu0
        %v6138 = vadd.f32 %v4146, %v6133
        %v6139 = vsel %vm491, %v6138, 0.0
        %6140 = vadd.xlane.f32.xlu0 %v6139
        %v6141 = vpop.xlane.xlu0 %6140
        %v6142 = vmul.f32 %v6141, %v1280
        %v6143 = vsub.f32 %v6138, %v6142
        %v6144 = vmul.f32 %v6143, %v6143
        %v6145 = vsel %vm491, %v6144, 0.0
        %6146 = vadd.xlane.f32.xlu0 %v6145
        %v6147 = vpop.xlane.xlu0 %6146
        %v6148 = vmul.f32 %v6147, %v1280
        %v6149 = vadd.f32 %v6148, 1e-05
        %v6150 = vrsqrt.pop %v6149
        %v6151 = vmul.f32 %v6143, %v6150
        %v6152 = vlaneseq
        %v6153 = vshrl.u32 %v6152, 7
        %v6154 = vsub.s32 4, %v6153
        %v6155 = vrot.slane %v3314, %v6154
        %v6156 = vmul.f32 %v6151, %v6155
        %v6157 = vlaneseq
        %v6158 = vshrl.u32 %v6157, 7
        %v6159 = vsub.s32 5, %v6158
        %v6160 = vrot.slane %v3314, %v6159
        %v6161 = vadd.f32 %v6156, %v6160
        %v6162 = vpack.c.bf16 %v6161, %v6161
        %v6163 = vld [vmem:[%s10] sm:$0xf]
        %v6164 = vld [vmem:[%s10 + $0x4] sm:$0xf]
        %v6165 = vld [vmem:[%s10 + $0x8] sm:$0xf]
        %v6166 = vld [vmem:[%s10 + $0xc] sm:$0xf]
        %v6167 = vld [vmem:[%s11] sm:$0x1]
        %v6169 = vshrl.u32 %v6162, 16
        %v6171 = vrot.slane %v6169, 3
        %v6176 = vunpack.c.l.b16 %v6163
        %v6177 = vunpack.c.l.b16 %v6164
        %v6178 = vunpack.c.l.b16 %v6165
        %v6179 = vunpack.c.l.b16 %v6166
        %v6180 = vpack.c.b16 %v6177, %v6176
        %v6181 = vpack.c.b16 %v6179, %v6178
        %v6185 = vsel %vm491, %v6171, 0
        %6187 = vmatprep.subr.bf16.mxu0 0
        %6188 = vmatpush1.bf16.msra.mxu0 0
        %6189 = vmatprep.subr.bf16.mxu0 0
        %6190 = vmatpush1.bf16.msra.mxu0 0
        %6191 = vmatprep.subr.bf16.mxu0 0
        %6192 = vmatpush1.bf16.msra.mxu0 0
        %6193 = vmatprep.subr.bf16.mxu0 0
        %6194 = vmatpush1.bf16.msra.mxu0 0
        %6195 = vmatprep.subr.bf16.mxu0 0
        %6196 = vmatpush1.bf16.msra.mxu0 0
        %6197 = vmatprep.subr.bf16.mxu0 0
        %6198 = vmatpush1.bf16.msra.mxu0 0
        %6199 = vmatprep.subr.bf16.mxu0 0
        %6200 = vmatpush1.bf16.msra.mxu0 %v6181
        %6201 = vmatprep.subr.bf16.mxu0 0
        %6202 = vmatpush1.bf16.msra.mxu0 %v6180
        %6203 = vmatprep.subr.bf16.mxu0 0
        %6204 = vmatpush2.bf16.msra.mxu0 0
        %6205 = vmatprep.subr.bf16.mxu0 0
        %6206 = vmatpush2.bf16.msra.mxu0 0
        %6207 = vmatprep.subr.bf16.mxu0 0
        %6208 = vmatpush2.bf16.msra.mxu0 0
        %6209 = vmatprep.subr.bf16.mxu0 0
        %6210 = vmatpush2.bf16.msra.mxu0 0
        %6211 = vmatprep.subr.bf16.mxu0 0
        %6212 = vmatpush2.bf16.msra.mxu0 0
        %6213 = vmatprep.subr.bf16.mxu0 0
        %6214 = vmatpush2.bf16.msra.mxu0 0
        %6215 = vmatprep.subr.bf16.mxu0 0
        %6216 = vmatpush2.bf16.msra.mxu0 0
        %6217 = vmatprep.subr.bf16.mxu0 0
        %6218 = vmatpush2.bf16.msra.mxu0 0
        %6219 = vmatprep.mubr.bf16.mxu0 0
        %6220 = vmatmul.mubr.bf16.gmra.mxu0 %v6185
        %v6221 = vpop.f32.mrf.mxu0
        %v6222 = vadd.f32 %v6167, %v6221
        %v6223 = vpop.f32.mrf.mxu0
        %v6224 = vpop.f32.mrf.mxu0
        %v6225 = vpop.f32.mrf.mxu0
        %6226 = vdwg.mxu0
        %vm6227 = vcmask 24576
        %6228 = vst.msk [vmem:[%s403] sm:$0x1] %vm6227, %v6222
        %s6229 = sand.u32 %s291, 1
        %s6230 = scalar_lea.sflag [#allocation3], %s6229
        %s6231 = sand.u32 %s291, 1
        %s6232 = scalar_lea.vmem [#allocation2], %s6231
        // Predicated region
        $region69: #{tpu_custom_call.1} parent=67 // pred_check
          %p6233 = pneg %p301
        $region70: #{tpu_custom_call.1} parent=67 // pred_check_branch
          %6235 = sbr.rel (%p6233) target = $region72
        $region71: #{tpu_custom_call.1} parent=67 // pred_region
          %s6237 = ssub.s32 16, 16
          %6238 = vsyncadd %s6230, %s6237
          %s6239 = smul.addr %s26, 16
          %s6240 = scalar_lea.hbm %s12, %s6239
          %s6242 = sshll.u32 %s6232, 4
          %s6243 = int_to_ptr.vmem [resolvable:$true] %s6242
          %6245 = dma.vmem_to_hbm [thread:$0]  %s6243, 16, %s6240, %s6230
        $region72: #{tpu_custom_call.1} parent=67 // pred_fallthru
          _
      $region68: #{tpu_custom_call.1} parent=5 // pred_fallthru
        _
      %p6246 = scmp.le.s32.totalorder 2, %s21
      // Predicated region
      $region73: #{tpu_custom_call.1} parent=5 // pred_check
        %p6247 = pneg %p6246
      $region74: #{tpu_custom_call.1} parent=5 // pred_check_branch
        %6249 = sbr.rel (%p6247) target = $region76
      $region75: #{tpu_custom_call.1} parent=5 // pred_region
        %s6250 = ssub.s32 %s21, 2
        // Predicated region
        $region77: #{tpu_custom_call.1} parent=75 // pred_check
          %p6251 = pneg %p307
        $region78: #{tpu_custom_call.1} parent=75 // pred_check_branch
          %6253 = sbr.rel (%p6251) target = $region80
        $region79: #{tpu_custom_call.1} parent=75 // pred_region
          %s6254 = sand.u32 %s292, 1
          %s6255 = scalar_lea.sflag [#allocation3], %s6254
          %s6256 = sand.u32 %s292, 1
          %s6257 = scalar_lea.vmem [#allocation2], %s6256
          %6258 = dma.done %s6255, 16
        $region80: #{tpu_custom_call.1} parent=75 // pred_fallthru
          _
      $region76: #{tpu_custom_call.1} parent=5 // pred_fallthru
        _
    $region6: #{tpu_custom_call.1} parent=1 // loop_footer
      %s25 = sadd.s32 1, %s21
    $region7: #{tpu_custom_call.1} parent=1 // loop_footer_branch
      %20 = sbr.rel target = $region3
    $region8: #{tpu_custom_call.1} parent=1 // loop_exit
      _
    %6259 = vsyncpa [#allocation3], 1
    %s6260 = scalar_lea.sflag [#allocation3], 1
    %6261 = vsyncpa %s6260, 1

</llo_original>
